<compile_context>
chip_gen: v7x
topology: tpu7x:2x2x1
jax: 0.10.0
libtpu: 0.0.40
codegen_flags: <defaults>
</compile_context>

<pallas_src>
from functools import partial

import jax
import jax.numpy as jnp
from jax.experimental import pallas as pl
from jax.experimental.pallas import tpu as pltpu


# --------------------------- Pallas kernel ----------------------------------

def fused_kernel(inv_hw,
                 patch_ref, data_ref,
                 cw_ref, cb_ref, pw_ref, pb_ref,
                 wfc_ref, bfc_ref, w1a_ref, w1b_ref, b1_ref, w2_ref, b2_ref,
                 out_ref, acc_ref):
    r = pl.program_id(1)
    nr = pl.num_programs(1)

    @pl.when(r == 0)
    def _init():
        acc_ref[...] = jnp.zeros_like(acc_ref)

    # conv stem via im2col matmul (bf16 operands, f32 accumulation) + ReLU
    y = jnp.dot(patch_ref[0], cw_ref[...],
                preferred_element_type=jnp.float32) + cb_ref[...]      # (TILE_HW, 128)
    y = jnp.maximum(y, 0.0)
    # global average pool: per-sample running channel sum (XLU sublane reduce)
    acc_ref[...] += jnp.sum(y, axis=0, keepdims=True)                  # (1, 128)

    @pl.when(r == nr - 1)
    def _finalize():
        pooled = (acc_ref[...] * inv_hw).astype(jnp.bfloat16)          # (1, 128)

        # surrogate projection to inception fc.in_features = 2048
        feat = jnp.dot(pooled, pw_ref[...],
                       preferred_element_type=jnp.float32) + pb_ref[...]
        feat = jnp.maximum(feat, 0.0).astype(jnp.bfloat16)             # (1, 2048)

        # cnn.fc : Linear(2048, 20)  (padded to 128 lanes; pad lanes exactly 0)
        x1 = jnp.dot(feat, wfc_ref[...],
                     preferred_element_type=jnp.float32) + bfc_ref[...]
        x1 = x1.astype(jnp.bfloat16)                                   # (1, 128)

        d = data_ref[0]                                                # (1, 128) bf16, padded

        # fc1 : Linear(30, 60) as exact split matmul, padded to 128 lanes
        h = (jnp.dot(x1, w1a_ref[...], preferred_element_type=jnp.float32)
             + jnp.dot(d, w1b_ref[...], preferred_element_type=jnp.float32)
             + b1_ref[...])
        h = jnp.maximum(h, 0.0).astype(jnp.bfloat16)                   # (1, 128)

        # fc2 : Linear(60, 1)  (only lane 0 of the padded output is real)
        o = jnp.dot(h, w2_ref[...],
                    preferred_element_type=jnp.float32) + b2_ref[...]  # (1, 128)
        out_ref[...] = o.reshape(1, 1, 128)


# --------------------------- JAX glue / wrapper ------------------------------

def _im2col_3x3(x_nhwc):
    """3x3 / stride-1 / valid patches, ordered (kh, kw, c) on the feature axis."""
    N, H, W, C = x_nhwc.shape
    Ho, Wo = H - 2, W - 2
    cols = [x_nhwc[:, i:i + Ho, j:j + Wo, :] for i in range(3) for j in range(3)]
    patches = jnp.concatenate(cols, axis=-1)                # (N, Ho, Wo, 9*C)
    return patches.reshape(N, Ho * Wo, 9 * C), Ho, Wo


def _pick_tile_hw(hw):
    """Biggest row tile: whole plane when small (fewer grid steps), else a
    divisor that keeps the double-buffered tile well under VMEM limits."""
    if hw <= 1024:
        return hw
    for t in (1024, 512, 256, 128):
        if hw % t == 0:
            return t
    return hw  # fallback: single full-extent tile (always legal)


def init_params(key):
    ks = jax.random.split(key, 10)

    def w(k, shape, scale=0.05):
        return scale * jax.random.normal(k, shape, dtype=jnp.float32)

    return {
        "conv_w": w(ks[0], (27, 32)),     # surrogate stem conv (im2col: 3*3*3 -> 32)
        "conv_b": w(ks[1], (1, 32)),
        "proj_w": w(ks[2], (32, 2048)),   # surrogate projection to inception fc.in_features
        "proj_b": w(ks[3], (1, 2048)),
        "fc_w":   w(ks[4], (2048, 20)),   # cnn.fc : Linear(2048, 20)
        "fc_b":   w(ks[5], (1, 20)),
        "fc1_w":  w(ks[6], (30, 60)),     # fc1 : Linear(30, 60); rows 0:20 -> x1, 20:30 -> data
        "fc1_b":  w(ks[7], (1, 60)),
        "fc2_w":  w(ks[8], (60, 1)),      # fc2 : Linear(60, 1)
        "fc2_b":  w(ks[9], (1, 1)),
    }


def _pad2(a, rows, cols):
    out = jnp.zeros((rows, cols), a.dtype)
    return out.at[:a.shape[0], :a.shape[1]].set(a)


def prepare_kernel_params(p):
    """One-time prep (hoisted out of the per-call path): split fc1, zero-pad
    every feature dim to 128 lanes (exact), cast matmul operands to bf16."""
    return {
        "conv_w": _pad2(p["conv_w"], 32, 128).astype(jnp.bfloat16),       # (27,32)  -> (32,128)
        "conv_b": _pad2(p["conv_b"], 1, 128),                             # f32 bias
        "proj_w": _pad2(p["proj_w"], 128, 2048).astype(jnp.bfloat16),     # (32,2048) -> (128,2048)
        "proj_b": p["proj_b"],                                            # (1,2048) f32
        "fc_w":   _pad2(p["fc_w"], 2048, 128).astype(jnp.bfloat16),       # (2048,20) -> (2048,128)
        "fc_b":   _pad2(p["fc_b"], 1, 128),
        "fc1a_w": _pad2(p["fc1_w"][:20], 128, 128).astype(jnp.bfloat16),  # rows for x1
        "fc1b_w": _pad2(p["fc1_w"][20:], 128, 128).astype(jnp.bfloat16),  # rows for data
        "fc1_b":  _pad2(p["fc1_b"], 1, 128),
        "fc2_w":  _pad2(p["fc2_w"], 128, 128).astype(jnp.bfloat16),       # (60,1) -> (128,128)
        "fc2_b":  _pad2(p["fc2_b"], 1, 128),
    }


def my_model_forward(image_nchw, data, kp):
    N = image_nchw.shape[0]
    x = jnp.transpose(image_nchw, (0, 2, 3, 1))              # NCHW -> NHWC
    patches, Ho, Wo = _im2col_3x3(x)                         # (N, hw, 27)
    hw = Ho * Wo

    TILE_HW = _pick_tile_hw(hw)
    assert hw % TILE_HW == 0

    KP = 32                                                  # 27 -> 32 aligned contraction dim
    patches = jnp.pad(patches, ((0, 0), (0, 0), (0, KP - patches.shape[-1])))
    patches = patches.astype(jnp.bfloat16)                   # (N, hw, 32)
    data_p = jnp.pad(data, ((0, 0), (0, 128 - data.shape[1])))
    data_p = data_p.astype(jnp.bfloat16).reshape(N, 1, 128)  # per-sample lane-dense block

    kernel = partial(fused_kernel, 1.0 / float(hw))
    full_vmem = pl.BlockSpec(memory_space=pltpu.MemorySpace.VMEM)

    out_full = pl.pallas_call(
        kernel,
        out_shape=jax.ShapeDtypeStruct((N, 1, 128), jnp.float32),
        grid_spec=pltpu.PrefetchScalarGridSpec(
            num_scalar_prefetch=0,
            grid=(N, hw // TILE_HW),                         # (sample, row-chunk)
            in_specs=[
                pl.BlockSpec((1, TILE_HW, KP), lambda n, r: (n, r, 0)),   # patches
                pl.BlockSpec((1, 1, 128), lambda n, r: (n, 0, 0)),        # data
            ] + [full_vmem] * 11,                                         # weights/biases
            out_specs=pl.BlockSpec((1, 1, 128), lambda n, r: (n, 0, 0)),
            scratch_shapes=[pltpu.VMEM((1, 128), jnp.float32)],           # pooled-sum acc
        ),
        compiler_params=pltpu.CompilerParams(
            dimension_semantics=("parallel", "arbitrary")),   # samples across TCs on v7x
    )(patches, data_p,
      kp["conv_w"], kp["conv_b"], kp["proj_w"], kp["proj_b"],
      kp["fc_w"], kp["fc_b"], kp["fc1a_w"], kp["fc1b_w"], kp["fc1_b"],
      kp["fc2_w"], kp["fc2_b"])

    return out_full[:, 0, :1]                                # (N, 1) real output lane


# --------------------------- pure-JAX reference ------------------------------

def reference_forward(image_nchw, data, params):
    x = jnp.transpose(image_nchw, (0, 2, 3, 1))
    patches, Ho, Wo = _im2col_3x3(x)                         # (N, hw, 27)
    y = jnp.maximum(patches @ params["conv_w"] + params["conv_b"], 0.0)
    pooled = y.mean(axis=1)                                  # (N, 32) global avg pool
    feat = jnp.maximum(pooled @ params["proj_w"] + params["proj_b"], 0.0)
    x1 = feat @ params["fc_w"] + params["fc_b"]
    xcat = jnp.concatenate([x1, data], axis=1)
    h = jnp.maximum(xcat @ params["fc1_w"] + params["fc1_b"], 0.0)
    return h @ params["fc2_w"] + params["fc2_b"]


# ------------------------------------ main -----------------------------------

if __name__ == "__main__":
    key = jax.random.PRNGKey(0)
    k_img, k_data, k_par = jax.random.split(key, 3)

    image = jax.random.normal(k_img, (2, 3, 18, 18), dtype=jnp.float32)   # NCHW like PyTorch
    data = jax.random.normal(k_data, (2, 10), dtype=jnp.float32)
    params = init_params(k_par)
    kparams = prepare_kernel_params(params)    # padding / bf16 cast / fc1 split done once

    out = jax.jit(my_model_forward)(image, data, kparams)
    out = jax.block_until_ready(out)
    assert out.shape == (2, 1) and out.dtype == jnp.float32

    ref = reference_forward(image, data, params)
    # tolerance accounts for bf16 MXU operands (f32 accumulation) vs f32 reference
    assert jnp.allclose(out, ref, atol=2e-2, rtol=2e-2)

    print("KERNEL_OK")
</pallas_src>

<mosaic_0001>
module attributes {stable_mosaic.version = 11 : i64} {
  func.func @fused_kernel(%arg0: i32, %arg1: i32, %arg2: memref<1x256x32xbf16, #tpu.memory_space<vmem>>, %arg3: memref<1x1x128xbf16, #tpu.memory_space<vmem>>, %arg4: memref<32x128xbf16, #tpu.memory_space<vmem>>, %arg5: memref<1x128xf32, #tpu.memory_space<vmem>>, %arg6: memref<128x2048xbf16, #tpu.memory_space<vmem>>, %arg7: memref<1x2048xf32, #tpu.memory_space<vmem>>, %arg8: memref<2048x128xbf16, #tpu.memory_space<vmem>>, %arg9: memref<1x128xf32, #tpu.memory_space<vmem>>, %arg10: memref<128x128xbf16, #tpu.memory_space<vmem>>, %arg11: memref<128x128xbf16, #tpu.memory_space<vmem>>, %arg12: memref<1x128xf32, #tpu.memory_space<vmem>>, %arg13: memref<128x128xbf16, #tpu.memory_space<vmem>>, %arg14: memref<1x128xf32, #tpu.memory_space<vmem>>, %arg15: memref<1x1x128xf32, #tpu.memory_space<vmem>>, %arg16: memref<1x128xf32, #tpu.memory_space<vmem>>) attributes {dimension_semantics = [#tpu.dimension_semantics<parallel>, #tpu.dimension_semantics<arbitrary>], iteration_bounds = array<i64: 2, 1>, scalar_prefetch = 0 : i64, scratch_operands = 1 : i64, tpu.core_type = #tpu.core_type<tc>, window_params = [{transform_indices = @transform_0, window_bounds = array<i64: 1, 256, 32>}, {transform_indices = @transform_1, window_bounds = array<i64: 1, 1, 128>}, {pipeline_mode = #tpu.pipeline_mode<synchronous>, transform_indices = @transform_2, window_bounds = array<i64: 32, 128>}, {pipeline_mode = #tpu.pipeline_mode<synchronous>, transform_indices = @transform_3, window_bounds = array<i64: 1, 128>}, {pipeline_mode = #tpu.pipeline_mode<synchronous>, transform_indices = @transform_4, window_bounds = array<i64: 128, 2048>}, {pipeline_mode = #tpu.pipeline_mode<synchronous>, transform_indices = @transform_5, window_bounds = array<i64: 1, 2048>}, {pipeline_mode = #tpu.pipeline_mode<synchronous>, transform_indices = @transform_6, window_bounds = array<i64: 2048, 128>}, {pipeline_mode = #tpu.pipeline_mode<synchronous>, transform_indices = @transform_7, window_bounds = array<i64: 1, 128>}, {pipeline_mode = #tpu.pipeline_mode<synchronous>, transform_indices = @transform_8, window_bounds = array<i64: 128, 128>}, {pipeline_mode = #tpu.pipeline_mode<synchronous>, transform_indices = @transform_9, window_bounds = array<i64: 128, 128>}, {pipeline_mode = #tpu.pipeline_mode<synchronous>, transform_indices = @transform_10, window_bounds = array<i64: 1, 128>}, {pipeline_mode = #tpu.pipeline_mode<synchronous>, transform_indices = @transform_11, window_bounds = array<i64: 128, 128>}, {pipeline_mode = #tpu.pipeline_mode<synchronous>, transform_indices = @transform_12, window_bounds = array<i64: 1, 128>}, {transform_indices = @transform_13, window_bounds = array<i64: 1, 1, 128>}]} {
    %c0_i32 = arith.constant 0 : i32
    %0 = arith.cmpi eq, %arg1, %c0_i32 : i32
    %1 = arith.extui %0 : i1 to i32
    %c0_i32_0 = arith.constant 0 : i32
    %2 = arith.cmpi ne, %1, %c0_i32_0 : i32
    scf.if %2 {
      %cst_15 = arith.constant 0.000000e+00 : f32
      %20 = vector.broadcast %cst_15 : f32 to vector<1x128xf32>
      %c0_16 = arith.constant 0 : index
      %c0_17 = arith.constant 0 : index
      %21 = vector.load %arg16[%c0_16, %c0_17] : memref<1x128xf32, #tpu.memory_space<vmem>>, vector<1x128xf32>
      tpu.vector_store %arg16[%c0_16, %c0_17], %20 {strides = array<i32>} : memref<1x128xf32, #tpu.memory_space<vmem>>, vector<1x128xf32>,
    } else {
    }
    %c0 = arith.constant 0 : index
    %c0_1 = arith.constant 0 : index
    %c0_2 = arith.constant 0 : index
    %3 = vector.load %arg2[%c0, %c0_1, %c0_2] : memref<1x256x32xbf16, #tpu.memory_space<vmem>>, vector<1x256x32xbf16>
    %4 = vector.shape_cast %3 : vector<1x256x32xbf16> to vector<256x32xbf16>
    %c0_3 = arith.constant 0 : index
    %c0_4 = arith.constant 0 : index
    %5 = vector.load %arg4[%c0_3, %c0_4] : memref<32x128xbf16, #tpu.memory_space<vmem>>, vector<32x128xbf16>
    %cst = arith.constant dense<0.000000e+00> : vector<256x128xf32>
    %6 = tpu.matmul %4, %5, %cst {dimension_numbers = #tpu.dot_dimension_numbers<[1], [0], [0], [1], [0, 0, 1, 1], [], []>} : vector<256x32xbf16>, vector<32x128xbf16>, vector<256x128xf32> -> vector<256x128xf32>
    %c0_5 = arith.constant 0 : index
    %c0_6 = arith.constant 0 : index
    %7 = vector.load %arg5[%c0_5, %c0_6] : memref<1x128xf32, #tpu.memory_space<vmem>>, vector<1x128xf32>
    %8 = vector.broadcast %7 : vector<1x128xf32> to vector<256x128xf32>
    %9 = arith.addf %6, %8 : vector<256x128xf32>
    %cst_7 = arith.constant 0.000000e+00 : f32
    %10 = vector.broadcast %cst_7 : f32 to vector<256x128xf32>
    %11 = arith.maximumf %9, %10 : vector<256x128xf32>
    %c0_8 = arith.constant 0 : index
    %c0_9 = arith.constant 0 : index
    %12 = vector.load %arg16[%c0_8, %c0_9] : memref<1x128xf32, #tpu.memory_space<vmem>>, vector<1x128xf32>
    %cst_10 = arith.constant dense<0.000000e+00> : vector<128xf32>
    %13 = vector.multi_reduction <add>, %11, %cst_10 [0] : vector<256x128xf32> to vector<128xf32>
    %14 = vector.shape_cast %13 : vector<128xf32> to vector<1x128xf32>
    %15 = arith.addf %12, %14 : vector<1x128xf32>
    %c0_11 = arith.constant 0 : index
    %c0_12 = arith.constant 0 : index
    %16 = vector.load %arg16[%c0_11, %c0_12] : memref<1x128xf32, #tpu.memory_space<vmem>>, vector<1x128xf32>
    tpu.vector_store %arg16[%c0_11, %c0_12], %15 {strides = array<i32>} : memref<1x128xf32, #tpu.memory_space<vmem>>, vector<1x128xf32>,
    %c0_i32_13 = arith.constant 0 : i32
    %17 = arith.cmpi eq, %arg1, %c0_i32_13 : i32
    %18 = arith.extui %17 : i1 to i32
    %c0_i32_14 = arith.constant 0 : i32
    %19 = arith.cmpi ne, %18, %c0_i32_14 : i32
    scf.if %19 {
      %c0_15 = arith.constant 0 : index
      %c0_16 = arith.constant 0 : index
      %20 = vector.load %arg16[%c0_15, %c0_16] : memref<1x128xf32, #tpu.memory_space<vmem>>, vector<1x128xf32>
      %cst_17 = arith.constant 3.906250e-03 : f32
      %21 = vector.broadcast %cst_17 : f32 to vector<1x128xf32>
      %22 = arith.mulf %20, %21 : vector<1x128xf32>
      %23 = arith.truncf %22 : vector<1x128xf32> to vector<1x128xbf16>
      %c0_18 = arith.constant 0 : index
      %c0_19 = arith.constant 0 : index
      %24 = vector.load %arg6[%c0_18, %c0_19] : memref<128x2048xbf16, #tpu.memory_space<vmem>>, vector<128x2048xbf16>
      %cst_20 = arith.constant dense<0.000000e+00> : vector<1x2048xf32>
      %25 = tpu.matmul %23, %24, %cst_20 {dimension_numbers = #tpu.dot_dimension_numbers<[1], [0], [0], [1], [0, 0, 1, 1], [], []>} : vector<1x128xbf16>, vector<128x2048xbf16>, vector<1x2048xf32> -> vector<1x2048xf32>
      %c0_21 = arith.constant 0 : index
      %c0_22 = arith.constant 0 : index
      %26 = vector.load %arg7[%c0_21, %c0_22] : memref<1x2048xf32, #tpu.memory_space<vmem>>, vector<1x2048xf32>
      %27 = arith.addf %25, %26 : vector<1x2048xf32>
      %cst_23 = arith.constant 0.000000e+00 : f32
      %28 = vector.broadcast %cst_23 : f32 to vector<1x2048xf32>
      %29 = arith.maximumf %27, %28 : vector<1x2048xf32>
      %30 = arith.truncf %29 : vector<1x2048xf32> to vector<1x2048xbf16>
      %c0_24 = arith.constant 0 : index
      %c0_25 = arith.constant 0 : index
      %31 = vector.load %arg8[%c0_24, %c0_25] : memref<2048x128xbf16, #tpu.memory_space<vmem>>, vector<2048x128xbf16>
      %cst_26 = arith.constant dense<0.000000e+00> : vector<1x128xf32>
      %32 = tpu.matmul %30, %31, %cst_26 {dimension_numbers = #tpu.dot_dimension_numbers<[1], [0], [0], [1], [0, 0, 1, 1], [], []>} : vector<1x2048xbf16>, vector<2048x128xbf16>, vector<1x128xf32> -> vector<1x128xf32>
      %c0_27 = arith.constant 0 : index
      %c0_28 = arith.constant 0 : index
      %33 = vector.load %arg9[%c0_27, %c0_28] : memref<1x128xf32, #tpu.memory_space<vmem>>, vector<1x128xf32>
      %34 = arith.addf %32, %33 : vector<1x128xf32>
      %35 = arith.truncf %34 : vector<1x128xf32> to vector<1x128xbf16>
      %c0_29 = arith.constant 0 : index
      %c0_30 = arith.constant 0 : index
      %c0_31 = arith.constant 0 : index
      %36 = vector.load %arg3[%c0_29, %c0_30, %c0_31] : memref<1x1x128xbf16, #tpu.memory_space<vmem>>, vector<1x1x128xbf16>
      %37 = vector.shape_cast %36 : vector<1x1x128xbf16> to vector<1x128xbf16>
      %c0_32 = arith.constant 0 : index
      %c0_33 = arith.constant 0 : index
      %38 = vector.load %arg10[%c0_32, %c0_33] : memref<128x128xbf16, #tpu.memory_space<vmem>>, vector<128x128xbf16>
      %cst_34 = arith.constant dense<0.000000e+00> : vector<1x128xf32>
      %39 = tpu.matmul %35, %38, %cst_34 {dimension_numbers = #tpu.dot_dimension_numbers<[1], [0], [0], [1], [0, 0, 1, 1], [], []>} : vector<1x128xbf16>, vector<128x128xbf16>, vector<1x128xf32> -> vector<1x128xf32>
      %c0_35 = arith.constant 0 : index
      %c0_36 = arith.constant 0 : index
      %40 = vector.load %arg11[%c0_35, %c0_36] : memref<128x128xbf16, #tpu.memory_space<vmem>>, vector<128x128xbf16>
      %cst_37 = arith.constant dense<0.000000e+00> : vector<1x128xf32>
      %41 = tpu.matmul %37, %40, %cst_37 {dimension_numbers = #tpu.dot_dimension_numbers<[1], [0], [0], [1], [0, 0, 1, 1], [], []>} : vector<1x128xbf16>, vector<128x128xbf16>, vector<1x128xf32> -> vector<1x128xf32>
      %42 = arith.addf %39, %41 : vector<1x128xf32>
      %c0_38 = arith.constant 0 : index
      %c0_39 = arith.constant 0 : index
      %43 = vector.load %arg12[%c0_38, %c0_39] : memref<1x128xf32, #tpu.memory_space<vmem>>, vector<1x128xf32>
      %44 = arith.addf %42, %43 : vector<1x128xf32>
      %cst_40 = arith.constant 0.000000e+00 : f32
      %45 = vector.broadcast %cst_40 : f32 to vector<1x128xf32>
      %46 = arith.maximumf %44, %45 : vector<1x128xf32>
      %47 = arith.truncf %46 : vector<1x128xf32> to vector<1x128xbf16>
      %c0_41 = arith.constant 0 : index
      %c0_42 = arith.constant 0 : index
      %48 = vector.load %arg13[%c0_41, %c0_42] : memref<128x128xbf16, #tpu.memory_space<vmem>>, vector<128x128xbf16>
      %cst_43 = arith.constant dense<0.000000e+00> : vector<1x128xf32>
      %49 = tpu.matmul %47, %48, %cst_43 {dimension_numbers = #tpu.dot_dimension_numbers<[1], [0], [0], [1], [0, 0, 1, 1], [], []>} : vector<1x128xbf16>, vector<128x128xbf16>, vector<1x128xf32> -> vector<1x128xf32>
      %c0_44 = arith.constant 0 : index
      %c0_45 = arith.constant 0 : index
      %50 = vector.load %arg14[%c0_44, %c0_45] : memref<1x128xf32, #tpu.memory_space<vmem>>, vector<1x128xf32>
      %51 = arith.addf %49, %50 : vector<1x128xf32>
      %52 = vector.shape_cast %51 : vector<1x128xf32> to vector<1x1x128xf32>
      %c0_46 = arith.constant 0 : index
      %c0_47 = arith.constant 0 : index
      %c0_48 = arith.constant 0 : index
      %53 = vector.load %arg15[%c0_46, %c0_47, %c0_48] : memref<1x1x128xf32, #tpu.memory_space<vmem>>, vector<1x1x128xf32>
      tpu.vector_store %arg15[%c0_46, %c0_47, %c0_48], %52 {strides = array<i32>} : memref<1x1x128xf32, #tpu.memory_space<vmem>>, vector<1x1x128xf32>,
    } else {
    }
    return
  }
  func.func @transform_0(%arg0: i32, %arg1: i32) -> (i32, i32, i32) {
    %c0_i32 = arith.constant 0 : i32
    %c0_i32_0 = arith.constant 0 : i32
    return %arg0, %arg1, %c0_i32 : i32, i32, i32
  }
  func.func @transform_1(%arg0: i32, %arg1: i32) -> (i32, i32, i32) {
    %c0_i32 = arith.constant 0 : i32
    %c0_i32_0 = arith.constant 0 : i32
    %c0_i32_1 = arith.constant 0 : i32
    return %arg0, %c0_i32, %c0_i32_0 : i32, i32, i32
  }
  func.func @transform_2(%arg0: i32, %arg1: i32) -> (i32, i32) {
    %c0_i32 = arith.constant 0 : i32
    %c0_i32_0 = arith.constant 0 : i32
    %c0_i32_1 = arith.constant 0 : i32
    return %c0_i32, %c0_i32_0 : i32, i32
  }
  func.func @transform_3(%arg0: i32, %arg1: i32) -> (i32, i32) {
    %c0_i32 = arith.constant 0 : i32
    %c0_i32_0 = arith.constant 0 : i32
    %c0_i32_1 = arith.constant 0 : i32
    return %c0_i32, %c0_i32_0 : i32, i32
  }
  func.func @transform_4(%arg0: i32, %arg1: i32) -> (i32, i32) {
    %c0_i32 = arith.constant 0 : i32
    %c0_i32_0 = arith.constant 0 : i32
    %c0_i32_1 = arith.constant 0 : i32
    return %c0_i32, %c0_i32_0 : i32, i32
  }
  func.func @transform_5(%arg0: i32, %arg1: i32) -> (i32, i32) {
    %c0_i32 = arith.constant 0 : i32
    %c0_i32_0 = arith.constant 0 : i32
    %c0_i32_1 = arith.constant 0 : i32
    return %c0_i32, %c0_i32_0 : i32, i32
  }
  func.func @transform_6(%arg0: i32, %arg1: i32) -> (i32, i32) {
    %c0_i32 = arith.constant 0 : i32
    %c0_i32_0 = arith.constant 0 : i32
    %c0_i32_1 = arith.constant 0 : i32
    return %c0_i32, %c0_i32_0 : i32, i32
  }
  func.func @transform_7(%arg0: i32, %arg1: i32) -> (i32, i32) {
    %c0_i32 = arith.constant 0 : i32
    %c0_i32_0 = arith.constant 0 : i32
    %c0_i32_1 = arith.constant 0 : i32
    return %c0_i32, %c0_i32_0 : i32, i32
  }
  func.func @transform_8(%arg0: i32, %arg1: i32) -> (i32, i32) {
    %c0_i32 = arith.constant 0 : i32
    %c0_i32_0 = arith.constant 0 : i32
    %c0_i32_1 = arith.constant 0 : i32
    return %c0_i32, %c0_i32_0 : i32, i32
  }
  func.func @transform_9(%arg0: i32, %arg1: i32) -> (i32, i32) {
    %c0_i32 = arith.constant 0 : i32
    %c0_i32_0 = arith.constant 0 : i32
    %c0_i32_1 = arith.constant 0 : i32
    return %c0_i32, %c0_i32_0 : i32, i32
  }
  func.func @transform_10(%arg0: i32, %arg1: i32) -> (i32, i32) {
    %c0_i32 = arith.constant 0 : i32
    %c0_i32_0 = arith.constant 0 : i32
    %c0_i32_1 = arith.constant 0 : i32
    return %c0_i32, %c0_i32_0 : i32, i32
  }
  func.func @transform_11(%arg0: i32, %arg1: i32) -> (i32, i32) {
    %c0_i32 = arith.constant 0 : i32
    %c0_i32_0 = arith.constant 0 : i32
    %c0_i32_1 = arith.constant 0 : i32
    return %c0_i32, %c0_i32_0 : i32, i32
  }
  func.func @transform_12(%arg0: i32, %arg1: i32) -> (i32, i32) {
    %c0_i32 = arith.constant 0 : i32
    %c0_i32_0 = arith.constant 0 : i32
    %c0_i32_1 = arith.constant 0 : i32
    return %c0_i32, %c0_i32_0 : i32, i32
  }
  func.func @transform_13(%arg0: i32, %arg1: i32) -> (i32, i32, i32) {
    %c0_i32 = arith.constant 0 : i32
    %c0_i32_0 = arith.constant 0 : i32
    %c0_i32_1 = arith.constant 0 : i32
    return %arg0, %c0_i32, %c0_i32_0 : i32, i32, i32
  }
}

</mosaic_0001>

<llo_original>
// kernel: my_model_forward.1
$region0: #{my_model_forward.1}
  #allocation0 [shape = 'u32[]', space=smem, size = 0x4, offset = 0x4, fixed_abs, tag = 'smem constant byte address 0x4 - core index']
  #allocation1 [shape = 'u32[144,128]{1,0:T(1,128)}', space=vmem, size = 0x12000, scoped, tag = 'internal scratch']
  #allocation2 [shape = 'f32[1,128]{1,0:T(1,128)}', space=vmem, size = 0x200, scoped, tag = 'scratch operand']
  %s0 = inlined_call_operand.vmem [shape: bf16[2,256,32], index: 0, kind: input, shape index: {}]
  %s1 = inlined_call_operand.vmem [shape: bf16[2,1,128], index: 1, kind: input, shape index: {}]
  %s2 = inlined_call_operand.vmem [shape: bf16[32,128], index: 2, kind: input, shape index: {}]
  %s3 = inlined_call_operand.vmem [shape: f32[1,128], index: 3, kind: input, shape index: {}]
  %s4 = inlined_call_operand.vmem [shape: bf16[128,2048], index: 4, kind: input, shape index: {}]
  %s5 = inlined_call_operand.hbm [shape: f32[1,2048], index: 5, kind: input, shape index: {}]
  %s6 = inlined_call_operand.vmem [shape: bf16[2048,128], index: 6, kind: input, shape index: {}]
  %s7 = inlined_call_operand.vmem [shape: f32[1,128], index: 7, kind: input, shape index: {}]
  %s8 = inlined_call_operand.vmem [shape: bf16[128,128], index: 8, kind: input, shape index: {}]
  %s9 = inlined_call_operand.vmem [shape: bf16[128,128], index: 9, kind: input, shape index: {}]
  %s10 = inlined_call_operand.vmem [shape: f32[1,128], index: 10, kind: input, shape index: {}]
  %s11 = inlined_call_operand.vmem [shape: bf16[128,128], index: 11, kind: input, shape index: {}]
  %s12 = inlined_call_operand.hbm [shape: f32[1,128], index: 12, kind: input, shape index: {}]
  %s13 = inlined_call_operand.vmem [shape: f32[2,1,128], index: 13, kind: output, shape index: {}]
  %s14 = sld [smem:[#allocation0]]
  $region101: #{my_model_forward.1} parent=0
    _
  %s16 = ssub.s32 1, %s14
  %s17 = scalar_select 0, %s16, %s14
  $region1: #{my_model_forward.1} parent=0
    #allocation3 [shape = 'u8[8192]{0}', space=vmem, size = 0x2000, scoped, tag = 'input window, operand 5, single buffered']
    #allocation4 [shape = 's32[2]{0}', space=sflag, size = 0x8, scoped, tag = 'scoped memory for my_model_forward.1']
    #allocation5 [shape = 'u8[512]{0}', space=vmem, size = 0x400, scoped, tag = 'input window, operand 12, single buffered']
    #allocation6 [shape = 's32[1]{0}', space=sflag, size = 0x4, scoped, tag = 'scoped memory for my_model_forward.1']
    %18 = vsyncpa [#allocation4], 0
    %19 = vsyncpa [#allocation6], 0
    loop: start=0, step=1, limit=4
    $region2: #{my_model_forward.1} parent=1 // loop_pre_header
      _
    $region3: #{my_model_forward.1} parent=1 // loop_header
      %s21 = sphi 0, %s25
      %p22 = scmp.ge.s32.totalorder %s21, 4
      %s28 = sphi 0, %s40
      %s29 = sphi 0, %s36
      %s30 = sphi 0, %s28
      %s31 = sphi 0, %s29
      %s32 = sphi 0, %s30
      %s33 = sphi 0, %s31
      %s45 = sphi 0, %s47
      %s48 = sphi 0, %s45
      %s49 = sphi 0, %s48
      %s65 = sphi 0, %s49
      %s71 = sphi 0, %s73
      %s74 = sphi 0, %s71
      %s75 = sphi 0, %s74
      %s91 = sphi 0, %s75
      %s95 = sphi 0, %s95
      %s97 = sphi 0, %s95
      %s98 = sphi 0, %s97
      %s112 = sphi 0, %s98
      %s116 = sphi 0, %s116
      %s118 = sphi 0, %s116
      %s119 = sphi 0, %s118
      %s133 = sphi 0, %s119
      %s137 = sphi 0, %s137
      %s139 = sphi 0, %s137
      %s140 = sphi 0, %s139
      %s154 = sphi 0, %s140
      %s158 = sphi 0, %s158
      %s160 = sphi 0, %s158
      %s161 = sphi 0, %s160
      %s175 = sphi 0, %s161
      %s179 = sphi 0, %s179
      %s181 = sphi 0, %s179
      %s182 = sphi 0, %s181
      %s196 = sphi 0, %s182
      %s200 = sphi 0, %s200
      %s202 = sphi 0, %s200
      %s203 = sphi 0, %s202
      %s217 = sphi 0, %s203
      %s221 = sphi 0, %s221
      %s223 = sphi 0, %s221
      %s224 = sphi 0, %s223
      %s238 = sphi 0, %s224
      %s242 = sphi 0, %s242
      %s244 = sphi 0, %s242
      %s245 = sphi 0, %s244
      %s259 = sphi 0, %s245
      %s263 = sphi 0, %s263
      %s265 = sphi 0, %s263
      %s266 = sphi 0, %s265
      %s280 = sphi 0, %s266
      %s284 = sphi 0, %s284
      %s286 = sphi 0, %s284
      %s287 = sphi 0, %s286
      %s301 = sphi 0, %s287
      %s305 = sphi 0, %s305
      %s307 = sphi 0, %s305
      %s308 = sphi 0, %s307
      %s322 = sphi 0, %s308
      %s328 = sphi 0, %s330
      %s331 = sphi 0, %s328
      %s332 = sphi 0, %s331
      %s348 = sphi 0, %s332
    $region4: #{my_model_forward.1} parent=1 // loop_header_branch
      %24 = sbr.rel (%p22) target = $region8
    $region5: #{my_model_forward.1} parent=1 // loop_body
      %s26 = ssub.s32 %s21, 1
      %s27 = ssub.s32 %s21, 2
      %s34 = sadd.s32 1, %s29
      %p35 = scmp.ge.s32.totalorder %s34, 1
      %s36 = scalar_select %p35, 0, %s34
      %s37 = sadd.s32 1, %s28
      %s38 = scalar_select %p35, %s37, %s28
      %p39 = scmp.ge.s32.totalorder %s38, 2
      %s40 = scalar_select %p39, 0, %s38
      %s41 = ssub.s32 %s28, %s40
      %s42 = ssub.s32 %s29, %s36
      %s43 = sor.u32 %s41, %s42
      %p44 = scmp.eq.s32.totalorder %s43, 0
      %s46 = sadd.s32 %s45, 1
      %s47 = scalar_select %p44, %s45, %s46
      %p50 = pneg %p44
      %p51 = scmp.eq.s32.totalorder %s21, 1
      %p52 = por %p50, %p51
      %p53 = scmp.ne.s32.totalorder %s45, %s48
      %p54 = scmp.eq.s32.totalorder %s21, 0
      %p55 = por %p53, %p54
      %p56 = scmp.ne.s32.totalorder %s45, %s48
      %p57 = scmp.eq.s32.totalorder %s26, 1
      %p58 = por %p56, %p57
      %p59 = scmp.ne.s32.totalorder %s48, %s49
      %p60 = scmp.eq.s32.totalorder %s26, 0
      %p61 = por %p59, %p60
      %p62 = scmp.ne.s32.totalorder %s48, %s49
      %p63 = scmp.eq.s32.totalorder %s27, 1
      %p64 = por %p62, %p63
      %p66 = scmp.ne.s32.totalorder %s49, %s65
      %p67 = scmp.eq.s32.totalorder %s27, 0
      %p68 = por %p66, %p67
      %s69 = ssub.s32 %s28, %s40
      %p70 = scmp.eq.s32.totalorder %s69, 0
      %s72 = sadd.s32 %s71, 1
      %s73 = scalar_select %p70, %s71, %s72
      %p76 = pneg %p70
      %p77 = scmp.eq.s32.totalorder %s21, 1
      %p78 = por %p76, %p77
      %p79 = scmp.ne.s32.totalorder %s71, %s74
      %p80 = scmp.eq.s32.totalorder %s21, 0
      %p81 = por %p79, %p80
      %p82 = scmp.ne.s32.totalorder %s71, %s74
      %p83 = scmp.eq.s32.totalorder %s26, 1
      %p84 = por %p82, %p83
      %p85 = scmp.ne.s32.totalorder %s74, %s75
      %p86 = scmp.eq.s32.totalorder %s26, 0
      %p87 = por %p85, %p86
      %p88 = scmp.ne.s32.totalorder %s74, %s75
      %p89 = scmp.eq.s32.totalorder %s27, 1
      %p90 = por %p88, %p89
      %p92 = scmp.ne.s32.totalorder %s75, %s91
      %p93 = scmp.eq.s32.totalorder %s27, 0
      %p94 = por %p92, %p93
      %s96 = sadd.s32 %s95, 1
      %p99 = scmp.eq.s32.totalorder %s21, 1
      %p100 = scmp.ne.s32.totalorder %s95, %s97
      %p101 = scmp.eq.s32.totalorder %s21, 0
      %p102 = por %p100, %p101
      %p103 = scmp.ne.s32.totalorder %s95, %s97
      %p104 = scmp.eq.s32.totalorder %s26, 1
      %p105 = por %p103, %p104
      %p106 = scmp.ne.s32.totalorder %s97, %s98
      %p107 = scmp.eq.s32.totalorder %s26, 0
      %p108 = por %p106, %p107
      %p109 = scmp.ne.s32.totalorder %s97, %s98
      %p110 = scmp.eq.s32.totalorder %s27, 1
      %p111 = por %p109, %p110
      %p113 = scmp.ne.s32.totalorder %s98, %s112
      %p114 = scmp.eq.s32.totalorder %s27, 0
      %p115 = por %p113, %p114
      %s117 = sadd.s32 %s116, 1
      %p120 = scmp.eq.s32.totalorder %s21, 1
      %p121 = scmp.ne.s32.totalorder %s116, %s118
      %p122 = scmp.eq.s32.totalorder %s21, 0
      %p123 = por %p121, %p122
      %p124 = scmp.ne.s32.totalorder %s116, %s118
      %p125 = scmp.eq.s32.totalorder %s26, 1
      %p126 = por %p124, %p125
      %p127 = scmp.ne.s32.totalorder %s118, %s119
      %p128 = scmp.eq.s32.totalorder %s26, 0
      %p129 = por %p127, %p128
      %p130 = scmp.ne.s32.totalorder %s118, %s119
      %p131 = scmp.eq.s32.totalorder %s27, 1
      %p132 = por %p130, %p131
      %p134 = scmp.ne.s32.totalorder %s119, %s133
      %p135 = scmp.eq.s32.totalorder %s27, 0
      %p136 = por %p134, %p135
      %s138 = sadd.s32 %s137, 1
      %p141 = scmp.eq.s32.totalorder %s21, 1
      %p142 = scmp.ne.s32.totalorder %s137, %s139
      %p143 = scmp.eq.s32.totalorder %s21, 0
      %p144 = por %p142, %p143
      %p145 = scmp.ne.s32.totalorder %s137, %s139
      %p146 = scmp.eq.s32.totalorder %s26, 1
      %p147 = por %p145, %p146
      %p148 = scmp.ne.s32.totalorder %s139, %s140
      %p149 = scmp.eq.s32.totalorder %s26, 0
      %p150 = por %p148, %p149
      %p151 = scmp.ne.s32.totalorder %s139, %s140
      %p152 = scmp.eq.s32.totalorder %s27, 1
      %p153 = por %p151, %p152
      %p155 = scmp.ne.s32.totalorder %s140, %s154
      %p156 = scmp.eq.s32.totalorder %s27, 0
      %p157 = por %p155, %p156
      %s159 = sadd.s32 %s158, 1
      %p162 = scmp.eq.s32.totalorder %s21, 1
      %p163 = scmp.ne.s32.totalorder %s158, %s160
      %p164 = scmp.eq.s32.totalorder %s21, 0
      %p165 = por %p163, %p164
      %p166 = scmp.ne.s32.totalorder %s158, %s160
      %p167 = scmp.eq.s32.totalorder %s26, 1
      %p168 = por %p166, %p167
      %p169 = scmp.ne.s32.totalorder %s160, %s161
      %p170 = scmp.eq.s32.totalorder %s26, 0
      %p171 = por %p169, %p170
      %p172 = scmp.ne.s32.totalorder %s160, %s161
      %p173 = scmp.eq.s32.totalorder %s27, 1
      %p174 = por %p172, %p173
      %p176 = scmp.ne.s32.totalorder %s161, %s175
      %p177 = scmp.eq.s32.totalorder %s27, 0
      %p178 = por %p176, %p177
      %s180 = sadd.s32 %s179, 1
      %p183 = scmp.eq.s32.totalorder %s21, 1
      %p184 = scmp.ne.s32.totalorder %s179, %s181
      %p185 = scmp.eq.s32.totalorder %s21, 0
      %p186 = por %p184, %p185
      %p187 = scmp.ne.s32.totalorder %s179, %s181
      %p188 = scmp.eq.s32.totalorder %s26, 1
      %p189 = por %p187, %p188
      %p190 = scmp.ne.s32.totalorder %s181, %s182
      %p191 = scmp.eq.s32.totalorder %s26, 0
      %p192 = por %p190, %p191
      %p193 = scmp.ne.s32.totalorder %s181, %s182
      %p194 = scmp.eq.s32.totalorder %s27, 1
      %p195 = por %p193, %p194
      %p197 = scmp.ne.s32.totalorder %s182, %s196
      %p198 = scmp.eq.s32.totalorder %s27, 0
      %p199 = por %p197, %p198
      %s201 = sadd.s32 %s200, 1
      %p204 = scmp.eq.s32.totalorder %s21, 1
      %p205 = scmp.ne.s32.totalorder %s200, %s202
      %p206 = scmp.eq.s32.totalorder %s21, 0
      %p207 = por %p205, %p206
      %p208 = scmp.ne.s32.totalorder %s200, %s202
      %p209 = scmp.eq.s32.totalorder %s26, 1
      %p210 = por %p208, %p209
      %p211 = scmp.ne.s32.totalorder %s202, %s203
      %p212 = scmp.eq.s32.totalorder %s26, 0
      %p213 = por %p211, %p212
      %p214 = scmp.ne.s32.totalorder %s202, %s203
      %p215 = scmp.eq.s32.totalorder %s27, 1
      %p216 = por %p214, %p215
      %p218 = scmp.ne.s32.totalorder %s203, %s217
      %p219 = scmp.eq.s32.totalorder %s27, 0
      %p220 = por %p218, %p219
      %s222 = sadd.s32 %s221, 1
      %p225 = scmp.eq.s32.totalorder %s21, 1
      %p226 = scmp.ne.s32.totalorder %s221, %s223
      %p227 = scmp.eq.s32.totalorder %s21, 0
      %p228 = por %p226, %p227
      %p229 = scmp.ne.s32.totalorder %s221, %s223
      %p230 = scmp.eq.s32.totalorder %s26, 1
      %p231 = por %p229, %p230
      %p232 = scmp.ne.s32.totalorder %s223, %s224
      %p233 = scmp.eq.s32.totalorder %s26, 0
      %p234 = por %p232, %p233
      %p235 = scmp.ne.s32.totalorder %s223, %s224
      %p236 = scmp.eq.s32.totalorder %s27, 1
      %p237 = por %p235, %p236
      %p239 = scmp.ne.s32.totalorder %s224, %s238
      %p240 = scmp.eq.s32.totalorder %s27, 0
      %p241 = por %p239, %p240
      %s243 = sadd.s32 %s242, 1
      %p246 = scmp.eq.s32.totalorder %s21, 1
      %p247 = scmp.ne.s32.totalorder %s242, %s244
      %p248 = scmp.eq.s32.totalorder %s21, 0
      %p249 = por %p247, %p248
      %p250 = scmp.ne.s32.totalorder %s242, %s244
      %p251 = scmp.eq.s32.totalorder %s26, 1
      %p252 = por %p250, %p251
      %p253 = scmp.ne.s32.totalorder %s244, %s245
      %p254 = scmp.eq.s32.totalorder %s26, 0
      %p255 = por %p253, %p254
      %p256 = scmp.ne.s32.totalorder %s244, %s245
      %p257 = scmp.eq.s32.totalorder %s27, 1
      %p258 = por %p256, %p257
      %p260 = scmp.ne.s32.totalorder %s245, %s259
      %p261 = scmp.eq.s32.totalorder %s27, 0
      %p262 = por %p260, %p261
      %s264 = sadd.s32 %s263, 1
      %p267 = scmp.eq.s32.totalorder %s21, 1
      %p268 = scmp.ne.s32.totalorder %s263, %s265
      %p269 = scmp.eq.s32.totalorder %s21, 0
      %p270 = por %p268, %p269
      %p271 = scmp.ne.s32.totalorder %s263, %s265
      %p272 = scmp.eq.s32.totalorder %s26, 1
      %p273 = por %p271, %p272
      %p274 = scmp.ne.s32.totalorder %s265, %s266
      %p275 = scmp.eq.s32.totalorder %s26, 0
      %p276 = por %p274, %p275
      %p277 = scmp.ne.s32.totalorder %s265, %s266
      %p278 = scmp.eq.s32.totalorder %s27, 1
      %p279 = por %p277, %p278
      %p281 = scmp.ne.s32.totalorder %s266, %s280
      %p282 = scmp.eq.s32.totalorder %s27, 0
      %p283 = por %p281, %p282
      %s285 = sadd.s32 %s284, 1
      %p288 = scmp.eq.s32.totalorder %s21, 1
      %p289 = scmp.ne.s32.totalorder %s284, %s286
      %p290 = scmp.eq.s32.totalorder %s21, 0
      %p291 = por %p289, %p290
      %p292 = scmp.ne.s32.totalorder %s284, %s286
      %p293 = scmp.eq.s32.totalorder %s26, 1
      %p294 = por %p292, %p293
      %p295 = scmp.ne.s32.totalorder %s286, %s287
      %p296 = scmp.eq.s32.totalorder %s26, 0
      %p297 = por %p295, %p296
      %p298 = scmp.ne.s32.totalorder %s286, %s287
      %p299 = scmp.eq.s32.totalorder %s27, 1
      %p300 = por %p298, %p299
      %p302 = scmp.ne.s32.totalorder %s287, %s301
      %p303 = scmp.eq.s32.totalorder %s27, 0
      %p304 = por %p302, %p303
      %s306 = sadd.s32 %s305, 1
      %p309 = scmp.eq.s32.totalorder %s21, 1
      %p310 = scmp.ne.s32.totalorder %s305, %s307
      %p311 = scmp.eq.s32.totalorder %s21, 0
      %p312 = por %p310, %p311
      %p313 = scmp.ne.s32.totalorder %s305, %s307
      %p314 = scmp.eq.s32.totalorder %s26, 1
      %p315 = por %p313, %p314
      %p316 = scmp.ne.s32.totalorder %s307, %s308
      %p317 = scmp.eq.s32.totalorder %s26, 0
      %p318 = por %p316, %p317
      %p319 = scmp.ne.s32.totalorder %s307, %s308
      %p320 = scmp.eq.s32.totalorder %s27, 1
      %p321 = por %p319, %p320
      %p323 = scmp.ne.s32.totalorder %s308, %s322
      %p324 = scmp.eq.s32.totalorder %s27, 0
      %p325 = por %p323, %p324
      %s326 = ssub.s32 %s28, %s40
      %p327 = scmp.eq.s32.totalorder %s326, 0
      %s329 = sadd.s32 %s328, 1
      %s330 = scalar_select %p327, %s328, %s329
      %p333 = pneg %p327
      %p334 = scmp.eq.s32.totalorder %s21, 1
      %p335 = por %p333, %p334
      %p336 = scmp.ne.s32.totalorder %s328, %s331
      %p337 = scmp.eq.s32.totalorder %s21, 0
      %p338 = por %p336, %p337
      %p339 = scmp.ne.s32.totalorder %s328, %s331
      %p340 = scmp.eq.s32.totalorder %s26, 1
      %p341 = por %p339, %p340
      %p342 = scmp.ne.s32.totalorder %s331, %s332
      %p343 = scmp.eq.s32.totalorder %s26, 0
      %p344 = por %p342, %p343
      %p345 = scmp.ne.s32.totalorder %s331, %s332
      %p346 = scmp.eq.s32.totalorder %s27, 1
      %p347 = por %p345, %p346
      %p349 = scmp.ne.s32.totalorder %s332, %s348
      %p350 = scmp.eq.s32.totalorder %s27, 0
      %p351 = por %p349, %p350
      %p352 = scmp.le.s32.totalorder 1, %s21
      %p353 = scmp.lt.s32.totalorder %s21, 3
      %p354 = pnand %p352, %p353
      %p355 = pneg %p354
      // Predicated region
      $region9: #{my_model_forward.1} parent=5 // pred_check
        _
      $region10: #{my_model_forward.1} parent=5 // pred_check_branch
        %357 = sbr.rel (%p354) target = $region12
      $region11: #{my_model_forward.1} parent=5 // pred_region
        %s358 = ssub.s32 %s21, 1
        // Predicated region
        $region13: #{my_model_forward.1} parent=11 // pred_check
          %p359 = pneg %p108
        $region14: #{my_model_forward.1} parent=11 // pred_check_branch
          %361 = sbr.rel (%p359) target = $region16
        $region15: #{my_model_forward.1} parent=11 // pred_region
          _
        $region16: #{my_model_forward.1} parent=11 // pred_fallthru
          _
        // Predicated region
        $region17: #{my_model_forward.1} parent=11 // pred_check
          %p362 = pneg %p129
        $region18: #{my_model_forward.1} parent=11 // pred_check_branch
          %364 = sbr.rel (%p362) target = $region20
        $region19: #{my_model_forward.1} parent=11 // pred_region
          _
        $region20: #{my_model_forward.1} parent=11 // pred_fallthru
          _
        // Predicated region
        $region21: #{my_model_forward.1} parent=11 // pred_check
          %p365 = pneg %p150
        $region22: #{my_model_forward.1} parent=11 // pred_check_branch
          %367 = sbr.rel (%p365) target = $region24
        $region23: #{my_model_forward.1} parent=11 // pred_region
          _
        $region24: #{my_model_forward.1} parent=11 // pred_fallthru
          _
        // Predicated region
        $region25: #{my_model_forward.1} parent=11 // pred_check
          %p368 = pneg %p171
        $region26: #{my_model_forward.1} parent=11 // pred_check_branch
          %370 = sbr.rel (%p368) target = $region28
        $region27: #{my_model_forward.1} parent=11 // pred_region
          %s372 = ssub.s32 256, 256
          %373 = vsyncadd [#allocation4], %s372
          %s375 = sshll.u32 [#allocation3], 4
          %s376 = int_to_ptr.vmem [resolvable:$true] %s375
          %378 = dma.hbm_to_vmem [thread:$0]  %s5, 256, %s376, [#allocation4]
        $region28: #{my_model_forward.1} parent=11 // pred_fallthru
          _
        // Predicated region
        $region29: #{my_model_forward.1} parent=11 // pred_check
          %p379 = pneg %p192
        $region30: #{my_model_forward.1} parent=11 // pred_check_branch
          %381 = sbr.rel (%p379) target = $region32
        $region31: #{my_model_forward.1} parent=11 // pred_region
          _
        $region32: #{my_model_forward.1} parent=11 // pred_fallthru
          _
        // Predicated region
        $region33: #{my_model_forward.1} parent=11 // pred_check
          %p382 = pneg %p213
        $region34: #{my_model_forward.1} parent=11 // pred_check_branch
          %384 = sbr.rel (%p382) target = $region36
        $region35: #{my_model_forward.1} parent=11 // pred_region
          _
        $region36: #{my_model_forward.1} parent=11 // pred_fallthru
          _
        // Predicated region
        $region37: #{my_model_forward.1} parent=11 // pred_check
          %p385 = pneg %p234
        $region38: #{my_model_forward.1} parent=11 // pred_check_branch
          %387 = sbr.rel (%p385) target = $region40
        $region39: #{my_model_forward.1} parent=11 // pred_region
          _
        $region40: #{my_model_forward.1} parent=11 // pred_fallthru
          _
        // Predicated region
        $region41: #{my_model_forward.1} parent=11 // pred_check
          %p388 = pneg %p255
        $region42: #{my_model_forward.1} parent=11 // pred_check_branch
          %390 = sbr.rel (%p388) target = $region44
        $region43: #{my_model_forward.1} parent=11 // pred_region
          _
        $region44: #{my_model_forward.1} parent=11 // pred_fallthru
          _
        // Predicated region
        $region45: #{my_model_forward.1} parent=11 // pred_check
          %p391 = pneg %p276
        $region46: #{my_model_forward.1} parent=11 // pred_check_branch
          %393 = sbr.rel (%p391) target = $region48
        $region47: #{my_model_forward.1} parent=11 // pred_region
          _
        $region48: #{my_model_forward.1} parent=11 // pred_fallthru
          _
        // Predicated region
        $region49: #{my_model_forward.1} parent=11 // pred_check
          %p394 = pneg %p297
        $region50: #{my_model_forward.1} parent=11 // pred_check_branch
          %396 = sbr.rel (%p394) target = $region52
        $region51: #{my_model_forward.1} parent=11 // pred_region
          _
        $region52: #{my_model_forward.1} parent=11 // pred_fallthru
          _
        // Predicated region
        $region53: #{my_model_forward.1} parent=11 // pred_check
          %p397 = pneg %p318
        $region54: #{my_model_forward.1} parent=11 // pred_check_branch
          %399 = sbr.rel (%p397) target = $region56
        $region55: #{my_model_forward.1} parent=11 // pred_region
          %s401 = ssub.s32 16, 16
          %402 = vsyncadd [#allocation6], %s401
          %s404 = sshll.u32 [#allocation5], 4
          %s405 = int_to_ptr.vmem [resolvable:$true] %s404
          %407 = dma.hbm_to_vmem [thread:$0]  %s12, 16, %s405, [#allocation6]
        $region56: #{my_model_forward.1} parent=11 // pred_fallthru
          _
      $region12: #{my_model_forward.1} parent=5 // pred_fallthru
        _
      %p408 = scmp.lt.s32.totalorder %s21, 2
      // Predicated region
      $region57: #{my_model_forward.1} parent=5 // pred_check
        %p409 = pneg %p408
      $region58: #{my_model_forward.1} parent=5 // pred_check_branch
        %411 = sbr.rel (%p409) target = $region60
      $region59: #{my_model_forward.1} parent=5 // pred_region
        // Predicated region
        $region61: #{my_model_forward.1} parent=59 // pred_check
          %p412 = pneg %p55
        $region62: #{my_model_forward.1} parent=59 // pred_check_branch
          %414 = sbr.rel (%p412) target = $region64
        $region63: #{my_model_forward.1} parent=59 // pred_region
          %s415 = smul.u32 32, %s29
          %p416 = scmp.lt.s32.totalorder %s28, 1
          %s417 = scalar_select %p416, %s28, 1
          %p418 = scmp.lt.s32.totalorder %s415, 31
          %s419 = scalar_select %p418, %s415, 31
          %s420 = smul.addr %s417, 32
          %s421 = sadd.s32 %s419, %s420
          %s422 = smul.addr %s421, 4
          %s423 = scalar_lea.vmem %s0, %s422
          %s424 = smul.u32 32, %s29
        $region64: #{my_model_forward.1} parent=59 // pred_fallthru
          _
        // Predicated region
        $region65: #{my_model_forward.1} parent=59 // pred_check
          %p425 = pneg %p81
        $region66: #{my_model_forward.1} parent=59 // pred_check_branch
          %427 = sbr.rel (%p425) target = $region68
        $region67: #{my_model_forward.1} parent=59 // pred_region
          %p428 = scmp.lt.s32.totalorder %s28, 1
          %s429 = scalar_select %p428, %s28, 1
          %s430 = scalar_lea.vmem %s1, %s429
        $region68: #{my_model_forward.1} parent=59 // pred_fallthru
          _
      $region60: #{my_model_forward.1} parent=5 // pred_fallthru
        _
      %p431 = scmp.le.s32.totalorder 1, %s21
      %p432 = scmp.lt.s32.totalorder %s21, 3
      %p433 = pnand %p431, %p432
      %p434 = pneg %p433
      // Predicated region
      $region69: #{my_model_forward.1} parent=5 // pred_check
        _
      $region70: #{my_model_forward.1} parent=5 // pred_check_branch
        %436 = sbr.rel (%p433) target = $region72
      $region71: #{my_model_forward.1} parent=5 // pred_region
        %s437 = ssub.s32 %s21, 1
        // Predicated region
        $region73: #{my_model_forward.1} parent=71 // pred_check
          %p438 = pneg %p171
        $region74: #{my_model_forward.1} parent=71 // pred_check_branch
          %440 = sbr.rel (%p438) target = $region76
        $region75: #{my_model_forward.1} parent=71 // pred_region
          %441 = dma.done [#allocation4], 256
        $region76: #{my_model_forward.1} parent=71 // pred_fallthru
          _
        // Predicated region
        $region77: #{my_model_forward.1} parent=71 // pred_check
          %p442 = pneg %p318
        $region78: #{my_model_forward.1} parent=71 // pred_check_branch
          %444 = sbr.rel (%p442) target = $region80
        $region79: #{my_model_forward.1} parent=71 // pred_region
          %445 = dma.done [#allocation6], 16
        $region80: #{my_model_forward.1} parent=71 // pred_fallthru
          _
        %s446 = smul.u32 32, %s31
        %p447 = scmp.lt.s32.totalorder %s30, 1
        %s448 = scalar_select %p447, %s30, 1
        %p449 = scmp.lt.s32.totalorder %s446, 31
        %s450 = scalar_select %p449, %s446, 31
        %s451 = smul.addr %s448, 32
        %s452 = sadd.s32 %s450, %s451
        %s453 = smul.addr %s452, 4
        %s454 = scalar_lea.vmem %s0, %s453
        %p455 = pneg %p61
        %p456 = pneg %p58
        %p457 = scmp.lt.s32.totalorder %s30, 1
        %s458 = scalar_select %p457, %s30, 1
        %s459 = scalar_lea.vmem %s1, %s458
        %p460 = pneg %p87
        %p461 = pneg %p84
        %p462 = pneg %p108
        %p463 = pneg %p105
        %p464 = pneg %p129
        %p465 = pneg %p126
        %p466 = pneg %p150
        %p467 = pneg %p147
        %p468 = pneg %p171
        %p469 = pneg %p168
        %p470 = pneg %p192
        %p471 = pneg %p189
        %p472 = pneg %p213
        %p473 = pneg %p210
        %p474 = pneg %p234
        %p475 = pneg %p231
        %p476 = pneg %p255
        %p477 = pneg %p252
        %p478 = pneg %p276
        %p479 = pneg %p273
        %p480 = pneg %p297
        %p481 = pneg %p294
        %p482 = pneg %p318
        %p483 = pneg %p315
        %p484 = pneg %p344
        %p485 = pneg %p341
        %p486 = scmp.lt.s32.totalorder %s30, 1
        %s487 = scalar_select %p486, %s30, 1
        %s488 = scalar_lea.vmem %s13, %s487
        %s489 = smul.u32 32, %s31
        %p490 = scmp.lt.s32.totalorder %s30, 1
        %s491 = scalar_select %p490, %s30, 1
        %p492 = scmp.lt.s32.totalorder %s489, 31
        %s493 = scalar_select %p492, %s489, 31
        %s494 = smul.addr %s491, 32
        %s495 = sadd.s32 %s493, %s494
        %s496 = smul.addr %s495, 4
        %s497 = scalar_lea.vmem %s0, %s496
        %s498 = smul.u32 32, %s31
        %p499 = scmp.lt.s32.totalorder %s30, 1
        %s500 = scalar_select %p499, %s30, 1
        %s501 = scalar_lea.vmem %s1, %s500
        %p502 = scmp.lt.s32.totalorder %s30, 1
        %s503 = scalar_select %p502, %s30, 1
        %s504 = scalar_lea.vmem %s13, %s503
        %p506 = scmp.eq.s32.totalorder %s31, 0
        // Predicated region
        $region81: #{my_model_forward.1} parent=71 // pred_check
          %p507 = pneg %p506
        $region82: #{my_model_forward.1} parent=71 // pred_check_branch
          %509 = sbr.rel (%p507) target = $region84
        $region83: #{my_model_forward.1} parent=71 // pred_region
          %510 = vst [vmem:[#allocation2] sm:$0x1] 0.0
        $region84: #{my_model_forward.1} parent=71 // pred_fallthru
          _
        %v511 = vld [vmem:[%s497] sm:$0xf]
        %v512 = vld [vmem:[%s497 + $0x4] sm:$0xf]
        %v513 = vld [vmem:[%s497 + $0x8] sm:$0xf]
        %v514 = vld [vmem:[%s497 + $0xc] sm:$0xf]
        %v515 = vld [vmem:[%s497 + $0x10] sm:$0xf]
        %v516 = vld [vmem:[%s497 + $0x14] sm:$0xf]
        %v517 = vld [vmem:[%s497 + $0x18] sm:$0xf]
        %v518 = vld [vmem:[%s497 + $0x1c] sm:$0xf]
        %v519 = vld [vmem:[%s497 + $0x20] sm:$0xf]
        %v520 = vld [vmem:[%s497 + $0x24] sm:$0xf]
        %v521 = vld [vmem:[%s497 + $0x28] sm:$0xf]
        %v522 = vld [vmem:[%s497 + $0x2c] sm:$0xf]
        %v523 = vld [vmem:[%s497 + $0x30] sm:$0xf]
        %v524 = vld [vmem:[%s497 + $0x34] sm:$0xf]
        %v525 = vld [vmem:[%s497 + $0x38] sm:$0xf]
        %v526 = vld [vmem:[%s497 + $0x3c] sm:$0xf]
        %v527 = vld [vmem:[%s497 + $0x40] sm:$0xf]
        %v528 = vld [vmem:[%s497 + $0x44] sm:$0xf]
        %v529 = vld [vmem:[%s497 + $0x48] sm:$0xf]
        %v530 = vld [vmem:[%s497 + $0x4c] sm:$0xf]
        %v531 = vld [vmem:[%s497 + $0x50] sm:$0xf]
        %v532 = vld [vmem:[%s497 + $0x54] sm:$0xf]
        %v533 = vld [vmem:[%s497 + $0x58] sm:$0xf]
        %v534 = vld [vmem:[%s497 + $0x5c] sm:$0xf]
        %v535 = vld [vmem:[%s497 + $0x60] sm:$0xf]
        %v536 = vld [vmem:[%s497 + $0x64] sm:$0xf]
        %v537 = vld [vmem:[%s497 + $0x68] sm:$0xf]
        %v538 = vld [vmem:[%s497 + $0x6c] sm:$0xf]
        %v539 = vld [vmem:[%s497 + $0x70] sm:$0xf]
        %v540 = vld [vmem:[%s497 + $0x74] sm:$0xf]
        %v541 = vld [vmem:[%s497 + $0x78] sm:$0xf]
        %v542 = vld [vmem:[%s497 + $0x7c] sm:$0xf]
        %v543 = vld [vmem:[%s2] sm:$0xf]
        %v544 = vld [vmem:[%s2 + $0x4] sm:$0xf]
        %v545 = vld [vmem:[%s2 + $0x8] sm:$0xf]
        %v546 = vld [vmem:[%s2 + $0xc] sm:$0xf]
        %v547 = vld [vmem:[%s3] sm:$0x1]
        %v549 = vlaneseq
        %v550 = vshrl.u32 %v549, 7
        %v551 = vsub.s32 0, %v550
        %v552 = vrot.slane %v547, %v551
        %v586 = vunpack.c.l.b16 %v511
        %v587 = vunpack.c.l.b16 %v512
        %v588 = vunpack.c.l.b16 %v513
        %v589 = vunpack.c.l.b16 %v514
        %v590 = vunpack.c.l.b16 %v515
        %v591 = vunpack.c.l.b16 %v516
        %v592 = vunpack.c.l.b16 %v517
        %v593 = vunpack.c.l.b16 %v518
        %v594 = vunpack.c.l.b16 %v519
        %v595 = vunpack.c.l.b16 %v520
        %v596 = vunpack.c.l.b16 %v521
        %v597 = vunpack.c.l.b16 %v522
        %v598 = vunpack.c.l.b16 %v523
        %v599 = vunpack.c.l.b16 %v524
        %v600 = vunpack.c.l.b16 %v525
        %v601 = vunpack.c.l.b16 %v526
        %v602 = vunpack.c.l.b16 %v527
        %v603 = vunpack.c.l.b16 %v528
        %v604 = vunpack.c.l.b16 %v529
        %v605 = vunpack.c.l.b16 %v530
        %v606 = vunpack.c.l.b16 %v531
        %v607 = vunpack.c.l.b16 %v532
        %v608 = vunpack.c.l.b16 %v533
        %v609 = vunpack.c.l.b16 %v534
        %v610 = vunpack.c.l.b16 %v535
        %v611 = vunpack.c.l.b16 %v536
        %v612 = vunpack.c.l.b16 %v537
        %v613 = vunpack.c.l.b16 %v538
        %v614 = vunpack.c.l.b16 %v539
        %v615 = vunpack.c.l.b16 %v540
        %v616 = vunpack.c.l.b16 %v541
        %v617 = vunpack.c.l.b16 %v542
        %v618 = vpack.c.b16 %v587, %v586
        %v619 = vpack.c.b16 %v589, %v588
        %v620 = vpack.c.b16 %v591, %v590
        %v621 = vpack.c.b16 %v593, %v592
        %v622 = vpack.c.b16 %v595, %v594
        %v623 = vpack.c.b16 %v597, %v596
        %v624 = vpack.c.b16 %v599, %v598
        %v625 = vpack.c.b16 %v601, %v600
        %v626 = vpack.c.b16 %v603, %v602
        %v627 = vpack.c.b16 %v605, %v604
        %v628 = vpack.c.b16 %v607, %v606
        %v629 = vpack.c.b16 %v609, %v608
        %v630 = vpack.c.b16 %v611, %v610
        %v631 = vpack.c.b16 %v613, %v612
        %v632 = vpack.c.b16 %v615, %v614
        %v633 = vpack.c.b16 %v617, %v616
        %v638 = vunpack.c.l.b16 %v543
        %v639 = vunpack.c.l.b16 %v544
        %v640 = vunpack.c.l.b16 %v545
        %v641 = vunpack.c.l.b16 %v546
        %v642 = vpack.c.b16 %v639, %v638
        %v643 = vpack.c.b16 %v641, %v640
        %vm646 = vcmask 261120
        %v648 = vsel %vm646, %v618, 0
        %v651 = vsel %vm646, %v619, 0
        %v654 = vsel %vm646, %v620, 0
        %v657 = vsel %vm646, %v621, 0
        %v660 = vsel %vm646, %v622, 0
        %v663 = vsel %vm646, %v623, 0
        %v666 = vsel %vm646, %v624, 0
        %v669 = vsel %vm646, %v625, 0
        %v672 = vsel %vm646, %v626, 0
        %v675 = vsel %vm646, %v627, 0
        %v678 = vsel %vm646, %v628, 0
        %v681 = vsel %vm646, %v629, 0
        %v684 = vsel %vm646, %v630, 0
        %v687 = vsel %vm646, %v631, 0
        %v690 = vsel %vm646, %v632, 0
        %v693 = vsel %vm646, %v633, 0
        %695 = vmatprep.subr.bf16.mxu0 0
        %696 = vmatpush1.bf16.msra.mxu0 %v642
        %697 = vmatprep.subr.bf16.mxu0 0
        %698 = vmatpush1.bf16.msra.mxu0 %v643
        %699 = vmatprep.subr.bf16.mxu0 0
        %700 = vmatpush1.bf16.msra.mxu0 0
        %701 = vmatprep.subr.bf16.mxu0 0
        %702 = vmatpush1.bf16.msra.mxu0 0
        %703 = vmatprep.subr.bf16.mxu0 0
        %704 = vmatpush1.bf16.msra.mxu0 0
        %705 = vmatprep.subr.bf16.mxu0 0
        %706 = vmatpush1.bf16.msra.mxu0 0
        %707 = vmatprep.subr.bf16.mxu0 0
        %708 = vmatpush1.bf16.msra.mxu0 0
        %709 = vmatprep.subr.bf16.mxu0 0
        %710 = vmatpush1.bf16.msra.mxu0 0
        %711 = vmatprep.subr.bf16.mxu0 0
        %712 = vmatpush1.bf16.msra.mxu0 0
        %713 = vmatprep.subr.bf16.mxu0 0
        %714 = vmatpush1.bf16.msra.mxu0 0
        %715 = vmatprep.subr.bf16.mxu0 0
        %716 = vmatpush1.bf16.msra.mxu0 0
        %717 = vmatprep.subr.bf16.mxu0 0
        %718 = vmatpush1.bf16.msra.mxu0 0
        %719 = vmatprep.subr.bf16.mxu0 0
        %720 = vmatpush1.bf16.msra.mxu0 0
        %721 = vmatprep.subr.bf16.mxu0 0
        %722 = vmatpush1.bf16.msra.mxu0 0
        %723 = vmatprep.subr.bf16.mxu0 0
        %724 = vmatpush1.bf16.msra.mxu0 0
        %725 = vmatprep.subr.bf16.mxu0 0
        %726 = vmatpush1.bf16.msra.mxu0 0
        %727 = vmatprep.mubr.bf16.mxu0 0
        %728 = vmatmul.mubr.bf16.gmra.mrb[0].mxu0 %v648
        %v729 = vpop.f32.mrb[0].mxu0
        %v730 = vadd.f32 %v552, %v729
        %v731 = vpop.f32.mrb[0].mxu0
        %v732 = vpop.f32.mrb[0].mxu0
        %v733 = vadd.f32 %v552, %v732
        %v734 = vpop.f32.mrb[0].mxu0
        %735 = vmatprep.mubr.bf16.mxu0 0
        %736 = vmatmul.mubr.bf16.gmra.mrb[0].mxu0 %v651
        %v737 = vpop.f32.mrb[0].mxu0
        %v738 = vadd.f32 %v552, %v737
        %v739 = vpop.f32.mrb[0].mxu0
        %v740 = vpop.f32.mrb[0].mxu0
        %v741 = vadd.f32 %v552, %v740
        %v742 = vpop.f32.mrb[0].mxu0
        %743 = vmatprep.mubr.bf16.mxu0 0
        %744 = vmatmul.mubr.bf16.gmra.mrb[0].mxu0 %v654
        %v745 = vpop.f32.mrb[0].mxu0
        %v746 = vadd.f32 %v552, %v745
        %v747 = vpop.f32.mrb[0].mxu0
        %v748 = vpop.f32.mrb[0].mxu0
        %v749 = vadd.f32 %v552, %v748
        %v750 = vpop.f32.mrb[0].mxu0
        %751 = vmatprep.mubr.bf16.mxu0 0
        %752 = vmatmul.mubr.bf16.gmra.mrb[0].mxu0 %v657
        %v753 = vpop.f32.mrb[0].mxu0
        %v754 = vadd.f32 %v552, %v753
        %v755 = vpop.f32.mrb[0].mxu0
        %v756 = vpop.f32.mrb[0].mxu0
        %v757 = vadd.f32 %v552, %v756
        %v758 = vpop.f32.mrb[0].mxu0
        %759 = vmatprep.mubr.bf16.mxu0 0
        %760 = vmatmul.mubr.bf16.gmra.mrb[0].mxu0 %v660
        %v761 = vpop.f32.mrb[0].mxu0
        %v762 = vadd.f32 %v552, %v761
        %v763 = vpop.f32.mrb[0].mxu0
        %v764 = vpop.f32.mrb[0].mxu0
        %v765 = vadd.f32 %v552, %v764
        %v766 = vpop.f32.mrb[0].mxu0
        %767 = vmatprep.mubr.bf16.mxu0 0
        %768 = vmatmul.mubr.bf16.gmra.mrb[0].mxu0 %v663
        %v769 = vpop.f32.mrb[0].mxu0
        %v770 = vadd.f32 %v552, %v769
        %v771 = vpop.f32.mrb[0].mxu0
        %v772 = vpop.f32.mrb[0].mxu0
        %v773 = vadd.f32 %v552, %v772
        %v774 = vpop.f32.mrb[0].mxu0
        %775 = vmatprep.mubr.bf16.mxu0 0
        %776 = vmatmul.mubr.bf16.gmra.mrb[0].mxu0 %v666
        %v777 = vpop.f32.mrb[0].mxu0
        %v778 = vadd.f32 %v552, %v777
        %v779 = vpop.f32.mrb[0].mxu0
        %v780 = vpop.f32.mrb[0].mxu0
        %v781 = vadd.f32 %v552, %v780
        %v782 = vpop.f32.mrb[0].mxu0
        %783 = vmatprep.mubr.bf16.mxu0 0
        %784 = vmatmul.mubr.bf16.gmra.mrb[0].mxu0 %v669
        %v785 = vpop.f32.mrb[0].mxu0
        %v786 = vadd.f32 %v552, %v785
        %v787 = vpop.f32.mrb[0].mxu0
        %v788 = vpop.f32.mrb[0].mxu0
        %v789 = vadd.f32 %v552, %v788
        %v790 = vpop.f32.mrb[0].mxu0
        %791 = vmatprep.mubr.bf16.mxu0 0
        %792 = vmatmul.mubr.bf16.gmra.mrb[0].mxu0 %v672
        %v793 = vpop.f32.mrb[0].mxu0
        %v794 = vadd.f32 %v552, %v793
        %v795 = vpop.f32.mrb[0].mxu0
        %v796 = vpop.f32.mrb[0].mxu0
        %v797 = vadd.f32 %v552, %v796
        %v798 = vpop.f32.mrb[0].mxu0
        %799 = vmatprep.mubr.bf16.mxu0 0
        %800 = vmatmul.mubr.bf16.gmra.mrb[0].mxu0 %v675
        %v801 = vpop.f32.mrb[0].mxu0
        %v802 = vadd.f32 %v552, %v801
        %v803 = vpop.f32.mrb[0].mxu0
        %v804 = vpop.f32.mrb[0].mxu0
        %v805 = vadd.f32 %v552, %v804
        %v806 = vpop.f32.mrb[0].mxu0
        %807 = vmatprep.mubr.bf16.mxu0 0
        %808 = vmatmul.mubr.bf16.gmra.mrb[0].mxu0 %v678
        %v809 = vpop.f32.mrb[0].mxu0
        %v810 = vadd.f32 %v552, %v809
        %v811 = vpop.f32.mrb[0].mxu0
        %v812 = vpop.f32.mrb[0].mxu0
        %v813 = vadd.f32 %v552, %v812
        %v814 = vpop.f32.mrb[0].mxu0
        %815 = vmatprep.mubr.bf16.mxu0 0
        %816 = vmatmul.mubr.bf16.gmra.mrb[0].mxu0 %v681
        %v817 = vpop.f32.mrb[0].mxu0
        %v818 = vadd.f32 %v552, %v817
        %v819 = vpop.f32.mrb[0].mxu0
        %v820 = vpop.f32.mrb[0].mxu0
        %v821 = vadd.f32 %v552, %v820
        %v822 = vpop.f32.mrb[0].mxu0
        %823 = vmatprep.mubr.bf16.mxu0 0
        %824 = vmatmul.mubr.bf16.gmra.mrb[0].mxu0 %v684
        %v825 = vpop.f32.mrb[0].mxu0
        %v826 = vadd.f32 %v552, %v825
        %v827 = vpop.f32.mrb[0].mxu0
        %v828 = vpop.f32.mrb[0].mxu0
        %v829 = vadd.f32 %v552, %v828
        %v830 = vpop.f32.mrb[0].mxu0
        %831 = vmatprep.mubr.bf16.mxu0 0
        %832 = vmatmul.mubr.bf16.gmra.mrb[0].mxu0 %v687
        %v833 = vpop.f32.mrb[0].mxu0
        %v834 = vadd.f32 %v552, %v833
        %v835 = vpop.f32.mrb[0].mxu0
        %v836 = vpop.f32.mrb[0].mxu0
        %v837 = vadd.f32 %v552, %v836
        %v838 = vpop.f32.mrb[0].mxu0
        %839 = vmatprep.mubr.bf16.mxu0 0
        %840 = vmatmul.mubr.bf16.gmra.mrb[0].mxu0 %v690
        %v841 = vpop.f32.mrb[0].mxu0
        %v842 = vadd.f32 %v552, %v841
        %v843 = vpop.f32.mrb[0].mxu0
        %v844 = vpop.f32.mrb[0].mxu0
        %v845 = vadd.f32 %v552, %v844
        %v846 = vpop.f32.mrb[0].mxu0
        %847 = vmatprep.mubr.bf16.mxu0 0
        %848 = vmatmul.mubr.bf16.gmra.mrb[0].mxu0 %v693
        %v849 = vpop.f32.mrb[0].mxu0
        %v850 = vadd.f32 %v552, %v849
        %v851 = vpop.f32.mrb[0].mxu0
        %v852 = vpop.f32.mrb[0].mxu0
        %v853 = vadd.f32 %v552, %v852
        %v854 = vpop.f32.mrb[0].mxu0
        %855 = vdwg.mxu0
        %v856 = vmax.f32 %v730, 0.0
        %v857 = vmax.f32 %v733, 0.0
        %v858 = vmax.f32 %v738, 0.0
        %v859 = vmax.f32 %v741, 0.0
        %v860 = vmax.f32 %v746, 0.0
        %v861 = vmax.f32 %v749, 0.0
        %v862 = vmax.f32 %v754, 0.0
        %v863 = vmax.f32 %v757, 0.0
        %v864 = vmax.f32 %v762, 0.0
        %v865 = vmax.f32 %v765, 0.0
        %v866 = vmax.f32 %v770, 0.0
        %v867 = vmax.f32 %v773, 0.0
        %v868 = vmax.f32 %v778, 0.0
        %v869 = vmax.f32 %v781, 0.0
        %v870 = vmax.f32 %v786, 0.0
        %v871 = vmax.f32 %v789, 0.0
        %v872 = vmax.f32 %v794, 0.0
        %v873 = vmax.f32 %v797, 0.0
        %v874 = vmax.f32 %v802, 0.0
        %v875 = vmax.f32 %v805, 0.0
        %v876 = vmax.f32 %v810, 0.0
        %v877 = vmax.f32 %v813, 0.0
        %v878 = vmax.f32 %v818, 0.0
        %v879 = vmax.f32 %v821, 0.0
        %v880 = vmax.f32 %v826, 0.0
        %v881 = vmax.f32 %v829, 0.0
        %v882 = vmax.f32 %v834, 0.0
        %v883 = vmax.f32 %v837, 0.0
        %v884 = vmax.f32 %v842, 0.0
        %v885 = vmax.f32 %v845, 0.0
        %v886 = vmax.f32 %v850, 0.0
        %v887 = vmax.f32 %v853, 0.0
        %v888 = vld [vmem:[#allocation2] sm:$0x1]
        %v889 = vadd.f32 %v856, %v857
        %v890 = vadd.f32 %v889, %v858
        %v891 = vadd.f32 %v890, %v859
        %v892 = vadd.f32 %v891, %v860
        %v893 = vadd.f32 %v892, %v861
        %v894 = vadd.f32 %v893, %v862
        %v895 = vadd.f32 %v894, %v863
        %v896 = vadd.f32 %v895, %v864
        %v897 = vadd.f32 %v896, %v865
        %v898 = vadd.f32 %v897, %v866
        %v899 = vadd.f32 %v898, %v867
        %v900 = vadd.f32 %v899, %v868
        %v901 = vadd.f32 %v900, %v869
        %v902 = vadd.f32 %v901, %v870
        %v903 = vadd.f32 %v902, %v871
        %v904 = vadd.f32 %v903, %v872
        %v905 = vadd.f32 %v904, %v873
        %v906 = vadd.f32 %v905, %v874
        %v907 = vadd.f32 %v906, %v875
        %v908 = vadd.f32 %v907, %v876
        %v909 = vadd.f32 %v908, %v877
        %v910 = vadd.f32 %v909, %v878
        %v911 = vadd.f32 %v910, %v879
        %v912 = vadd.f32 %v911, %v880
        %v913 = vadd.f32 %v912, %v881
        %v914 = vadd.f32 %v913, %v882
        %v915 = vadd.f32 %v914, %v883
        %v916 = vadd.f32 %v915, %v884
        %v917 = vadd.f32 %v916, %v885
        %v918 = vadd.f32 %v917, %v886
        %v919 = vadd.f32 %v918, %v887
        %v920 = vrot.slane %v919, 4
        %v921 = vadd.f32 %v919, %v920
        %v922 = vrot.slane %v921, 2
        %v923 = vadd.f32 %v921, %v922
        %v924 = vrot.slane %v923, 1
        %v925 = vadd.f32 %v923, %v924
        %v926 = vadd.f32 %v888, %v925
        %927 = vst [vmem:[#allocation2] sm:$0x1] %v926
        // Predicated region
        $region85: #{my_model_forward.1} parent=71 // pred_check
          %p928 = pneg %p506
        $region86: #{my_model_forward.1} parent=71 // pred_check_branch
          %930 = sbr.rel (%p928) target = $region88
        $region87: #{my_model_forward.1} parent=71 // pred_region
          %v931 = vld [vmem:[#allocation2] sm:$0x1]
          %v932 = vmul.f32 %v931, 0.00390625
          %v933 = vpack.c.bf16 %v932, %v932
          %v934 = vld [vmem:[%s4] sm:$0xff]
          %v935 = vld [vmem:[%s4 + $0x8] sm:$0xff]
          %v936 = vld [vmem:[%s4 + $0x10] sm:$0xff]
          %v937 = vld [vmem:[%s4 + $0x18] sm:$0xff]
          %v938 = vld [vmem:[%s4 + $0x20] sm:$0xff]
          %v939 = vld [vmem:[%s4 + $0x28] sm:$0xff]
          %v940 = vld [vmem:[%s4 + $0x30] sm:$0xff]
          %v941 = vld [vmem:[%s4 + $0x38] sm:$0xff]
          %v942 = vld [vmem:[%s4 + $0x40] sm:$0xff]
          %v943 = vld [vmem:[%s4 + $0x48] sm:$0xff]
          %v944 = vld [vmem:[%s4 + $0x50] sm:$0xff]
          %v945 = vld [vmem:[%s4 + $0x58] sm:$0xff]
          %v946 = vld [vmem:[%s4 + $0x60] sm:$0xff]
          %v947 = vld [vmem:[%s4 + $0x68] sm:$0xff]
          %v948 = vld [vmem:[%s4 + $0x70] sm:$0xff]
          %v949 = vld [vmem:[%s4 + $0x78] sm:$0xff]
          %v950 = vld [vmem:[%s4 + $0x80] sm:$0xff]
          %v951 = vld [vmem:[%s4 + $0x88] sm:$0xff]
          %v952 = vld [vmem:[%s4 + $0x90] sm:$0xff]
          %v953 = vld [vmem:[%s4 + $0x98] sm:$0xff]
          %v954 = vld [vmem:[%s4 + $0xa0] sm:$0xff]
          %v955 = vld [vmem:[%s4 + $0xa8] sm:$0xff]
          %v956 = vld [vmem:[%s4 + $0xb0] sm:$0xff]
          %v957 = vld [vmem:[%s4 + $0xb8] sm:$0xff]
          %v958 = vld [vmem:[%s4 + $0xc0] sm:$0xff]
          %v959 = vld [vmem:[%s4 + $0xc8] sm:$0xff]
          %v960 = vld [vmem:[%s4 + $0xd0] sm:$0xff]
          %v961 = vld [vmem:[%s4 + $0xd8] sm:$0xff]
          %v962 = vld [vmem:[%s4 + $0xe0] sm:$0xff]
          %v963 = vld [vmem:[%s4 + $0xe8] sm:$0xff]
          %v964 = vld [vmem:[%s4 + $0xf0] sm:$0xff]
          %v965 = vld [vmem:[%s4 + $0xf8] sm:$0xff]
          %v966 = vld [vmem:[%s4 + $0x100] sm:$0xff]
          %v967 = vld [vmem:[%s4 + $0x108] sm:$0xff]
          %v968 = vld [vmem:[%s4 + $0x110] sm:$0xff]
          %v969 = vld [vmem:[%s4 + $0x118] sm:$0xff]
          %v970 = vld [vmem:[%s4 + $0x120] sm:$0xff]
          %v971 = vld [vmem:[%s4 + $0x128] sm:$0xff]
          %v972 = vld [vmem:[%s4 + $0x130] sm:$0xff]
          %v973 = vld [vmem:[%s4 + $0x138] sm:$0xff]
          %v974 = vld [vmem:[%s4 + $0x140] sm:$0xff]
          %v975 = vld [vmem:[%s4 + $0x148] sm:$0xff]
          %v976 = vld [vmem:[%s4 + $0x150] sm:$0xff]
          %v977 = vld [vmem:[%s4 + $0x158] sm:$0xff]
          %v978 = vld [vmem:[%s4 + $0x160] sm:$0xff]
          %v979 = vld [vmem:[%s4 + $0x168] sm:$0xff]
          %v980 = vld [vmem:[%s4 + $0x170] sm:$0xff]
          %v981 = vld [vmem:[%s4 + $0x178] sm:$0xff]
          %v982 = vld [vmem:[%s4 + $0x180] sm:$0xff]
          %v983 = vld [vmem:[%s4 + $0x188] sm:$0xff]
          %v984 = vld [vmem:[%s4 + $0x190] sm:$0xff]
          %v985 = vld [vmem:[%s4 + $0x198] sm:$0xff]
          %v986 = vld [vmem:[%s4 + $0x1a0] sm:$0xff]
          %v987 = vld [vmem:[%s4 + $0x1a8] sm:$0xff]
          %v988 = vld [vmem:[%s4 + $0x1b0] sm:$0xff]
          %v989 = vld [vmem:[%s4 + $0x1b8] sm:$0xff]
          %v990 = vld [vmem:[%s4 + $0x1c0] sm:$0xff]
          %v991 = vld [vmem:[%s4 + $0x1c8] sm:$0xff]
          %v992 = vld [vmem:[%s4 + $0x1d0] sm:$0xff]
          %v993 = vld [vmem:[%s4 + $0x1d8] sm:$0xff]
          %v994 = vld [vmem:[%s4 + $0x1e0] sm:$0xff]
          %v995 = vld [vmem:[%s4 + $0x1e8] sm:$0xff]
          %v996 = vld [vmem:[%s4 + $0x1f0] sm:$0xff]
          %v997 = vld [vmem:[%s4 + $0x1f8] sm:$0xff]
          %v998 = vld [vmem:[%s4 + $0x200] sm:$0xff]
          %v999 = vld [vmem:[%s4 + $0x208] sm:$0xff]
          %v1000 = vld [vmem:[%s4 + $0x210] sm:$0xff]
          %v1001 = vld [vmem:[%s4 + $0x218] sm:$0xff]
          %v1002 = vld [vmem:[%s4 + $0x220] sm:$0xff]
          %v1003 = vld [vmem:[%s4 + $0x228] sm:$0xff]
          %v1004 = vld [vmem:[%s4 + $0x230] sm:$0xff]
          %v1005 = vld [vmem:[%s4 + $0x238] sm:$0xff]
          %v1006 = vld [vmem:[%s4 + $0x240] sm:$0xff]
          %v1007 = vld [vmem:[%s4 + $0x248] sm:$0xff]
          %v1008 = vld [vmem:[%s4 + $0x250] sm:$0xff]
          %v1009 = vld [vmem:[%s4 + $0x258] sm:$0xff]
          %v1010 = vld [vmem:[%s4 + $0x260] sm:$0xff]
          %v1011 = vld [vmem:[%s4 + $0x268] sm:$0xff]
          %v1012 = vld [vmem:[%s4 + $0x270] sm:$0xff]
          %v1013 = vld [vmem:[%s4 + $0x278] sm:$0xff]
          %v1014 = vld [vmem:[%s4 + $0x280] sm:$0xff]
          %v1015 = vld [vmem:[%s4 + $0x288] sm:$0xff]
          %v1016 = vld [vmem:[%s4 + $0x290] sm:$0xff]
          %v1017 = vld [vmem:[%s4 + $0x298] sm:$0xff]
          %v1018 = vld [vmem:[%s4 + $0x2a0] sm:$0xff]
          %v1019 = vld [vmem:[%s4 + $0x2a8] sm:$0xff]
          %v1020 = vld [vmem:[%s4 + $0x2b0] sm:$0xff]
          %v1021 = vld [vmem:[%s4 + $0x2b8] sm:$0xff]
          %v1022 = vld [vmem:[%s4 + $0x2c0] sm:$0xff]
          %v1023 = vld [vmem:[%s4 + $0x2c8] sm:$0xff]
          %v1024 = vld [vmem:[%s4 + $0x2d0] sm:$0xff]
          %v1025 = vld [vmem:[%s4 + $0x2d8] sm:$0xff]
          %v1026 = vld [vmem:[%s4 + $0x2e0] sm:$0xff]
          %v1027 = vld [vmem:[%s4 + $0x2e8] sm:$0xff]
          %v1028 = vld [vmem:[%s4 + $0x2f0] sm:$0xff]
          %v1029 = vld [vmem:[%s4 + $0x2f8] sm:$0xff]
          %v1030 = vld [vmem:[%s4 + $0x300] sm:$0xff]
          %v1031 = vld [vmem:[%s4 + $0x308] sm:$0xff]
          %v1032 = vld [vmem:[%s4 + $0x310] sm:$0xff]
          %v1033 = vld [vmem:[%s4 + $0x318] sm:$0xff]
          %v1034 = vld [vmem:[%s4 + $0x320] sm:$0xff]
          %v1035 = vld [vmem:[%s4 + $0x328] sm:$0xff]
          %v1036 = vld [vmem:[%s4 + $0x330] sm:$0xff]
          %v1037 = vld [vmem:[%s4 + $0x338] sm:$0xff]
          %v1038 = vld [vmem:[%s4 + $0x340] sm:$0xff]
          %v1039 = vld [vmem:[%s4 + $0x348] sm:$0xff]
          %v1040 = vld [vmem:[%s4 + $0x350] sm:$0xff]
          %v1041 = vld [vmem:[%s4 + $0x358] sm:$0xff]
          %v1042 = vld [vmem:[%s4 + $0x360] sm:$0xff]
          %v1043 = vld [vmem:[%s4 + $0x368] sm:$0xff]
          %v1044 = vld [vmem:[%s4 + $0x370] sm:$0xff]
          %v1045 = vld [vmem:[%s4 + $0x378] sm:$0xff]
          %v1046 = vld [vmem:[%s4 + $0x380] sm:$0xff]
          %v1047 = vld [vmem:[%s4 + $0x388] sm:$0xff]
          %v1048 = vld [vmem:[%s4 + $0x390] sm:$0xff]
          %v1049 = vld [vmem:[%s4 + $0x398] sm:$0xff]
          %v1050 = vld [vmem:[%s4 + $0x3a0] sm:$0xff]
          %v1051 = vld [vmem:[%s4 + $0x3a8] sm:$0xff]
          %v1052 = vld [vmem:[%s4 + $0x3b0] sm:$0xff]
          %v1053 = vld [vmem:[%s4 + $0x3b8] sm:$0xff]
          %v1054 = vld [vmem:[%s4 + $0x3c0] sm:$0xff]
          %v1055 = vld [vmem:[%s4 + $0x3c8] sm:$0xff]
          %v1056 = vld [vmem:[%s4 + $0x3d0] sm:$0xff]
          %v1057 = vld [vmem:[%s4 + $0x3d8] sm:$0xff]
          %v1058 = vld [vmem:[%s4 + $0x3e0] sm:$0xff]
          %v1059 = vld [vmem:[%s4 + $0x3e8] sm:$0xff]
          %v1060 = vld [vmem:[%s4 + $0x3f0] sm:$0xff]
          %v1061 = vld [vmem:[%s4 + $0x3f8] sm:$0xff]
          %v1062 = vld [vmem:[#allocation3] sm:$0xff]
          %v1063 = vld [vmem:[#allocation3 + $0x8] sm:$0xff]
          %v1192 = vunpack.c.l.b16 %v934
          %v1193 = vunpack.c.h.b16 %v934
          %v1194 = vunpack.c.l.b16 %v935
          %v1195 = vunpack.c.h.b16 %v935
          %v1196 = vunpack.c.l.b16 %v936
          %v1197 = vunpack.c.h.b16 %v936
          %v1198 = vunpack.c.l.b16 %v937
          %v1199 = vunpack.c.h.b16 %v937
          %v1200 = vunpack.c.l.b16 %v938
          %v1201 = vunpack.c.h.b16 %v938
          %v1202 = vunpack.c.l.b16 %v939
          %v1203 = vunpack.c.h.b16 %v939
          %v1204 = vunpack.c.l.b16 %v940
          %v1205 = vunpack.c.h.b16 %v940
          %v1206 = vunpack.c.l.b16 %v941
          %v1207 = vunpack.c.h.b16 %v941
          %v1208 = vunpack.c.l.b16 %v942
          %v1209 = vunpack.c.h.b16 %v942
          %v1210 = vunpack.c.l.b16 %v943
          %v1211 = vunpack.c.h.b16 %v943
          %v1212 = vunpack.c.l.b16 %v944
          %v1213 = vunpack.c.h.b16 %v944
          %v1214 = vunpack.c.l.b16 %v945
          %v1215 = vunpack.c.h.b16 %v945
          %v1216 = vunpack.c.l.b16 %v946
          %v1217 = vunpack.c.h.b16 %v946
          %v1218 = vunpack.c.l.b16 %v947
          %v1219 = vunpack.c.h.b16 %v947
          %v1220 = vunpack.c.l.b16 %v948
          %v1221 = vunpack.c.h.b16 %v948
          %v1222 = vunpack.c.l.b16 %v949
          %v1223 = vunpack.c.h.b16 %v949
          %v1224 = vunpack.c.l.b16 %v950
          %v1225 = vunpack.c.h.b16 %v950
          %v1226 = vunpack.c.l.b16 %v951
          %v1227 = vunpack.c.h.b16 %v951
          %v1228 = vunpack.c.l.b16 %v952
          %v1229 = vunpack.c.h.b16 %v952
          %v1230 = vunpack.c.l.b16 %v953
          %v1231 = vunpack.c.h.b16 %v953
          %v1232 = vunpack.c.l.b16 %v954
          %v1233 = vunpack.c.h.b16 %v954
          %v1234 = vunpack.c.l.b16 %v955
          %v1235 = vunpack.c.h.b16 %v955
          %v1236 = vunpack.c.l.b16 %v956
          %v1237 = vunpack.c.h.b16 %v956
          %v1238 = vunpack.c.l.b16 %v957
          %v1239 = vunpack.c.h.b16 %v957
          %v1240 = vunpack.c.l.b16 %v958
          %v1241 = vunpack.c.h.b16 %v958
          %v1242 = vunpack.c.l.b16 %v959
          %v1243 = vunpack.c.h.b16 %v959
          %v1244 = vunpack.c.l.b16 %v960
          %v1245 = vunpack.c.h.b16 %v960
          %v1246 = vunpack.c.l.b16 %v961
          %v1247 = vunpack.c.h.b16 %v961
          %v1248 = vunpack.c.l.b16 %v962
          %v1249 = vunpack.c.h.b16 %v962
          %v1250 = vunpack.c.l.b16 %v963
          %v1251 = vunpack.c.h.b16 %v963
          %v1252 = vunpack.c.l.b16 %v964
          %v1253 = vunpack.c.h.b16 %v964
          %v1254 = vunpack.c.l.b16 %v965
          %v1255 = vunpack.c.h.b16 %v965
          %v1256 = vunpack.c.l.b16 %v966
          %v1257 = vunpack.c.h.b16 %v966
          %v1258 = vunpack.c.l.b16 %v967
          %v1259 = vunpack.c.h.b16 %v967
          %v1260 = vunpack.c.l.b16 %v968
          %v1261 = vunpack.c.h.b16 %v968
          %v1262 = vunpack.c.l.b16 %v969
          %v1263 = vunpack.c.h.b16 %v969
          %v1264 = vunpack.c.l.b16 %v970
          %v1265 = vunpack.c.h.b16 %v970
          %v1266 = vunpack.c.l.b16 %v971
          %v1267 = vunpack.c.h.b16 %v971
          %v1268 = vunpack.c.l.b16 %v972
          %v1269 = vunpack.c.h.b16 %v972
          %v1270 = vunpack.c.l.b16 %v973
          %v1271 = vunpack.c.h.b16 %v973
          %v1272 = vunpack.c.l.b16 %v974
          %v1273 = vunpack.c.h.b16 %v974
          %v1274 = vunpack.c.l.b16 %v975
          %v1275 = vunpack.c.h.b16 %v975
          %v1276 = vunpack.c.l.b16 %v976
          %v1277 = vunpack.c.h.b16 %v976
          %v1278 = vunpack.c.l.b16 %v977
          %v1279 = vunpack.c.h.b16 %v977
          %v1280 = vunpack.c.l.b16 %v978
          %v1281 = vunpack.c.h.b16 %v978
          %v1282 = vunpack.c.l.b16 %v979
          %v1283 = vunpack.c.h.b16 %v979
          %v1284 = vunpack.c.l.b16 %v980
          %v1285 = vunpack.c.h.b16 %v980
          %v1286 = vunpack.c.l.b16 %v981
          %v1287 = vunpack.c.h.b16 %v981
          %v1288 = vunpack.c.l.b16 %v982
          %v1289 = vunpack.c.h.b16 %v982
          %v1290 = vunpack.c.l.b16 %v983
          %v1291 = vunpack.c.h.b16 %v983
          %v1292 = vunpack.c.l.b16 %v984
          %v1293 = vunpack.c.h.b16 %v984
          %v1294 = vunpack.c.l.b16 %v985
          %v1295 = vunpack.c.h.b16 %v985
          %v1296 = vunpack.c.l.b16 %v986
          %v1297 = vunpack.c.h.b16 %v986
          %v1298 = vunpack.c.l.b16 %v987
          %v1299 = vunpack.c.h.b16 %v987
          %v1300 = vunpack.c.l.b16 %v988
          %v1301 = vunpack.c.h.b16 %v988
          %v1302 = vunpack.c.l.b16 %v989
          %v1303 = vunpack.c.h.b16 %v989
          %v1304 = vunpack.c.l.b16 %v990
          %v1305 = vunpack.c.h.b16 %v990
          %v1306 = vunpack.c.l.b16 %v991
          %v1307 = vunpack.c.h.b16 %v991
          %v1308 = vunpack.c.l.b16 %v992
          %v1309 = vunpack.c.h.b16 %v992
          %v1310 = vunpack.c.l.b16 %v993
          %v1311 = vunpack.c.h.b16 %v993
          %v1312 = vunpack.c.l.b16 %v994
          %v1313 = vunpack.c.h.b16 %v994
          %v1314 = vunpack.c.l.b16 %v995
          %v1315 = vunpack.c.h.b16 %v995
          %v1316 = vunpack.c.l.b16 %v996
          %v1317 = vunpack.c.h.b16 %v996
          %v1318 = vunpack.c.l.b16 %v997
          %v1319 = vunpack.c.h.b16 %v997
          %v1320 = vunpack.c.l.b16 %v998
          %v1321 = vunpack.c.h.b16 %v998
          %v1322 = vunpack.c.l.b16 %v999
          %v1323 = vunpack.c.h.b16 %v999
          %v1324 = vunpack.c.l.b16 %v1000
          %v1325 = vunpack.c.h.b16 %v1000
          %v1326 = vunpack.c.l.b16 %v1001
          %v1327 = vunpack.c.h.b16 %v1001
          %v1328 = vunpack.c.l.b16 %v1002
          %v1329 = vunpack.c.h.b16 %v1002
          %v1330 = vunpack.c.l.b16 %v1003
          %v1331 = vunpack.c.h.b16 %v1003
          %v1332 = vunpack.c.l.b16 %v1004
          %v1333 = vunpack.c.h.b16 %v1004
          %v1334 = vunpack.c.l.b16 %v1005
          %v1335 = vunpack.c.h.b16 %v1005
          %v1336 = vunpack.c.l.b16 %v1006
          %v1337 = vunpack.c.h.b16 %v1006
          %v1338 = vunpack.c.l.b16 %v1007
          %v1339 = vunpack.c.h.b16 %v1007
          %v1340 = vunpack.c.l.b16 %v1008
          %v1341 = vunpack.c.h.b16 %v1008
          %v1342 = vunpack.c.l.b16 %v1009
          %v1343 = vunpack.c.h.b16 %v1009
          %v1344 = vunpack.c.l.b16 %v1010
          %v1345 = vunpack.c.h.b16 %v1010
          %v1346 = vunpack.c.l.b16 %v1011
          %v1347 = vunpack.c.h.b16 %v1011
          %v1348 = vunpack.c.l.b16 %v1012
          %v1349 = vunpack.c.h.b16 %v1012
          %v1350 = vunpack.c.l.b16 %v1013
          %v1351 = vunpack.c.h.b16 %v1013
          %v1352 = vunpack.c.l.b16 %v1014
          %v1353 = vunpack.c.h.b16 %v1014
          %v1354 = vunpack.c.l.b16 %v1015
          %v1355 = vunpack.c.h.b16 %v1015
          %v1356 = vunpack.c.l.b16 %v1016
          %v1357 = vunpack.c.h.b16 %v1016
          %v1358 = vunpack.c.l.b16 %v1017
          %v1359 = vunpack.c.h.b16 %v1017
          %v1360 = vunpack.c.l.b16 %v1018
          %v1361 = vunpack.c.h.b16 %v1018
          %v1362 = vunpack.c.l.b16 %v1019
          %v1363 = vunpack.c.h.b16 %v1019
          %v1364 = vunpack.c.l.b16 %v1020
          %v1365 = vunpack.c.h.b16 %v1020
          %v1366 = vunpack.c.l.b16 %v1021
          %v1367 = vunpack.c.h.b16 %v1021
          %v1368 = vunpack.c.l.b16 %v1022
          %v1369 = vunpack.c.h.b16 %v1022
          %v1370 = vunpack.c.l.b16 %v1023
          %v1371 = vunpack.c.h.b16 %v1023
          %v1372 = vunpack.c.l.b16 %v1024
          %v1373 = vunpack.c.h.b16 %v1024
          %v1374 = vunpack.c.l.b16 %v1025
          %v1375 = vunpack.c.h.b16 %v1025
          %v1376 = vunpack.c.l.b16 %v1026
          %v1377 = vunpack.c.h.b16 %v1026
          %v1378 = vunpack.c.l.b16 %v1027
          %v1379 = vunpack.c.h.b16 %v1027
          %v1380 = vunpack.c.l.b16 %v1028
          %v1381 = vunpack.c.h.b16 %v1028
          %v1382 = vunpack.c.l.b16 %v1029
          %v1383 = vunpack.c.h.b16 %v1029
          %v1384 = vunpack.c.l.b16 %v1030
          %v1385 = vunpack.c.h.b16 %v1030
          %v1386 = vunpack.c.l.b16 %v1031
          %v1387 = vunpack.c.h.b16 %v1031
          %v1388 = vunpack.c.l.b16 %v1032
          %v1389 = vunpack.c.h.b16 %v1032
          %v1390 = vunpack.c.l.b16 %v1033
          %v1391 = vunpack.c.h.b16 %v1033
          %v1392 = vunpack.c.l.b16 %v1034
          %v1393 = vunpack.c.h.b16 %v1034
          %v1394 = vunpack.c.l.b16 %v1035
          %v1395 = vunpack.c.h.b16 %v1035
          %v1396 = vunpack.c.l.b16 %v1036
          %v1397 = vunpack.c.h.b16 %v1036
          %v1398 = vunpack.c.l.b16 %v1037
          %v1399 = vunpack.c.h.b16 %v1037
          %v1400 = vunpack.c.l.b16 %v1038
          %v1401 = vunpack.c.h.b16 %v1038
          %v1402 = vunpack.c.l.b16 %v1039
          %v1403 = vunpack.c.h.b16 %v1039
          %v1404 = vunpack.c.l.b16 %v1040
          %v1405 = vunpack.c.h.b16 %v1040
          %v1406 = vunpack.c.l.b16 %v1041
          %v1407 = vunpack.c.h.b16 %v1041
          %v1408 = vunpack.c.l.b16 %v1042
          %v1409 = vunpack.c.h.b16 %v1042
          %v1410 = vunpack.c.l.b16 %v1043
          %v1411 = vunpack.c.h.b16 %v1043
          %v1412 = vunpack.c.l.b16 %v1044
          %v1413 = vunpack.c.h.b16 %v1044
          %v1414 = vunpack.c.l.b16 %v1045
          %v1415 = vunpack.c.h.b16 %v1045
          %v1416 = vunpack.c.l.b16 %v1046
          %v1417 = vunpack.c.h.b16 %v1046
          %v1418 = vunpack.c.l.b16 %v1047
          %v1419 = vunpack.c.h.b16 %v1047
          %v1420 = vunpack.c.l.b16 %v1048
          %v1421 = vunpack.c.h.b16 %v1048
          %v1422 = vunpack.c.l.b16 %v1049
          %v1423 = vunpack.c.h.b16 %v1049
          %v1424 = vunpack.c.l.b16 %v1050
          %v1425 = vunpack.c.h.b16 %v1050
          %v1426 = vunpack.c.l.b16 %v1051
          %v1427 = vunpack.c.h.b16 %v1051
          %v1428 = vunpack.c.l.b16 %v1052
          %v1429 = vunpack.c.h.b16 %v1052
          %v1430 = vunpack.c.l.b16 %v1053
          %v1431 = vunpack.c.h.b16 %v1053
          %v1432 = vunpack.c.l.b16 %v1054
          %v1433 = vunpack.c.h.b16 %v1054
          %v1434 = vunpack.c.l.b16 %v1055
          %v1435 = vunpack.c.h.b16 %v1055
          %v1436 = vunpack.c.l.b16 %v1056
          %v1437 = vunpack.c.h.b16 %v1056
          %v1438 = vunpack.c.l.b16 %v1057
          %v1439 = vunpack.c.h.b16 %v1057
          %v1440 = vunpack.c.l.b16 %v1058
          %v1441 = vunpack.c.h.b16 %v1058
          %v1442 = vunpack.c.l.b16 %v1059
          %v1443 = vunpack.c.h.b16 %v1059
          %v1444 = vunpack.c.l.b16 %v1060
          %v1445 = vunpack.c.h.b16 %v1060
          %v1446 = vunpack.c.l.b16 %v1061
          %v1447 = vunpack.c.h.b16 %v1061
          %v1448 = vpack.c.b16 %v1208, %v1192
          %v1449 = vpack.c.b16 %v1209, %v1193
          %v1450 = vpack.c.b16 %v1210, %v1194
          %v1451 = vpack.c.b16 %v1211, %v1195
          %v1452 = vpack.c.b16 %v1212, %v1196
          %v1453 = vpack.c.b16 %v1213, %v1197
          %v1454 = vpack.c.b16 %v1214, %v1198
          %v1455 = vpack.c.b16 %v1215, %v1199
          %v1456 = vpack.c.b16 %v1216, %v1200
          %v1457 = vpack.c.b16 %v1217, %v1201
          %v1458 = vpack.c.b16 %v1218, %v1202
          %v1459 = vpack.c.b16 %v1219, %v1203
          %v1460 = vpack.c.b16 %v1220, %v1204
          %v1461 = vpack.c.b16 %v1221, %v1205
          %v1462 = vpack.c.b16 %v1222, %v1206
          %v1463 = vpack.c.b16 %v1223, %v1207
          %v1464 = vpack.c.b16 %v1240, %v1224
          %v1465 = vpack.c.b16 %v1241, %v1225
          %v1466 = vpack.c.b16 %v1242, %v1226
          %v1467 = vpack.c.b16 %v1243, %v1227
          %v1468 = vpack.c.b16 %v1244, %v1228
          %v1469 = vpack.c.b16 %v1245, %v1229
          %v1470 = vpack.c.b16 %v1246, %v1230
          %v1471 = vpack.c.b16 %v1247, %v1231
          %v1472 = vpack.c.b16 %v1248, %v1232
          %v1473 = vpack.c.b16 %v1249, %v1233
          %v1474 = vpack.c.b16 %v1250, %v1234
          %v1475 = vpack.c.b16 %v1251, %v1235
          %v1476 = vpack.c.b16 %v1252, %v1236
          %v1477 = vpack.c.b16 %v1253, %v1237
          %v1478 = vpack.c.b16 %v1254, %v1238
          %v1479 = vpack.c.b16 %v1255, %v1239
          %v1480 = vpack.c.b16 %v1272, %v1256
          %v1481 = vpack.c.b16 %v1273, %v1257
          %v1482 = vpack.c.b16 %v1274, %v1258
          %v1483 = vpack.c.b16 %v1275, %v1259
          %v1484 = vpack.c.b16 %v1276, %v1260
          %v1485 = vpack.c.b16 %v1277, %v1261
          %v1486 = vpack.c.b16 %v1278, %v1262
          %v1487 = vpack.c.b16 %v1279, %v1263
          %v1488 = vpack.c.b16 %v1280, %v1264
          %v1489 = vpack.c.b16 %v1281, %v1265
          %v1490 = vpack.c.b16 %v1282, %v1266
          %v1491 = vpack.c.b16 %v1283, %v1267
          %v1492 = vpack.c.b16 %v1284, %v1268
          %v1493 = vpack.c.b16 %v1285, %v1269
          %v1494 = vpack.c.b16 %v1286, %v1270
          %v1495 = vpack.c.b16 %v1287, %v1271
          %v1496 = vpack.c.b16 %v1304, %v1288
          %v1497 = vpack.c.b16 %v1305, %v1289
          %v1498 = vpack.c.b16 %v1306, %v1290
          %v1499 = vpack.c.b16 %v1307, %v1291
          %v1500 = vpack.c.b16 %v1308, %v1292
          %v1501 = vpack.c.b16 %v1309, %v1293
          %v1502 = vpack.c.b16 %v1310, %v1294
          %v1503 = vpack.c.b16 %v1311, %v1295
          %v1504 = vpack.c.b16 %v1312, %v1296
          %v1505 = vpack.c.b16 %v1313, %v1297
          %v1506 = vpack.c.b16 %v1314, %v1298
          %v1507 = vpack.c.b16 %v1315, %v1299
          %v1508 = vpack.c.b16 %v1316, %v1300
          %v1509 = vpack.c.b16 %v1317, %v1301
          %v1510 = vpack.c.b16 %v1318, %v1302
          %v1511 = vpack.c.b16 %v1319, %v1303
          %v1512 = vpack.c.b16 %v1336, %v1320
          %v1513 = vpack.c.b16 %v1337, %v1321
          %v1514 = vpack.c.b16 %v1338, %v1322
          %v1515 = vpack.c.b16 %v1339, %v1323
          %v1516 = vpack.c.b16 %v1340, %v1324
          %v1517 = vpack.c.b16 %v1341, %v1325
          %v1518 = vpack.c.b16 %v1342, %v1326
          %v1519 = vpack.c.b16 %v1343, %v1327
          %v1520 = vpack.c.b16 %v1344, %v1328
          %v1521 = vpack.c.b16 %v1345, %v1329
          %v1522 = vpack.c.b16 %v1346, %v1330
          %v1523 = vpack.c.b16 %v1347, %v1331
          %v1524 = vpack.c.b16 %v1348, %v1332
          %v1525 = vpack.c.b16 %v1349, %v1333
          %v1526 = vpack.c.b16 %v1350, %v1334
          %v1527 = vpack.c.b16 %v1351, %v1335
          %v1528 = vpack.c.b16 %v1368, %v1352
          %v1529 = vpack.c.b16 %v1369, %v1353
          %v1530 = vpack.c.b16 %v1370, %v1354
          %v1531 = vpack.c.b16 %v1371, %v1355
          %v1532 = vpack.c.b16 %v1372, %v1356
          %v1533 = vpack.c.b16 %v1373, %v1357
          %v1534 = vpack.c.b16 %v1374, %v1358
          %v1535 = vpack.c.b16 %v1375, %v1359
          %v1536 = vpack.c.b16 %v1376, %v1360
          %v1537 = vpack.c.b16 %v1377, %v1361
          %v1538 = vpack.c.b16 %v1378, %v1362
          %v1539 = vpack.c.b16 %v1379, %v1363
          %v1540 = vpack.c.b16 %v1380, %v1364
          %v1541 = vpack.c.b16 %v1381, %v1365
          %v1542 = vpack.c.b16 %v1382, %v1366
          %v1543 = vpack.c.b16 %v1383, %v1367
          %v1544 = vpack.c.b16 %v1400, %v1384
          %v1545 = vpack.c.b16 %v1401, %v1385
          %v1546 = vpack.c.b16 %v1402, %v1386
          %v1547 = vpack.c.b16 %v1403, %v1387
          %v1548 = vpack.c.b16 %v1404, %v1388
          %v1549 = vpack.c.b16 %v1405, %v1389
          %v1550 = vpack.c.b16 %v1406, %v1390
          %v1551 = vpack.c.b16 %v1407, %v1391
          %v1552 = vpack.c.b16 %v1408, %v1392
          %v1553 = vpack.c.b16 %v1409, %v1393
          %v1554 = vpack.c.b16 %v1410, %v1394
          %v1555 = vpack.c.b16 %v1411, %v1395
          %v1556 = vpack.c.b16 %v1412, %v1396
          %v1557 = vpack.c.b16 %v1413, %v1397
          %v1558 = vpack.c.b16 %v1414, %v1398
          %v1559 = vpack.c.b16 %v1415, %v1399
          %v1560 = vpack.c.b16 %v1432, %v1416
          %v1561 = vpack.c.b16 %v1433, %v1417
          %v1562 = vpack.c.b16 %v1434, %v1418
          %v1563 = vpack.c.b16 %v1435, %v1419
          %v1564 = vpack.c.b16 %v1436, %v1420
          %v1565 = vpack.c.b16 %v1437, %v1421
          %v1566 = vpack.c.b16 %v1438, %v1422
          %v1567 = vpack.c.b16 %v1439, %v1423
          %v1568 = vpack.c.b16 %v1440, %v1424
          %v1569 = vpack.c.b16 %v1441, %v1425
          %v1570 = vpack.c.b16 %v1442, %v1426
          %v1571 = vpack.c.b16 %v1443, %v1427
          %v1572 = vpack.c.b16 %v1444, %v1428
          %v1573 = vpack.c.b16 %v1445, %v1429
          %v1574 = vpack.c.b16 %v1446, %v1430
          %v1575 = vpack.c.b16 %v1447, %v1431
          %v1706 = vlaneseq
          %v1707 = vshrl.u32 %v1706, 7
          %v1708 = vsub.s32 0, %v1707
          %v1709 = vrot.slane %v1062, %v1708
          %v1710 = vlaneseq
          %v1711 = vshrl.u32 %v1710, 7
          %v1712 = vsub.s32 1, %v1711
          %v1713 = vrot.slane %v1062, %v1712
          %v1714 = vlaneseq
          %v1715 = vshrl.u32 %v1714, 7
          %v1716 = vsub.s32 2, %v1715
          %v1717 = vrot.slane %v1062, %v1716
          %v1718 = vlaneseq
          %v1719 = vshrl.u32 %v1718, 7
          %v1720 = vsub.s32 3, %v1719
          %v1721 = vrot.slane %v1062, %v1720
          %v1722 = vlaneseq
          %v1723 = vshrl.u32 %v1722, 7
          %v1724 = vsub.s32 4, %v1723
          %v1725 = vrot.slane %v1062, %v1724
          %v1726 = vlaneseq
          %v1727 = vshrl.u32 %v1726, 7
          %v1728 = vsub.s32 5, %v1727
          %v1729 = vrot.slane %v1062, %v1728
          %v1730 = vlaneseq
          %v1731 = vshrl.u32 %v1730, 7
          %v1732 = vsub.s32 6, %v1731
          %v1733 = vrot.slane %v1062, %v1732
          %v1734 = vlaneseq
          %v1735 = vshrl.u32 %v1734, 7
          %v1736 = vsub.s32 7, %v1735
          %v1737 = vrot.slane %v1062, %v1736
          %v1738 = vlaneseq
          %v1739 = vshrl.u32 %v1738, 7
          %v1740 = vsub.s32 0, %v1739
          %v1741 = vrot.slane %v1063, %v1740
          %v1742 = vlaneseq
          %v1743 = vshrl.u32 %v1742, 7
          %v1744 = vsub.s32 1, %v1743
          %v1745 = vrot.slane %v1063, %v1744
          %v1746 = vlaneseq
          %v1747 = vshrl.u32 %v1746, 7
          %v1748 = vsub.s32 2, %v1747
          %v1749 = vrot.slane %v1063, %v1748
          %v1750 = vlaneseq
          %v1751 = vshrl.u32 %v1750, 7
          %v1752 = vsub.s32 3, %v1751
          %v1753 = vrot.slane %v1063, %v1752
          %v1754 = vlaneseq
          %v1755 = vshrl.u32 %v1754, 7
          %v1756 = vsub.s32 4, %v1755
          %v1757 = vrot.slane %v1063, %v1756
          %v1758 = vlaneseq
          %v1759 = vshrl.u32 %v1758, 7
          %v1760 = vsub.s32 5, %v1759
          %v1761 = vrot.slane %v1063, %v1760
          %v1762 = vlaneseq
          %v1763 = vshrl.u32 %v1762, 7
          %v1764 = vsub.s32 6, %v1763
          %v1765 = vrot.slane %v1063, %v1764
          %v1766 = vlaneseq
          %v1767 = vshrl.u32 %v1766, 7
          %v1768 = vsub.s32 7, %v1767
          %v1769 = vrot.slane %v1063, %v1768
          %1786 = vmatprep.subr.bf16.mxu0 %v1449
          %1787 = vmatpush1.bf16.msra.mxu0 %v1448
          %1788 = vmatprep.subr.bf16.mxu0 %v1465
          %1789 = vmatpush1.bf16.msra.mxu0 %v1464
          %1790 = vmatprep.subr.bf16.mxu0 %v1481
          %1791 = vmatpush1.bf16.msra.mxu0 %v1480
          %1792 = vmatprep.subr.bf16.mxu0 %v1497
          %1793 = vmatpush1.bf16.msra.mxu0 %v1496
          %1794 = vmatprep.subr.bf16.mxu0 %v1513
          %1795 = vmatpush1.bf16.msra.mxu0 %v1512
          %1796 = vmatprep.subr.bf16.mxu0 %v1529
          %1797 = vmatpush1.bf16.msra.mxu0 %v1528
          %1798 = vmatprep.subr.bf16.mxu0 %v1545
          %1799 = vmatpush1.bf16.msra.mxu0 %v1544
          %1800 = vmatprep.subr.bf16.mxu0 %v1561
          %1801 = vmatpush1.bf16.msra.mxu0 %v1560
          %1802 = vmatprep.subr.bf16.mxu0 0
          %1803 = vmatpush1.bf16.msra.mxu0 0
          %1804 = vmatprep.subr.bf16.mxu0 0
          %1805 = vmatpush1.bf16.msra.mxu0 0
          %1806 = vmatprep.subr.bf16.mxu0 0
          %1807 = vmatpush1.bf16.msra.mxu0 0
          %1808 = vmatprep.subr.bf16.mxu0 0
          %1809 = vmatpush1.bf16.msra.mxu0 0
          %1810 = vmatprep.subr.bf16.mxu0 0
          %1811 = vmatpush1.bf16.msra.mxu0 0
          %1812 = vmatprep.subr.bf16.mxu0 0
          %1813 = vmatpush1.bf16.msra.mxu0 0
          %1814 = vmatprep.subr.bf16.mxu0 0
          %1815 = vmatpush1.bf16.msra.mxu0 0
          %1816 = vmatprep.subr.bf16.mxu0 0
          %1817 = vmatpush1.bf16.msra.mxu0 0
          %1818 = vmatprep.mubr.bf16.mxu0 0
          %1819 = vmatmul.mubr.bf16.gmra.mrb[0].mxu0 %v933
          %v1820 = vpop.f32.mrb[0].mxu0
          %v1821 = vadd.f32 %v1709, %v1820
          %v1822 = vpop.f32.mrb[0].mxu0
          %v1823 = vadd.f32 %v1713, %v1822
          %v1824 = vpop.f32.mrb[0].mxu0
          %v1825 = vpop.f32.mrb[0].mxu0
          %1826 = vdwg.mxu0
          %1827 = vmatprep.subr.bf16.mxu0 %v1451
          %1828 = vmatpush1.bf16.msra.mxu0 %v1450
          %1829 = vmatprep.subr.bf16.mxu0 %v1467
          %1830 = vmatpush1.bf16.msra.mxu0 %v1466
          %1831 = vmatprep.subr.bf16.mxu0 %v1483
          %1832 = vmatpush1.bf16.msra.mxu0 %v1482
          %1833 = vmatprep.subr.bf16.mxu0 %v1499
          %1834 = vmatpush1.bf16.msra.mxu0 %v1498
          %1835 = vmatprep.subr.bf16.mxu0 %v1515
          %1836 = vmatpush1.bf16.msra.mxu0 %v1514
          %1837 = vmatprep.subr.bf16.mxu0 %v1531
          %1838 = vmatpush1.bf16.msra.mxu0 %v1530
          %1839 = vmatprep.subr.bf16.mxu0 %v1547
          %1840 = vmatpush1.bf16.msra.mxu0 %v1546
          %1841 = vmatprep.subr.bf16.mxu0 %v1563
          %1842 = vmatpush1.bf16.msra.mxu0 %v1562
          %1843 = vmatprep.subr.bf16.mxu0 0
          %1844 = vmatpush1.bf16.msra.mxu0 0
          %1845 = vmatprep.subr.bf16.mxu0 0
          %1846 = vmatpush1.bf16.msra.mxu0 0
          %1847 = vmatprep.subr.bf16.mxu0 0
          %1848 = vmatpush1.bf16.msra.mxu0 0
          %1849 = vmatprep.subr.bf16.mxu0 0
          %1850 = vmatpush1.bf16.msra.mxu0 0
          %1851 = vmatprep.subr.bf16.mxu0 0
          %1852 = vmatpush1.bf16.msra.mxu0 0
          %1853 = vmatprep.subr.bf16.mxu0 0
          %1854 = vmatpush1.bf16.msra.mxu0 0
          %1855 = vmatprep.subr.bf16.mxu0 0
          %1856 = vmatpush1.bf16.msra.mxu0 0
          %1857 = vmatprep.subr.bf16.mxu0 0
          %1858 = vmatpush1.bf16.msra.mxu0 0
          %1859 = vmatprep.mubr.bf16.mxu0 0
          %1860 = vmatmul.mubr.bf16.gmra.mrb[0].mxu0 %v933
          %v1861 = vpop.f32.mrb[0].mxu0
          %v1862 = vadd.f32 %v1717, %v1861
          %v1863 = vpop.f32.mrb[0].mxu0
          %v1864 = vadd.f32 %v1721, %v1863
          %v1865 = vpop.f32.mrb[0].mxu0
          %v1866 = vpop.f32.mrb[0].mxu0
          %1867 = vdwg.mxu0
          %1868 = vmatprep.subr.bf16.mxu0 %v1453
          %1869 = vmatpush1.bf16.msra.mxu0 %v1452
          %1870 = vmatprep.subr.bf16.mxu0 %v1469
          %1871 = vmatpush1.bf16.msra.mxu0 %v1468
          %1872 = vmatprep.subr.bf16.mxu0 %v1485
          %1873 = vmatpush1.bf16.msra.mxu0 %v1484
          %1874 = vmatprep.subr.bf16.mxu0 %v1501
          %1875 = vmatpush1.bf16.msra.mxu0 %v1500
          %1876 = vmatprep.subr.bf16.mxu0 %v1517
          %1877 = vmatpush1.bf16.msra.mxu0 %v1516
          %1878 = vmatprep.subr.bf16.mxu0 %v1533
          %1879 = vmatpush1.bf16.msra.mxu0 %v1532
          %1880 = vmatprep.subr.bf16.mxu0 %v1549
          %1881 = vmatpush1.bf16.msra.mxu0 %v1548
          %1882 = vmatprep.subr.bf16.mxu0 %v1565
          %1883 = vmatpush1.bf16.msra.mxu0 %v1564
          %1884 = vmatprep.subr.bf16.mxu0 0
          %1885 = vmatpush1.bf16.msra.mxu0 0
          %1886 = vmatprep.subr.bf16.mxu0 0
          %1887 = vmatpush1.bf16.msra.mxu0 0
          %1888 = vmatprep.subr.bf16.mxu0 0
          %1889 = vmatpush1.bf16.msra.mxu0 0
          %1890 = vmatprep.subr.bf16.mxu0 0
          %1891 = vmatpush1.bf16.msra.mxu0 0
          %1892 = vmatprep.subr.bf16.mxu0 0
          %1893 = vmatpush1.bf16.msra.mxu0 0
          %1894 = vmatprep.subr.bf16.mxu0 0
          %1895 = vmatpush1.bf16.msra.mxu0 0
          %1896 = vmatprep.subr.bf16.mxu0 0
          %1897 = vmatpush1.bf16.msra.mxu0 0
          %1898 = vmatprep.subr.bf16.mxu0 0
          %1899 = vmatpush1.bf16.msra.mxu0 0
          %1900 = vmatprep.mubr.bf16.mxu0 0
          %1901 = vmatmul.mubr.bf16.gmra.mrb[0].mxu0 %v933
          %v1902 = vpop.f32.mrb[0].mxu0
          %v1903 = vadd.f32 %v1725, %v1902
          %v1904 = vpop.f32.mrb[0].mxu0
          %v1905 = vadd.f32 %v1729, %v1904
          %v1906 = vpop.f32.mrb[0].mxu0
          %v1907 = vpop.f32.mrb[0].mxu0
          %1908 = vdwg.mxu0
          %1909 = vmatprep.subr.bf16.mxu0 %v1455
          %1910 = vmatpush1.bf16.msra.mxu0 %v1454
          %1911 = vmatprep.subr.bf16.mxu0 %v1471
          %1912 = vmatpush1.bf16.msra.mxu0 %v1470
          %1913 = vmatprep.subr.bf16.mxu0 %v1487
          %1914 = vmatpush1.bf16.msra.mxu0 %v1486
          %1915 = vmatprep.subr.bf16.mxu0 %v1503
          %1916 = vmatpush1.bf16.msra.mxu0 %v1502
          %1917 = vmatprep.subr.bf16.mxu0 %v1519
          %1918 = vmatpush1.bf16.msra.mxu0 %v1518
          %1919 = vmatprep.subr.bf16.mxu0 %v1535
          %1920 = vmatpush1.bf16.msra.mxu0 %v1534
          %1921 = vmatprep.subr.bf16.mxu0 %v1551
          %1922 = vmatpush1.bf16.msra.mxu0 %v1550
          %1923 = vmatprep.subr.bf16.mxu0 %v1567
          %1924 = vmatpush1.bf16.msra.mxu0 %v1566
          %1925 = vmatprep.subr.bf16.mxu0 0
          %1926 = vmatpush1.bf16.msra.mxu0 0
          %1927 = vmatprep.subr.bf16.mxu0 0
          %1928 = vmatpush1.bf16.msra.mxu0 0
          %1929 = vmatprep.subr.bf16.mxu0 0
          %1930 = vmatpush1.bf16.msra.mxu0 0
          %1931 = vmatprep.subr.bf16.mxu0 0
          %1932 = vmatpush1.bf16.msra.mxu0 0
          %1933 = vmatprep.subr.bf16.mxu0 0
          %1934 = vmatpush1.bf16.msra.mxu0 0
          %1935 = vmatprep.subr.bf16.mxu0 0
          %1936 = vmatpush1.bf16.msra.mxu0 0
          %1937 = vmatprep.subr.bf16.mxu0 0
          %1938 = vmatpush1.bf16.msra.mxu0 0
          %1939 = vmatprep.subr.bf16.mxu0 0
          %1940 = vmatpush1.bf16.msra.mxu0 0
          %1941 = vmatprep.mubr.bf16.mxu0 0
          %1942 = vmatmul.mubr.bf16.gmra.mrb[0].mxu0 %v933
          %v1943 = vpop.f32.mrb[0].mxu0
          %v1944 = vadd.f32 %v1733, %v1943
          %v1945 = vpop.f32.mrb[0].mxu0
          %v1946 = vadd.f32 %v1737, %v1945
          %v1947 = vpop.f32.mrb[0].mxu0
          %v1948 = vpop.f32.mrb[0].mxu0
          %1949 = vdwg.mxu0
          %1950 = vmatprep.subr.bf16.mxu0 %v1457
          %1951 = vmatpush1.bf16.msra.mxu0 %v1456
          %1952 = vmatprep.subr.bf16.mxu0 %v1473
          %1953 = vmatpush1.bf16.msra.mxu0 %v1472
          %1954 = vmatprep.subr.bf16.mxu0 %v1489
          %1955 = vmatpush1.bf16.msra.mxu0 %v1488
          %1956 = vmatprep.subr.bf16.mxu0 %v1505
          %1957 = vmatpush1.bf16.msra.mxu0 %v1504
          %1958 = vmatprep.subr.bf16.mxu0 %v1521
          %1959 = vmatpush1.bf16.msra.mxu0 %v1520
          %1960 = vmatprep.subr.bf16.mxu0 %v1537
          %1961 = vmatpush1.bf16.msra.mxu0 %v1536
          %1962 = vmatprep.subr.bf16.mxu0 %v1553
          %1963 = vmatpush1.bf16.msra.mxu0 %v1552
          %1964 = vmatprep.subr.bf16.mxu0 %v1569
          %1965 = vmatpush1.bf16.msra.mxu0 %v1568
          %1966 = vmatprep.subr.bf16.mxu0 0
          %1967 = vmatpush1.bf16.msra.mxu0 0
          %1968 = vmatprep.subr.bf16.mxu0 0
          %1969 = vmatpush1.bf16.msra.mxu0 0
          %1970 = vmatprep.subr.bf16.mxu0 0
          %1971 = vmatpush1.bf16.msra.mxu0 0
          %1972 = vmatprep.subr.bf16.mxu0 0
          %1973 = vmatpush1.bf16.msra.mxu0 0
          %1974 = vmatprep.subr.bf16.mxu0 0
          %1975 = vmatpush1.bf16.msra.mxu0 0
          %1976 = vmatprep.subr.bf16.mxu0 0
          %1977 = vmatpush1.bf16.msra.mxu0 0
          %1978 = vmatprep.subr.bf16.mxu0 0
          %1979 = vmatpush1.bf16.msra.mxu0 0
          %1980 = vmatprep.subr.bf16.mxu0 0
          %1981 = vmatpush1.bf16.msra.mxu0 0
          %1982 = vmatprep.mubr.bf16.mxu0 0
          %1983 = vmatmul.mubr.bf16.gmra.mrb[0].mxu0 %v933
          %v1984 = vpop.f32.mrb[0].mxu0
          %v1985 = vadd.f32 %v1741, %v1984
          %v1986 = vpop.f32.mrb[0].mxu0
          %v1987 = vadd.f32 %v1745, %v1986
          %v1988 = vpop.f32.mrb[0].mxu0
          %v1989 = vpop.f32.mrb[0].mxu0
          %1990 = vdwg.mxu0
          %1991 = vmatprep.subr.bf16.mxu0 %v1459
          %1992 = vmatpush1.bf16.msra.mxu0 %v1458
          %1993 = vmatprep.subr.bf16.mxu0 %v1475
          %1994 = vmatpush1.bf16.msra.mxu0 %v1474
          %1995 = vmatprep.subr.bf16.mxu0 %v1491
          %1996 = vmatpush1.bf16.msra.mxu0 %v1490
          %1997 = vmatprep.subr.bf16.mxu0 %v1507
          %1998 = vmatpush1.bf16.msra.mxu0 %v1506
          %1999 = vmatprep.subr.bf16.mxu0 %v1523
          %2000 = vmatpush1.bf16.msra.mxu0 %v1522
          %2001 = vmatprep.subr.bf16.mxu0 %v1539
          %2002 = vmatpush1.bf16.msra.mxu0 %v1538
          %2003 = vmatprep.subr.bf16.mxu0 %v1555
          %2004 = vmatpush1.bf16.msra.mxu0 %v1554
          %2005 = vmatprep.subr.bf16.mxu0 %v1571
          %2006 = vmatpush1.bf16.msra.mxu0 %v1570
          %2007 = vmatprep.subr.bf16.mxu0 0
          %2008 = vmatpush1.bf16.msra.mxu0 0
          %2009 = vmatprep.subr.bf16.mxu0 0
          %2010 = vmatpush1.bf16.msra.mxu0 0
          %2011 = vmatprep.subr.bf16.mxu0 0
          %2012 = vmatpush1.bf16.msra.mxu0 0
          %2013 = vmatprep.subr.bf16.mxu0 0
          %2014 = vmatpush1.bf16.msra.mxu0 0
          %2015 = vmatprep.subr.bf16.mxu0 0
          %2016 = vmatpush1.bf16.msra.mxu0 0
          %2017 = vmatprep.subr.bf16.mxu0 0
          %2018 = vmatpush1.bf16.msra.mxu0 0
          %2019 = vmatprep.subr.bf16.mxu0 0
          %2020 = vmatpush1.bf16.msra.mxu0 0
          %2021 = vmatprep.subr.bf16.mxu0 0
          %2022 = vmatpush1.bf16.msra.mxu0 0
          %2023 = vmatprep.mubr.bf16.mxu0 0
          %2024 = vmatmul.mubr.bf16.gmra.mrb[0].mxu0 %v933
          %v2025 = vpop.f32.mrb[0].mxu0
          %v2026 = vadd.f32 %v1749, %v2025
          %v2027 = vpop.f32.mrb[0].mxu0
          %v2028 = vadd.f32 %v1753, %v2027
          %v2029 = vpop.f32.mrb[0].mxu0
          %v2030 = vpop.f32.mrb[0].mxu0
          %2031 = vdwg.mxu0
          %2032 = vmatprep.subr.bf16.mxu0 %v1461
          %2033 = vmatpush1.bf16.msra.mxu0 %v1460
          %2034 = vmatprep.subr.bf16.mxu0 %v1477
          %2035 = vmatpush1.bf16.msra.mxu0 %v1476
          %2036 = vmatprep.subr.bf16.mxu0 %v1493
          %2037 = vmatpush1.bf16.msra.mxu0 %v1492
          %2038 = vmatprep.subr.bf16.mxu0 %v1509
          %2039 = vmatpush1.bf16.msra.mxu0 %v1508
          %2040 = vmatprep.subr.bf16.mxu0 %v1525
          %2041 = vmatpush1.bf16.msra.mxu0 %v1524
          %2042 = vmatprep.subr.bf16.mxu0 %v1541
          %2043 = vmatpush1.bf16.msra.mxu0 %v1540
          %2044 = vmatprep.subr.bf16.mxu0 %v1557
          %2045 = vmatpush1.bf16.msra.mxu0 %v1556
          %2046 = vmatprep.subr.bf16.mxu0 %v1573
          %2047 = vmatpush1.bf16.msra.mxu0 %v1572
          %2048 = vmatprep.subr.bf16.mxu0 0
          %2049 = vmatpush1.bf16.msra.mxu0 0
          %2050 = vmatprep.subr.bf16.mxu0 0
          %2051 = vmatpush1.bf16.msra.mxu0 0
          %2052 = vmatprep.subr.bf16.mxu0 0
          %2053 = vmatpush1.bf16.msra.mxu0 0
          %2054 = vmatprep.subr.bf16.mxu0 0
          %2055 = vmatpush1.bf16.msra.mxu0 0
          %2056 = vmatprep.subr.bf16.mxu0 0
          %2057 = vmatpush1.bf16.msra.mxu0 0
          %2058 = vmatprep.subr.bf16.mxu0 0
          %2059 = vmatpush1.bf16.msra.mxu0 0
          %2060 = vmatprep.subr.bf16.mxu0 0
          %2061 = vmatpush1.bf16.msra.mxu0 0
          %2062 = vmatprep.subr.bf16.mxu0 0
          %2063 = vmatpush1.bf16.msra.mxu0 0
          %2064 = vmatprep.mubr.bf16.mxu0 0
          %2065 = vmatmul.mubr.bf16.gmra.mrb[0].mxu0 %v933
          %v2066 = vpop.f32.mrb[0].mxu0
          %v2067 = vadd.f32 %v1757, %v2066
          %v2068 = vpop.f32.mrb[0].mxu0
          %v2069 = vadd.f32 %v1761, %v2068
          %v2070 = vpop.f32.mrb[0].mxu0
          %v2071 = vpop.f32.mrb[0].mxu0
          %2072 = vdwg.mxu0
          %2073 = vmatprep.subr.bf16.mxu0 %v1463
          %2074 = vmatpush1.bf16.msra.mxu0 %v1462
          %2075 = vmatprep.subr.bf16.mxu0 %v1479
          %2076 = vmatpush1.bf16.msra.mxu0 %v1478
          %2077 = vmatprep.subr.bf16.mxu0 %v1495
          %2078 = vmatpush1.bf16.msra.mxu0 %v1494
          %2079 = vmatprep.subr.bf16.mxu0 %v1511
          %2080 = vmatpush1.bf16.msra.mxu0 %v1510
          %2081 = vmatprep.subr.bf16.mxu0 %v1527
          %2082 = vmatpush1.bf16.msra.mxu0 %v1526
          %2083 = vmatprep.subr.bf16.mxu0 %v1543
          %2084 = vmatpush1.bf16.msra.mxu0 %v1542
          %2085 = vmatprep.subr.bf16.mxu0 %v1559
          %2086 = vmatpush1.bf16.msra.mxu0 %v1558
          %2087 = vmatprep.subr.bf16.mxu0 %v1575
          %2088 = vmatpush1.bf16.msra.mxu0 %v1574
          %2089 = vmatprep.subr.bf16.mxu0 0
          %2090 = vmatpush1.bf16.msra.mxu0 0
          %2091 = vmatprep.subr.bf16.mxu0 0
          %2092 = vmatpush1.bf16.msra.mxu0 0
          %2093 = vmatprep.subr.bf16.mxu0 0
          %2094 = vmatpush1.bf16.msra.mxu0 0
          %2095 = vmatprep.subr.bf16.mxu0 0
          %2096 = vmatpush1.bf16.msra.mxu0 0
          %2097 = vmatprep.subr.bf16.mxu0 0
          %2098 = vmatpush1.bf16.msra.mxu0 0
          %2099 = vmatprep.subr.bf16.mxu0 0
          %2100 = vmatpush1.bf16.msra.mxu0 0
          %2101 = vmatprep.subr.bf16.mxu0 0
          %2102 = vmatpush1.bf16.msra.mxu0 0
          %2103 = vmatprep.subr.bf16.mxu0 0
          %2104 = vmatpush1.bf16.msra.mxu0 0
          %2105 = vmatprep.mubr.bf16.mxu0 0
          %2106 = vmatmul.mubr.bf16.gmra.mrb[0].mxu0 %v933
          %v2107 = vpop.f32.mrb[0].mxu0
          %v2108 = vadd.f32 %v1765, %v2107
          %v2109 = vpop.f32.mrb[0].mxu0
          %v2110 = vadd.f32 %v1769, %v2109
          %v2111 = vpop.f32.mrb[0].mxu0
          %v2112 = vpop.f32.mrb[0].mxu0
          %2113 = vdwg.mxu0
          %v2114 = vmax.f32 %v1821, 0.0
          %v2115 = vmax.f32 %v1823, 0.0
          %v2116 = vmax.f32 %v1862, 0.0
          %v2117 = vmax.f32 %v1864, 0.0
          %v2118 = vmax.f32 %v1903, 0.0
          %v2119 = vmax.f32 %v1905, 0.0
          %v2120 = vmax.f32 %v1944, 0.0
          %v2121 = vmax.f32 %v1946, 0.0
          %v2122 = vmax.f32 %v1985, 0.0
          %v2123 = vmax.f32 %v1987, 0.0
          %v2124 = vmax.f32 %v2026, 0.0
          %v2125 = vmax.f32 %v2028, 0.0
          %v2126 = vmax.f32 %v2067, 0.0
          %v2127 = vmax.f32 %v2069, 0.0
          %v2128 = vmax.f32 %v2108, 0.0
          %v2129 = vmax.f32 %v2110, 0.0
          %v2130 = vpack.c.bf16 %v2114, %v2114
          %v2131 = vpack.c.bf16 %v2115, %v2115
          %v2132 = vpack.c.bf16 %v2116, %v2116
          %v2133 = vpack.c.bf16 %v2117, %v2117
          %v2134 = vpack.c.bf16 %v2118, %v2118
          %v2135 = vpack.c.bf16 %v2119, %v2119
          %v2136 = vpack.c.bf16 %v2120, %v2120
          %v2137 = vpack.c.bf16 %v2121, %v2121
          %v2138 = vpack.c.bf16 %v2122, %v2122
          %v2139 = vpack.c.bf16 %v2123, %v2123
          %v2140 = vpack.c.bf16 %v2124, %v2124
          %v2141 = vpack.c.bf16 %v2125, %v2125
          %v2142 = vpack.c.bf16 %v2126, %v2126
          %v2143 = vpack.c.bf16 %v2127, %v2127
          %v2144 = vpack.c.bf16 %v2128, %v2128
          %v2145 = vpack.c.bf16 %v2129, %v2129
          %v2146 = vld [vmem:[%s6] sm:$0xf]
          %v2147 = vld [vmem:[%s6 + $0x4] sm:$0xf]
          %v2148 = vld [vmem:[%s6 + $0x8] sm:$0xf]
          %v2149 = vld [vmem:[%s6 + $0xc] sm:$0xf]
          %v2150 = vld [vmem:[%s6 + $0x10] sm:$0xf]
          %v2151 = vld [vmem:[%s6 + $0x14] sm:$0xf]
          %v2152 = vld [vmem:[%s6 + $0x18] sm:$0xf]
          %v2153 = vld [vmem:[%s6 + $0x1c] sm:$0xf]
          %v2154 = vld [vmem:[%s6 + $0x20] sm:$0xf]
          %v2155 = vld [vmem:[%s6 + $0x24] sm:$0xf]
          %v2156 = vld [vmem:[%s6 + $0x28] sm:$0xf]
          %v2157 = vld [vmem:[%s6 + $0x2c] sm:$0xf]
          %v2158 = vld [vmem:[%s6 + $0x30] sm:$0xf]
          %v2159 = vld [vmem:[%s6 + $0x34] sm:$0xf]
          %v2160 = vld [vmem:[%s6 + $0x38] sm:$0xf]
          %v2161 = vld [vmem:[%s6 + $0x3c] sm:$0xf]
          %v2162 = vld [vmem:[%s6 + $0x40] sm:$0xf]
          %v2163 = vld [vmem:[%s6 + $0x44] sm:$0xf]
          %v2164 = vld [vmem:[%s6 + $0x48] sm:$0xf]
          %v2165 = vld [vmem:[%s6 + $0x4c] sm:$0xf]
          %v2166 = vld [vmem:[%s6 + $0x50] sm:$0xf]
          %v2167 = vld [vmem:[%s6 + $0x54] sm:$0xf]
          %v2168 = vld [vmem:[%s6 + $0x58] sm:$0xf]
          %v2169 = vld [vmem:[%s6 + $0x5c] sm:$0xf]
          %v2170 = vld [vmem:[%s6 + $0x60] sm:$0xf]
          %v2171 = vld [vmem:[%s6 + $0x64] sm:$0xf]
          %v2172 = vld [vmem:[%s6 + $0x68] sm:$0xf]
          %v2173 = vld [vmem:[%s6 + $0x6c] sm:$0xf]
          %v2174 = vld [vmem:[%s6 + $0x70] sm:$0xf]
          %v2175 = vld [vmem:[%s6 + $0x74] sm:$0xf]
          %v2176 = vld [vmem:[%s6 + $0x78] sm:$0xf]
          %v2177 = vld [vmem:[%s6 + $0x7c] sm:$0xf]
          %v2178 = vld [vmem:[%s6 + $0x80] sm:$0xf]
          %v2179 = vld [vmem:[%s6 + $0x84] sm:$0xf]
          %v2180 = vld [vmem:[%s6 + $0x88] sm:$0xf]
          %v2181 = vld [vmem:[%s6 + $0x8c] sm:$0xf]
          %v2182 = vld [vmem:[%s6 + $0x90] sm:$0xf]
          %v2183 = vld [vmem:[%s6 + $0x94] sm:$0xf]
          %v2184 = vld [vmem:[%s6 + $0x98] sm:$0xf]
          %v2185 = vld [vmem:[%s6 + $0x9c] sm:$0xf]
          %v2186 = vld [vmem:[%s6 + $0xa0] sm:$0xf]
          %v2187 = vld [vmem:[%s6 + $0xa4] sm:$0xf]
          %v2188 = vld [vmem:[%s6 + $0xa8] sm:$0xf]
          %v2189 = vld [vmem:[%s6 + $0xac] sm:$0xf]
          %v2190 = vld [vmem:[%s6 + $0xb0] sm:$0xf]
          %v2191 = vld [vmem:[%s6 + $0xb4] sm:$0xf]
          %v2192 = vld [vmem:[%s6 + $0xb8] sm:$0xf]
          %v2193 = vld [vmem:[%s6 + $0xbc] sm:$0xf]
          %v2194 = vld [vmem:[%s6 + $0xc0] sm:$0xf]
          %v2195 = vld [vmem:[%s6 + $0xc4] sm:$0xf]
          %v2196 = vld [vmem:[%s6 + $0xc8] sm:$0xf]
          %v2197 = vld [vmem:[%s6 + $0xcc] sm:$0xf]
          %v2198 = vld [vmem:[%s6 + $0xd0] sm:$0xf]
          %v2199 = vld [vmem:[%s6 + $0xd4] sm:$0xf]
          %v2200 = vld [vmem:[%s6 + $0xd8] sm:$0xf]
          %v2201 = vld [vmem:[%s6 + $0xdc] sm:$0xf]
          %v2202 = vld [vmem:[%s6 + $0xe0] sm:$0xf]
          %v2203 = vld [vmem:[%s6 + $0xe4] sm:$0xf]
          %v2204 = vld [vmem:[%s6 + $0xe8] sm:$0xf]
          %v2205 = vld [vmem:[%s6 + $0xec] sm:$0xf]
          %v2206 = vld [vmem:[%s6 + $0xf0] sm:$0xf]
          %v2207 = vld [vmem:[%s6 + $0xf4] sm:$0xf]
          %v2208 = vld [vmem:[%s6 + $0xf8] sm:$0xf]
          %v2209 = vld [vmem:[%s6 + $0xfc] sm:$0xf]
          %v2210 = vld [vmem:[%s6 + $0x100] sm:$0xf]
          %v2211 = vld [vmem:[%s6 + $0x104] sm:$0xf]
          %v2212 = vld [vmem:[%s6 + $0x108] sm:$0xf]
          %v2213 = vld [vmem:[%s6 + $0x10c] sm:$0xf]
          %v2214 = vld [vmem:[%s6 + $0x110] sm:$0xf]
          %v2215 = vld [vmem:[%s6 + $0x114] sm:$0xf]
          %v2216 = vld [vmem:[%s6 + $0x118] sm:$0xf]
          %v2217 = vld [vmem:[%s6 + $0x11c] sm:$0xf]
          %v2218 = vld [vmem:[%s6 + $0x120] sm:$0xf]
          %v2219 = vld [vmem:[%s6 + $0x124] sm:$0xf]
          %v2220 = vld [vmem:[%s6 + $0x128] sm:$0xf]
          %v2221 = vld [vmem:[%s6 + $0x12c] sm:$0xf]
          %v2222 = vld [vmem:[%s6 + $0x130] sm:$0xf]
          %v2223 = vld [vmem:[%s6 + $0x134] sm:$0xf]
          %v2224 = vld [vmem:[%s6 + $0x138] sm:$0xf]
          %v2225 = vld [vmem:[%s6 + $0x13c] sm:$0xf]
          %v2226 = vld [vmem:[%s6 + $0x140] sm:$0xf]
          %v2227 = vld [vmem:[%s6 + $0x144] sm:$0xf]
          %v2228 = vld [vmem:[%s6 + $0x148] sm:$0xf]
          %v2229 = vld [vmem:[%s6 + $0x14c] sm:$0xf]
          %v2230 = vld [vmem:[%s6 + $0x150] sm:$0xf]
          %v2231 = vld [vmem:[%s6 + $0x154] sm:$0xf]
          %v2232 = vld [vmem:[%s6 + $0x158] sm:$0xf]
          %v2233 = vld [vmem:[%s6 + $0x15c] sm:$0xf]
          %v2234 = vld [vmem:[%s6 + $0x160] sm:$0xf]
          %v2235 = vld [vmem:[%s6 + $0x164] sm:$0xf]
          %v2236 = vld [vmem:[%s6 + $0x168] sm:$0xf]
          %v2237 = vld [vmem:[%s6 + $0x16c] sm:$0xf]
          %v2238 = vld [vmem:[%s6 + $0x170] sm:$0xf]
          %v2239 = vld [vmem:[%s6 + $0x174] sm:$0xf]
          %v2240 = vld [vmem:[%s6 + $0x178] sm:$0xf]
          %v2241 = vld [vmem:[%s6 + $0x17c] sm:$0xf]
          %v2242 = vld [vmem:[%s6 + $0x180] sm:$0xf]
          %v2243 = vld [vmem:[%s6 + $0x184] sm:$0xf]
          %v2244 = vld [vmem:[%s6 + $0x188] sm:$0xf]
          %v2245 = vld [vmem:[%s6 + $0x18c] sm:$0xf]
          %v2246 = vld [vmem:[%s6 + $0x190] sm:$0xf]
          %v2247 = vld [vmem:[%s6 + $0x194] sm:$0xf]
          %v2248 = vld [vmem:[%s6 + $0x198] sm:$0xf]
          %v2249 = vld [vmem:[%s6 + $0x19c] sm:$0xf]
          %v2250 = vld [vmem:[%s6 + $0x1a0] sm:$0xf]
          %v2251 = vld [vmem:[%s6 + $0x1a4] sm:$0xf]
          %v2252 = vld [vmem:[%s6 + $0x1a8] sm:$0xf]
          %v2253 = vld [vmem:[%s6 + $0x1ac] sm:$0xf]
          %v2254 = vld [vmem:[%s6 + $0x1b0] sm:$0xf]
          %v2255 = vld [vmem:[%s6 + $0x1b4] sm:$0xf]
          %v2256 = vld [vmem:[%s6 + $0x1b8] sm:$0xf]
          %v2257 = vld [vmem:[%s6 + $0x1bc] sm:$0xf]
          %v2258 = vld [vmem:[%s6 + $0x1c0] sm:$0xf]
          %v2259 = vld [vmem:[%s6 + $0x1c4] sm:$0xf]
          %v2260 = vld [vmem:[%s6 + $0x1c8] sm:$0xf]
          %v2261 = vld [vmem:[%s6 + $0x1cc] sm:$0xf]
          %v2262 = vld [vmem:[%s6 + $0x1d0] sm:$0xf]
          %v2263 = vld [vmem:[%s6 + $0x1d4] sm:$0xf]
          %v2264 = vld [vmem:[%s6 + $0x1d8] sm:$0xf]
          %v2265 = vld [vmem:[%s6 + $0x1dc] sm:$0xf]
          %v2266 = vld [vmem:[%s6 + $0x1e0] sm:$0xf]
          %v2267 = vld [vmem:[%s6 + $0x1e4] sm:$0xf]
          %v2268 = vld [vmem:[%s6 + $0x1e8] sm:$0xf]
          %v2269 = vld [vmem:[%s6 + $0x1ec] sm:$0xf]
          %v2270 = vld [vmem:[%s6 + $0x1f0] sm:$0xf]
          %v2271 = vld [vmem:[%s6 + $0x1f4] sm:$0xf]
          %v2272 = vld [vmem:[%s6 + $0x1f8] sm:$0xf]
          %v2273 = vld [vmem:[%s6 + $0x1fc] sm:$0xf]
          %v2274 = vld [vmem:[%s6 + $0x200] sm:$0xf]
          %v2275 = vld [vmem:[%s6 + $0x204] sm:$0xf]
          %v2276 = vld [vmem:[%s6 + $0x208] sm:$0xf]
          %v2277 = vld [vmem:[%s6 + $0x20c] sm:$0xf]
          %v2278 = vld [vmem:[%s6 + $0x210] sm:$0xf]
          %v2279 = vld [vmem:[%s6 + $0x214] sm:$0xf]
          %v2280 = vld [vmem:[%s6 + $0x218] sm:$0xf]
          %v2281 = vld [vmem:[%s6 + $0x21c] sm:$0xf]
          %v2282 = vld [vmem:[%s6 + $0x220] sm:$0xf]
          %v2283 = vld [vmem:[%s6 + $0x224] sm:$0xf]
          %v2284 = vld [vmem:[%s6 + $0x228] sm:$0xf]
          %v2285 = vld [vmem:[%s6 + $0x22c] sm:$0xf]
          %v2286 = vld [vmem:[%s6 + $0x230] sm:$0xf]
          %v2287 = vld [vmem:[%s6 + $0x234] sm:$0xf]
          %v2288 = vld [vmem:[%s6 + $0x238] sm:$0xf]
          %v2289 = vld [vmem:[%s6 + $0x23c] sm:$0xf]
          %v2290 = vld [vmem:[%s6 + $0x240] sm:$0xf]
          %v2291 = vld [vmem:[%s6 + $0x244] sm:$0xf]
          %v2292 = vld [vmem:[%s6 + $0x248] sm:$0xf]
          %v2293 = vld [vmem:[%s6 + $0x24c] sm:$0xf]
          %v2294 = vld [vmem:[%s6 + $0x250] sm:$0xf]
          %v2295 = vld [vmem:[%s6 + $0x254] sm:$0xf]
          %v2296 = vld [vmem:[%s6 + $0x258] sm:$0xf]
          %v2297 = vld [vmem:[%s6 + $0x25c] sm:$0xf]
          %v2298 = vld [vmem:[%s6 + $0x260] sm:$0xf]
          %v2299 = vld [vmem:[%s6 + $0x264] sm:$0xf]
          %v2300 = vld [vmem:[%s6 + $0x268] sm:$0xf]
          %v2301 = vld [vmem:[%s6 + $0x26c] sm:$0xf]
          %v2302 = vld [vmem:[%s6 + $0x270] sm:$0xf]
          %v2303 = vld [vmem:[%s6 + $0x274] sm:$0xf]
          %v2304 = vld [vmem:[%s6 + $0x278] sm:$0xf]
          %v2305 = vld [vmem:[%s6 + $0x27c] sm:$0xf]
          %v2306 = vld [vmem:[%s6 + $0x280] sm:$0xf]
          %v2307 = vld [vmem:[%s6 + $0x284] sm:$0xf]
          %v2308 = vld [vmem:[%s6 + $0x288] sm:$0xf]
          %v2309 = vld [vmem:[%s6 + $0x28c] sm:$0xf]
          %v2310 = vld [vmem:[%s6 + $0x290] sm:$0xf]
          %v2311 = vld [vmem:[%s6 + $0x294] sm:$0xf]
          %v2312 = vld [vmem:[%s6 + $0x298] sm:$0xf]
          %v2313 = vld [vmem:[%s6 + $0x29c] sm:$0xf]
          %v2314 = vld [vmem:[%s6 + $0x2a0] sm:$0xf]
          %v2315 = vld [vmem:[%s6 + $0x2a4] sm:$0xf]
          %v2316 = vld [vmem:[%s6 + $0x2a8] sm:$0xf]
          %v2317 = vld [vmem:[%s6 + $0x2ac] sm:$0xf]
          %v2318 = vld [vmem:[%s6 + $0x2b0] sm:$0xf]
          %v2319 = vld [vmem:[%s6 + $0x2b4] sm:$0xf]
          %v2320 = vld [vmem:[%s6 + $0x2b8] sm:$0xf]
          %v2321 = vld [vmem:[%s6 + $0x2bc] sm:$0xf]
          %v2322 = vld [vmem:[%s6 + $0x2c0] sm:$0xf]
          %v2323 = vld [vmem:[%s6 + $0x2c4] sm:$0xf]
          %v2324 = vld [vmem:[%s6 + $0x2c8] sm:$0xf]
          %v2325 = vld [vmem:[%s6 + $0x2cc] sm:$0xf]
          %v2326 = vld [vmem:[%s6 + $0x2d0] sm:$0xf]
          %v2327 = vld [vmem:[%s6 + $0x2d4] sm:$0xf]
          %v2328 = vld [vmem:[%s6 + $0x2d8] sm:$0xf]
          %v2329 = vld [vmem:[%s6 + $0x2dc] sm:$0xf]
          %v2330 = vld [vmem:[%s6 + $0x2e0] sm:$0xf]
          %v2331 = vld [vmem:[%s6 + $0x2e4] sm:$0xf]
          %v2332 = vld [vmem:[%s6 + $0x2e8] sm:$0xf]
          %v2333 = vld [vmem:[%s6 + $0x2ec] sm:$0xf]
          %v2334 = vld [vmem:[%s6 + $0x2f0] sm:$0xf]
          %v2335 = vld [vmem:[%s6 + $0x2f4] sm:$0xf]
          %v2336 = vld [vmem:[%s6 + $0x2f8] sm:$0xf]
          %v2337 = vld [vmem:[%s6 + $0x2fc] sm:$0xf]
          %v2338 = vld [vmem:[%s6 + $0x300] sm:$0xf]
          %v2339 = vld [vmem:[%s6 + $0x304] sm:$0xf]
          %v2340 = vld [vmem:[%s6 + $0x308] sm:$0xf]
          %v2341 = vld [vmem:[%s6 + $0x30c] sm:$0xf]
          %v2342 = vld [vmem:[%s6 + $0x310] sm:$0xf]
          %v2343 = vld [vmem:[%s6 + $0x314] sm:$0xf]
          %v2344 = vld [vmem:[%s6 + $0x318] sm:$0xf]
          %v2345 = vld [vmem:[%s6 + $0x31c] sm:$0xf]
          %v2346 = vld [vmem:[%s6 + $0x320] sm:$0xf]
          %v2347 = vld [vmem:[%s6 + $0x324] sm:$0xf]
          %v2348 = vld [vmem:[%s6 + $0x328] sm:$0xf]
          %v2349 = vld [vmem:[%s6 + $0x32c] sm:$0xf]
          %v2350 = vld [vmem:[%s6 + $0x330] sm:$0xf]
          %v2351 = vld [vmem:[%s6 + $0x334] sm:$0xf]
          %v2352 = vld [vmem:[%s6 + $0x338] sm:$0xf]
          %v2353 = vld [vmem:[%s6 + $0x33c] sm:$0xf]
          %v2354 = vld [vmem:[%s6 + $0x340] sm:$0xf]
          %v2355 = vld [vmem:[%s6 + $0x344] sm:$0xf]
          %v2356 = vld [vmem:[%s6 + $0x348] sm:$0xf]
          %v2357 = vld [vmem:[%s6 + $0x34c] sm:$0xf]
          %v2358 = vld [vmem:[%s6 + $0x350] sm:$0xf]
          %v2359 = vld [vmem:[%s6 + $0x354] sm:$0xf]
          %v2360 = vld [vmem:[%s6 + $0x358] sm:$0xf]
          %v2361 = vld [vmem:[%s6 + $0x35c] sm:$0xf]
          %v2362 = vld [vmem:[%s6 + $0x360] sm:$0xf]
          %v2363 = vld [vmem:[%s6 + $0x364] sm:$0xf]
          %v2364 = vld [vmem:[%s6 + $0x368] sm:$0xf]
          %v2365 = vld [vmem:[%s6 + $0x36c] sm:$0xf]
          %v2366 = vld [vmem:[%s6 + $0x370] sm:$0xf]
          %v2367 = vld [vmem:[%s6 + $0x374] sm:$0xf]
          %v2368 = vld [vmem:[%s6 + $0x378] sm:$0xf]
          %v2369 = vld [vmem:[%s6 + $0x37c] sm:$0xf]
          %v2370 = vld [vmem:[%s6 + $0x380] sm:$0xf]
          %v2371 = vld [vmem:[%s6 + $0x384] sm:$0xf]
          %v2372 = vld [vmem:[%s6 + $0x388] sm:$0xf]
          %v2373 = vld [vmem:[%s6 + $0x38c] sm:$0xf]
          %v2374 = vld [vmem:[%s6 + $0x390] sm:$0xf]
          %v2375 = vld [vmem:[%s6 + $0x394] sm:$0xf]
          %v2376 = vld [vmem:[%s6 + $0x398] sm:$0xf]
          %v2377 = vld [vmem:[%s6 + $0x39c] sm:$0xf]
          %v2378 = vld [vmem:[%s6 + $0x3a0] sm:$0xf]
          %v2379 = vld [vmem:[%s6 + $0x3a4] sm:$0xf]
          %v2380 = vld [vmem:[%s6 + $0x3a8] sm:$0xf]
          %v2381 = vld [vmem:[%s6 + $0x3ac] sm:$0xf]
          %v2382 = vld [vmem:[%s6 + $0x3b0] sm:$0xf]
          %v2383 = vld [vmem:[%s6 + $0x3b4] sm:$0xf]
          %v2384 = vld [vmem:[%s6 + $0x3b8] sm:$0xf]
          %v2385 = vld [vmem:[%s6 + $0x3bc] sm:$0xf]
          %v2386 = vld [vmem:[%s6 + $0x3c0] sm:$0xf]
          %v2387 = vld [vmem:[%s6 + $0x3c4] sm:$0xf]
          %v2388 = vld [vmem:[%s6 + $0x3c8] sm:$0xf]
          %v2389 = vld [vmem:[%s6 + $0x3cc] sm:$0xf]
          %v2390 = vld [vmem:[%s6 + $0x3d0] sm:$0xf]
          %v2391 = vld [vmem:[%s6 + $0x3d4] sm:$0xf]
          %v2392 = vld [vmem:[%s6 + $0x3d8] sm:$0xf]
          %v2393 = vld [vmem:[%s6 + $0x3dc] sm:$0xf]
          %v2394 = vld [vmem:[%s6 + $0x3e0] sm:$0xf]
          %v2395 = vld [vmem:[%s6 + $0x3e4] sm:$0xf]
          %v2396 = vld [vmem:[%s6 + $0x3e8] sm:$0xf]
          %v2397 = vld [vmem:[%s6 + $0x3ec] sm:$0xf]
          %v2398 = vld [vmem:[%s6 + $0x3f0] sm:$0xf]
          %v2399 = vld [vmem:[%s6 + $0x3f4] sm:$0xf]
          %v2400 = vld [vmem:[%s6 + $0x3f8] sm:$0xf]
          %v2401 = vld [vmem:[%s6 + $0x3fc] sm:$0xf]
          %v2402 = vld [vmem:[%s7] sm:$0x1]
          %v2659 = vunpack.c.l.b16 %v2146
          %v2660 = vunpack.c.l.b16 %v2147
          %v2661 = vunpack.c.l.b16 %v2148
          %v2662 = vunpack.c.l.b16 %v2149
          %v2663 = vunpack.c.l.b16 %v2150
          %v2664 = vunpack.c.l.b16 %v2151
          %v2665 = vunpack.c.l.b16 %v2152
          %v2666 = vunpack.c.l.b16 %v2153
          %v2667 = vunpack.c.l.b16 %v2154
          %v2668 = vunpack.c.l.b16 %v2155
          %v2669 = vunpack.c.l.b16 %v2156
          %v2670 = vunpack.c.l.b16 %v2157
          %v2671 = vunpack.c.l.b16 %v2158
          %v2672 = vunpack.c.l.b16 %v2159
          %v2673 = vunpack.c.l.b16 %v2160
          %v2674 = vunpack.c.l.b16 %v2161
          %v2675 = vunpack.c.l.b16 %v2162
          %v2676 = vunpack.c.l.b16 %v2163
          %v2677 = vunpack.c.l.b16 %v2164
          %v2678 = vunpack.c.l.b16 %v2165
          %v2679 = vunpack.c.l.b16 %v2166
          %v2680 = vunpack.c.l.b16 %v2167
          %v2681 = vunpack.c.l.b16 %v2168
          %v2682 = vunpack.c.l.b16 %v2169
          %v2683 = vunpack.c.l.b16 %v2170
          %v2684 = vunpack.c.l.b16 %v2171
          %v2685 = vunpack.c.l.b16 %v2172
          %v2686 = vunpack.c.l.b16 %v2173
          %v2687 = vunpack.c.l.b16 %v2174
          %v2688 = vunpack.c.l.b16 %v2175
          %v2689 = vunpack.c.l.b16 %v2176
          %v2690 = vunpack.c.l.b16 %v2177
          %v2691 = vunpack.c.l.b16 %v2178
          %v2692 = vunpack.c.l.b16 %v2179
          %v2693 = vunpack.c.l.b16 %v2180
          %v2694 = vunpack.c.l.b16 %v2181
          %v2695 = vunpack.c.l.b16 %v2182
          %v2696 = vunpack.c.l.b16 %v2183
          %v2697 = vunpack.c.l.b16 %v2184
          %v2698 = vunpack.c.l.b16 %v2185
          %v2699 = vunpack.c.l.b16 %v2186
          %v2700 = vunpack.c.l.b16 %v2187
          %v2701 = vunpack.c.l.b16 %v2188
          %v2702 = vunpack.c.l.b16 %v2189
          %v2703 = vunpack.c.l.b16 %v2190
          %v2704 = vunpack.c.l.b16 %v2191
          %v2705 = vunpack.c.l.b16 %v2192
          %v2706 = vunpack.c.l.b16 %v2193
          %v2707 = vunpack.c.l.b16 %v2194
          %v2708 = vunpack.c.l.b16 %v2195
          %v2709 = vunpack.c.l.b16 %v2196
          %v2710 = vunpack.c.l.b16 %v2197
          %v2711 = vunpack.c.l.b16 %v2198
          %v2712 = vunpack.c.l.b16 %v2199
          %v2713 = vunpack.c.l.b16 %v2200
          %v2714 = vunpack.c.l.b16 %v2201
          %v2715 = vunpack.c.l.b16 %v2202
          %v2716 = vunpack.c.l.b16 %v2203
          %v2717 = vunpack.c.l.b16 %v2204
          %v2718 = vunpack.c.l.b16 %v2205
          %v2719 = vunpack.c.l.b16 %v2206
          %v2720 = vunpack.c.l.b16 %v2207
          %v2721 = vunpack.c.l.b16 %v2208
          %v2722 = vunpack.c.l.b16 %v2209
          %v2723 = vunpack.c.l.b16 %v2210
          %v2724 = vunpack.c.l.b16 %v2211
          %v2725 = vunpack.c.l.b16 %v2212
          %v2726 = vunpack.c.l.b16 %v2213
          %v2727 = vunpack.c.l.b16 %v2214
          %v2728 = vunpack.c.l.b16 %v2215
          %v2729 = vunpack.c.l.b16 %v2216
          %v2730 = vunpack.c.l.b16 %v2217
          %v2731 = vunpack.c.l.b16 %v2218
          %v2732 = vunpack.c.l.b16 %v2219
          %v2733 = vunpack.c.l.b16 %v2220
          %v2734 = vunpack.c.l.b16 %v2221
          %v2735 = vunpack.c.l.b16 %v2222
          %v2736 = vunpack.c.l.b16 %v2223
          %v2737 = vunpack.c.l.b16 %v2224
          %v2738 = vunpack.c.l.b16 %v2225
          %v2739 = vunpack.c.l.b16 %v2226
          %v2740 = vunpack.c.l.b16 %v2227
          %v2741 = vunpack.c.l.b16 %v2228
          %v2742 = vunpack.c.l.b16 %v2229
          %v2743 = vunpack.c.l.b16 %v2230
          %v2744 = vunpack.c.l.b16 %v2231
          %v2745 = vunpack.c.l.b16 %v2232
          %v2746 = vunpack.c.l.b16 %v2233
          %v2747 = vunpack.c.l.b16 %v2234
          %v2748 = vunpack.c.l.b16 %v2235
          %v2749 = vunpack.c.l.b16 %v2236
          %v2750 = vunpack.c.l.b16 %v2237
          %v2751 = vunpack.c.l.b16 %v2238
          %v2752 = vunpack.c.l.b16 %v2239
          %v2753 = vunpack.c.l.b16 %v2240
          %v2754 = vunpack.c.l.b16 %v2241
          %v2755 = vunpack.c.l.b16 %v2242
          %v2756 = vunpack.c.l.b16 %v2243
          %v2757 = vunpack.c.l.b16 %v2244
          %v2758 = vunpack.c.l.b16 %v2245
          %v2759 = vunpack.c.l.b16 %v2246
          %v2760 = vunpack.c.l.b16 %v2247
          %v2761 = vunpack.c.l.b16 %v2248
          %v2762 = vunpack.c.l.b16 %v2249
          %v2763 = vunpack.c.l.b16 %v2250
          %v2764 = vunpack.c.l.b16 %v2251
          %v2765 = vunpack.c.l.b16 %v2252
          %v2766 = vunpack.c.l.b16 %v2253
          %v2767 = vunpack.c.l.b16 %v2254
          %v2768 = vunpack.c.l.b16 %v2255
          %v2769 = vunpack.c.l.b16 %v2256
          %v2770 = vunpack.c.l.b16 %v2257
          %v2771 = vunpack.c.l.b16 %v2258
          %v2772 = vunpack.c.l.b16 %v2259
          %v2773 = vunpack.c.l.b16 %v2260
          %v2774 = vunpack.c.l.b16 %v2261
          %v2775 = vunpack.c.l.b16 %v2262
          %v2776 = vunpack.c.l.b16 %v2263
          %v2777 = vunpack.c.l.b16 %v2264
          %v2778 = vunpack.c.l.b16 %v2265
          %v2779 = vunpack.c.l.b16 %v2266
          %v2780 = vunpack.c.l.b16 %v2267
          %v2781 = vunpack.c.l.b16 %v2268
          %v2782 = vunpack.c.l.b16 %v2269
          %v2783 = vunpack.c.l.b16 %v2270
          %v2784 = vunpack.c.l.b16 %v2271
          %v2785 = vunpack.c.l.b16 %v2272
          %v2786 = vunpack.c.l.b16 %v2273
          %v2787 = vunpack.c.l.b16 %v2274
          %v2788 = vunpack.c.l.b16 %v2275
          %v2789 = vunpack.c.l.b16 %v2276
          %v2790 = vunpack.c.l.b16 %v2277
          %v2791 = vunpack.c.l.b16 %v2278
          %v2792 = vunpack.c.l.b16 %v2279
          %v2793 = vunpack.c.l.b16 %v2280
          %v2794 = vunpack.c.l.b16 %v2281
          %v2795 = vunpack.c.l.b16 %v2282
          %v2796 = vunpack.c.l.b16 %v2283
          %v2797 = vunpack.c.l.b16 %v2284
          %v2798 = vunpack.c.l.b16 %v2285
          %v2799 = vunpack.c.l.b16 %v2286
          %v2800 = vunpack.c.l.b16 %v2287
          %v2801 = vunpack.c.l.b16 %v2288
          %v2802 = vunpack.c.l.b16 %v2289
          %v2803 = vunpack.c.l.b16 %v2290
          %v2804 = vunpack.c.l.b16 %v2291
          %v2805 = vunpack.c.l.b16 %v2292
          %v2806 = vunpack.c.l.b16 %v2293
          %v2807 = vunpack.c.l.b16 %v2294
          %v2808 = vunpack.c.l.b16 %v2295
          %v2809 = vunpack.c.l.b16 %v2296
          %v2810 = vunpack.c.l.b16 %v2297
          %v2811 = vunpack.c.l.b16 %v2298
          %v2812 = vunpack.c.l.b16 %v2299
          %v2813 = vunpack.c.l.b16 %v2300
          %v2814 = vunpack.c.l.b16 %v2301
          %v2815 = vunpack.c.l.b16 %v2302
          %v2816 = vunpack.c.l.b16 %v2303
          %v2817 = vunpack.c.l.b16 %v2304
          %v2818 = vunpack.c.l.b16 %v2305
          %v2819 = vunpack.c.l.b16 %v2306
          %v2820 = vunpack.c.l.b16 %v2307
          %v2821 = vunpack.c.l.b16 %v2308
          %v2822 = vunpack.c.l.b16 %v2309
          %v2823 = vunpack.c.l.b16 %v2310
          %v2824 = vunpack.c.l.b16 %v2311
          %v2825 = vunpack.c.l.b16 %v2312
          %v2826 = vunpack.c.l.b16 %v2313
          %v2827 = vunpack.c.l.b16 %v2314
          %v2828 = vunpack.c.l.b16 %v2315
          %v2829 = vunpack.c.l.b16 %v2316
          %v2830 = vunpack.c.l.b16 %v2317
          %v2831 = vunpack.c.l.b16 %v2318
          %v2832 = vunpack.c.l.b16 %v2319
          %v2833 = vunpack.c.l.b16 %v2320
          %v2834 = vunpack.c.l.b16 %v2321
          %v2835 = vunpack.c.l.b16 %v2322
          %v2836 = vunpack.c.l.b16 %v2323
          %v2837 = vunpack.c.l.b16 %v2324
          %v2838 = vunpack.c.l.b16 %v2325
          %v2839 = vunpack.c.l.b16 %v2326
          %v2840 = vunpack.c.l.b16 %v2327
          %v2841 = vunpack.c.l.b16 %v2328
          %v2842 = vunpack.c.l.b16 %v2329
          %v2843 = vunpack.c.l.b16 %v2330
          %v2844 = vunpack.c.l.b16 %v2331
          %v2845 = vunpack.c.l.b16 %v2332
          %v2846 = vunpack.c.l.b16 %v2333
          %v2847 = vunpack.c.l.b16 %v2334
          %v2848 = vunpack.c.l.b16 %v2335
          %v2849 = vunpack.c.l.b16 %v2336
          %v2850 = vunpack.c.l.b16 %v2337
          %v2851 = vunpack.c.l.b16 %v2338
          %v2852 = vunpack.c.l.b16 %v2339
          %v2853 = vunpack.c.l.b16 %v2340
          %v2854 = vunpack.c.l.b16 %v2341
          %v2855 = vunpack.c.l.b16 %v2342
          %v2856 = vunpack.c.l.b16 %v2343
          %v2857 = vunpack.c.l.b16 %v2344
          %v2858 = vunpack.c.l.b16 %v2345
          %v2859 = vunpack.c.l.b16 %v2346
          %v2860 = vunpack.c.l.b16 %v2347
          %v2861 = vunpack.c.l.b16 %v2348
          %v2862 = vunpack.c.l.b16 %v2349
          %v2863 = vunpack.c.l.b16 %v2350
          %v2864 = vunpack.c.l.b16 %v2351
          %v2865 = vunpack.c.l.b16 %v2352
          %v2866 = vunpack.c.l.b16 %v2353
          %v2867 = vunpack.c.l.b16 %v2354
          %v2868 = vunpack.c.l.b16 %v2355
          %v2869 = vunpack.c.l.b16 %v2356
          %v2870 = vunpack.c.l.b16 %v2357
          %v2871 = vunpack.c.l.b16 %v2358
          %v2872 = vunpack.c.l.b16 %v2359
          %v2873 = vunpack.c.l.b16 %v2360
          %v2874 = vunpack.c.l.b16 %v2361
          %v2875 = vunpack.c.l.b16 %v2362
          %v2876 = vunpack.c.l.b16 %v2363
          %v2877 = vunpack.c.l.b16 %v2364
          %v2878 = vunpack.c.l.b16 %v2365
          %v2879 = vunpack.c.l.b16 %v2366
          %v2880 = vunpack.c.l.b16 %v2367
          %v2881 = vunpack.c.l.b16 %v2368
          %v2882 = vunpack.c.l.b16 %v2369
          %v2883 = vunpack.c.l.b16 %v2370
          %v2884 = vunpack.c.l.b16 %v2371
          %v2885 = vunpack.c.l.b16 %v2372
          %v2886 = vunpack.c.l.b16 %v2373
          %v2887 = vunpack.c.l.b16 %v2374
          %v2888 = vunpack.c.l.b16 %v2375
          %v2889 = vunpack.c.l.b16 %v2376
          %v2890 = vunpack.c.l.b16 %v2377
          %v2891 = vunpack.c.l.b16 %v2378
          %v2892 = vunpack.c.l.b16 %v2379
          %v2893 = vunpack.c.l.b16 %v2380
          %v2894 = vunpack.c.l.b16 %v2381
          %v2895 = vunpack.c.l.b16 %v2382
          %v2896 = vunpack.c.l.b16 %v2383
          %v2897 = vunpack.c.l.b16 %v2384
          %v2898 = vunpack.c.l.b16 %v2385
          %v2899 = vunpack.c.l.b16 %v2386
          %v2900 = vunpack.c.l.b16 %v2387
          %v2901 = vunpack.c.l.b16 %v2388
          %v2902 = vunpack.c.l.b16 %v2389
          %v2903 = vunpack.c.l.b16 %v2390
          %v2904 = vunpack.c.l.b16 %v2391
          %v2905 = vunpack.c.l.b16 %v2392
          %v2906 = vunpack.c.l.b16 %v2393
          %v2907 = vunpack.c.l.b16 %v2394
          %v2908 = vunpack.c.l.b16 %v2395
          %v2909 = vunpack.c.l.b16 %v2396
          %v2910 = vunpack.c.l.b16 %v2397
          %v2911 = vunpack.c.l.b16 %v2398
          %v2912 = vunpack.c.l.b16 %v2399
          %v2913 = vunpack.c.l.b16 %v2400
          %v2914 = vunpack.c.l.b16 %v2401
          %v2915 = vpack.c.b16 %v2660, %v2659
          %v2916 = vpack.c.b16 %v2662, %v2661
          %v2917 = vpack.c.b16 %v2664, %v2663
          %v2918 = vpack.c.b16 %v2666, %v2665
          %v2919 = vpack.c.b16 %v2668, %v2667
          %v2920 = vpack.c.b16 %v2670, %v2669
          %v2921 = vpack.c.b16 %v2672, %v2671
          %v2922 = vpack.c.b16 %v2674, %v2673
          %v2923 = vpack.c.b16 %v2676, %v2675
          %v2924 = vpack.c.b16 %v2678, %v2677
          %v2925 = vpack.c.b16 %v2680, %v2679
          %v2926 = vpack.c.b16 %v2682, %v2681
          %v2927 = vpack.c.b16 %v2684, %v2683
          %v2928 = vpack.c.b16 %v2686, %v2685
          %v2929 = vpack.c.b16 %v2688, %v2687
          %v2930 = vpack.c.b16 %v2690, %v2689
          %v2931 = vpack.c.b16 %v2692, %v2691
          %v2932 = vpack.c.b16 %v2694, %v2693
          %v2933 = vpack.c.b16 %v2696, %v2695
          %v2934 = vpack.c.b16 %v2698, %v2697
          %v2935 = vpack.c.b16 %v2700, %v2699
          %v2936 = vpack.c.b16 %v2702, %v2701
          %v2937 = vpack.c.b16 %v2704, %v2703
          %v2938 = vpack.c.b16 %v2706, %v2705
          %v2939 = vpack.c.b16 %v2708, %v2707
          %v2940 = vpack.c.b16 %v2710, %v2709
          %v2941 = vpack.c.b16 %v2712, %v2711
          %v2942 = vpack.c.b16 %v2714, %v2713
          %v2943 = vpack.c.b16 %v2716, %v2715
          %v2944 = vpack.c.b16 %v2718, %v2717
          %v2945 = vpack.c.b16 %v2720, %v2719
          %v2946 = vpack.c.b16 %v2722, %v2721
          %v2947 = vpack.c.b16 %v2724, %v2723
          %v2948 = vpack.c.b16 %v2726, %v2725
          %v2949 = vpack.c.b16 %v2728, %v2727
          %v2950 = vpack.c.b16 %v2730, %v2729
          %v2951 = vpack.c.b16 %v2732, %v2731
          %v2952 = vpack.c.b16 %v2734, %v2733
          %v2953 = vpack.c.b16 %v2736, %v2735
          %v2954 = vpack.c.b16 %v2738, %v2737
          %v2955 = vpack.c.b16 %v2740, %v2739
          %v2956 = vpack.c.b16 %v2742, %v2741
          %v2957 = vpack.c.b16 %v2744, %v2743
          %v2958 = vpack.c.b16 %v2746, %v2745
          %v2959 = vpack.c.b16 %v2748, %v2747
          %v2960 = vpack.c.b16 %v2750, %v2749
          %v2961 = vpack.c.b16 %v2752, %v2751
          %v2962 = vpack.c.b16 %v2754, %v2753
          %v2963 = vpack.c.b16 %v2756, %v2755
          %v2964 = vpack.c.b16 %v2758, %v2757
          %v2965 = vpack.c.b16 %v2760, %v2759
          %v2966 = vpack.c.b16 %v2762, %v2761
          %v2967 = vpack.c.b16 %v2764, %v2763
          %v2968 = vpack.c.b16 %v2766, %v2765
          %v2969 = vpack.c.b16 %v2768, %v2767
          %v2970 = vpack.c.b16 %v2770, %v2769
          %v2971 = vpack.c.b16 %v2772, %v2771
          %v2972 = vpack.c.b16 %v2774, %v2773
          %v2973 = vpack.c.b16 %v2776, %v2775
          %v2974 = vpack.c.b16 %v2778, %v2777
          %v2975 = vpack.c.b16 %v2780, %v2779
          %v2976 = vpack.c.b16 %v2782, %v2781
          %v2977 = vpack.c.b16 %v2784, %v2783
          %v2978 = vpack.c.b16 %v2786, %v2785
          %v2979 = vpack.c.b16 %v2788, %v2787
          %v2980 = vpack.c.b16 %v2790, %v2789
          %v2981 = vpack.c.b16 %v2792, %v2791
          %v2982 = vpack.c.b16 %v2794, %v2793
          %v2983 = vpack.c.b16 %v2796, %v2795
          %v2984 = vpack.c.b16 %v2798, %v2797
          %v2985 = vpack.c.b16 %v2800, %v2799
          %v2986 = vpack.c.b16 %v2802, %v2801
          %v2987 = vpack.c.b16 %v2804, %v2803
          %v2988 = vpack.c.b16 %v2806, %v2805
          %v2989 = vpack.c.b16 %v2808, %v2807
          %v2990 = vpack.c.b16 %v2810, %v2809
          %v2991 = vpack.c.b16 %v2812, %v2811
          %v2992 = vpack.c.b16 %v2814, %v2813
          %v2993 = vpack.c.b16 %v2816, %v2815
          %v2994 = vpack.c.b16 %v2818, %v2817
          %v2995 = vpack.c.b16 %v2820, %v2819
          %v2996 = vpack.c.b16 %v2822, %v2821
          %v2997 = vpack.c.b16 %v2824, %v2823
          %v2998 = vpack.c.b16 %v2826, %v2825
          %v2999 = vpack.c.b16 %v2828, %v2827
          %v3000 = vpack.c.b16 %v2830, %v2829
          %v3001 = vpack.c.b16 %v2832, %v2831
          %v3002 = vpack.c.b16 %v2834, %v2833
          %v3003 = vpack.c.b16 %v2836, %v2835
          %v3004 = vpack.c.b16 %v2838, %v2837
          %v3005 = vpack.c.b16 %v2840, %v2839
          %v3006 = vpack.c.b16 %v2842, %v2841
          %v3007 = vpack.c.b16 %v2844, %v2843
          %v3008 = vpack.c.b16 %v2846, %v2845
          %v3009 = vpack.c.b16 %v2848, %v2847
          %v3010 = vpack.c.b16 %v2850, %v2849
          %v3011 = vpack.c.b16 %v2852, %v2851
          %v3012 = vpack.c.b16 %v2854, %v2853
          %v3013 = vpack.c.b16 %v2856, %v2855
          %v3014 = vpack.c.b16 %v2858, %v2857
          %v3015 = vpack.c.b16 %v2860, %v2859
          %v3016 = vpack.c.b16 %v2862, %v2861
          %v3017 = vpack.c.b16 %v2864, %v2863
          %v3018 = vpack.c.b16 %v2866, %v2865
          %v3019 = vpack.c.b16 %v2868, %v2867
          %v3020 = vpack.c.b16 %v2870, %v2869
          %v3021 = vpack.c.b16 %v2872, %v2871
          %v3022 = vpack.c.b16 %v2874, %v2873
          %v3023 = vpack.c.b16 %v2876, %v2875
          %v3024 = vpack.c.b16 %v2878, %v2877
          %v3025 = vpack.c.b16 %v2880, %v2879
          %v3026 = vpack.c.b16 %v2882, %v2881
          %v3027 = vpack.c.b16 %v2884, %v2883
          %v3028 = vpack.c.b16 %v2886, %v2885
          %v3029 = vpack.c.b16 %v2888, %v2887
          %v3030 = vpack.c.b16 %v2890, %v2889
          %v3031 = vpack.c.b16 %v2892, %v2891
          %v3032 = vpack.c.b16 %v2894, %v2893
          %v3033 = vpack.c.b16 %v2896, %v2895
          %v3034 = vpack.c.b16 %v2898, %v2897
          %v3035 = vpack.c.b16 %v2900, %v2899
          %v3036 = vpack.c.b16 %v2902, %v2901
          %v3037 = vpack.c.b16 %v2904, %v2903
          %v3038 = vpack.c.b16 %v2906, %v2905
          %v3039 = vpack.c.b16 %v2908, %v2907
          %v3040 = vpack.c.b16 %v2910, %v2909
          %v3041 = vpack.c.b16 %v2912, %v2911
          %v3042 = vpack.c.b16 %v2914, %v2913
          %3171 = vmatprep.subr.bf16.mxu0 0
          %3172 = vmatpush1.bf16.msra.mxu0 %v2915
          %3173 = vmatprep.subr.bf16.mxu0 0
          %3174 = vmatpush1.bf16.msra.mxu0 %v2916
          %3175 = vmatprep.subr.bf16.mxu0 0
          %3176 = vmatpush1.bf16.msra.mxu0 %v2917
          %3177 = vmatprep.subr.bf16.mxu0 0
          %3178 = vmatpush1.bf16.msra.mxu0 %v2918
          %3179 = vmatprep.subr.bf16.mxu0 0
          %3180 = vmatpush1.bf16.msra.mxu0 %v2919
          %3181 = vmatprep.subr.bf16.mxu0 0
          %3182 = vmatpush1.bf16.msra.mxu0 %v2920
          %3183 = vmatprep.subr.bf16.mxu0 0
          %3184 = vmatpush1.bf16.msra.mxu0 %v2921
          %3185 = vmatprep.subr.bf16.mxu0 0
          %3186 = vmatpush1.bf16.msra.mxu0 %v2922
          %3187 = vmatprep.subr.bf16.mxu0 0
          %3188 = vmatpush1.bf16.msra.mxu0 %v2923
          %3189 = vmatprep.subr.bf16.mxu0 0
          %3190 = vmatpush1.bf16.msra.mxu0 %v2924
          %3191 = vmatprep.subr.bf16.mxu0 0
          %3192 = vmatpush1.bf16.msra.mxu0 %v2925
          %3193 = vmatprep.subr.bf16.mxu0 0
          %3194 = vmatpush1.bf16.msra.mxu0 %v2926
          %3195 = vmatprep.subr.bf16.mxu0 0
          %3196 = vmatpush1.bf16.msra.mxu0 %v2927
          %3197 = vmatprep.subr.bf16.mxu0 0
          %3198 = vmatpush1.bf16.msra.mxu0 %v2928
          %3199 = vmatprep.subr.bf16.mxu0 0
          %3200 = vmatpush1.bf16.msra.mxu0 %v2929
          %3201 = vmatprep.subr.bf16.mxu0 0
          %3202 = vmatpush1.bf16.msra.mxu0 %v2930
          %3203 = vmatprep.mubr.bf16.mxu0 %v2131
          %3204 = vmatmul.mubr.bf16.gmra.mrb[0].mxu0 %v2130
          %v3205 = vpop.f32.mrb[0].mxu0
          %v3206 = vadd.f32 %v2402, %v3205
          %v3207 = vpop.f32.mrb[0].mxu0
          %v3208 = vpop.f32.mrb[0].mxu0
          %v3209 = vpop.f32.mrb[0].mxu0
          %3210 = vdwg.mxu0
          %3211 = vmatprep.subr.bf16.mxu0 0
          %3212 = vmatpush1.bf16.msra.mxu0 %v2931
          %3213 = vmatprep.subr.bf16.mxu0 0
          %3214 = vmatpush1.bf16.msra.mxu0 %v2932
          %3215 = vmatprep.subr.bf16.mxu0 0
          %3216 = vmatpush1.bf16.msra.mxu0 %v2933
          %3217 = vmatprep.subr.bf16.mxu0 0
          %3218 = vmatpush1.bf16.msra.mxu0 %v2934
          %3219 = vmatprep.subr.bf16.mxu0 0
          %3220 = vmatpush1.bf16.msra.mxu0 %v2935
          %3221 = vmatprep.subr.bf16.mxu0 0
          %3222 = vmatpush1.bf16.msra.mxu0 %v2936
          %3223 = vmatprep.subr.bf16.mxu0 0
          %3224 = vmatpush1.bf16.msra.mxu0 %v2937
          %3225 = vmatprep.subr.bf16.mxu0 0
          %3226 = vmatpush1.bf16.msra.mxu0 %v2938
          %3227 = vmatprep.subr.bf16.mxu0 0
          %3228 = vmatpush1.bf16.msra.mxu0 %v2939
          %3229 = vmatprep.subr.bf16.mxu0 0
          %3230 = vmatpush1.bf16.msra.mxu0 %v2940
          %3231 = vmatprep.subr.bf16.mxu0 0
          %3232 = vmatpush1.bf16.msra.mxu0 %v2941
          %3233 = vmatprep.subr.bf16.mxu0 0
          %3234 = vmatpush1.bf16.msra.mxu0 %v2942
          %3235 = vmatprep.subr.bf16.mxu0 0
          %3236 = vmatpush1.bf16.msra.mxu0 %v2943
          %3237 = vmatprep.subr.bf16.mxu0 0
          %3238 = vmatpush1.bf16.msra.mxu0 %v2944
          %3239 = vmatprep.subr.bf16.mxu0 0
          %3240 = vmatpush1.bf16.msra.mxu0 %v2945
          %3241 = vmatprep.subr.bf16.mxu0 0
          %3242 = vmatpush1.bf16.msra.mxu0 %v2946
          %3243 = vmatprep.mubr.bf16.mxu0 %v2133
          %3244 = vmatmul.mubr.bf16.gmra.mrb[0].mxu0 %v2132
          %v3245 = vpop.f32.mrb[0].mxu0
          %v3246 = vadd.f32 %v3206, %v3245
          %v3247 = vpop.f32.mrb[0].mxu0
          %v3248 = vpop.f32.mrb[0].mxu0
          %v3249 = vpop.f32.mrb[0].mxu0
          %3250 = vdwg.mxu0
          %3251 = vmatprep.subr.bf16.mxu0 0
          %3252 = vmatpush1.bf16.msra.mxu0 %v2947
          %3253 = vmatprep.subr.bf16.mxu0 0
          %3254 = vmatpush1.bf16.msra.mxu0 %v2948
          %3255 = vmatprep.subr.bf16.mxu0 0
          %3256 = vmatpush1.bf16.msra.mxu0 %v2949
          %3257 = vmatprep.subr.bf16.mxu0 0
          %3258 = vmatpush1.bf16.msra.mxu0 %v2950
          %3259 = vmatprep.subr.bf16.mxu0 0
          %3260 = vmatpush1.bf16.msra.mxu0 %v2951
          %3261 = vmatprep.subr.bf16.mxu0 0
          %3262 = vmatpush1.bf16.msra.mxu0 %v2952
          %3263 = vmatprep.subr.bf16.mxu0 0
          %3264 = vmatpush1.bf16.msra.mxu0 %v2953
          %3265 = vmatprep.subr.bf16.mxu0 0
          %3266 = vmatpush1.bf16.msra.mxu0 %v2954
          %3267 = vmatprep.subr.bf16.mxu0 0
          %3268 = vmatpush1.bf16.msra.mxu0 %v2955
          %3269 = vmatprep.subr.bf16.mxu0 0
          %3270 = vmatpush1.bf16.msra.mxu0 %v2956
          %3271 = vmatprep.subr.bf16.mxu0 0
          %3272 = vmatpush1.bf16.msra.mxu0 %v2957
          %3273 = vmatprep.subr.bf16.mxu0 0
          %3274 = vmatpush1.bf16.msra.mxu0 %v2958
          %3275 = vmatprep.subr.bf16.mxu0 0
          %3276 = vmatpush1.bf16.msra.mxu0 %v2959
          %3277 = vmatprep.subr.bf16.mxu0 0
          %3278 = vmatpush1.bf16.msra.mxu0 %v2960
          %3279 = vmatprep.subr.bf16.mxu0 0
          %3280 = vmatpush1.bf16.msra.mxu0 %v2961
          %3281 = vmatprep.subr.bf16.mxu0 0
          %3282 = vmatpush1.bf16.msra.mxu0 %v2962
          %3283 = vmatprep.mubr.bf16.mxu0 %v2135
          %3284 = vmatmul.mubr.bf16.gmra.mrb[0].mxu0 %v2134
          %v3285 = vpop.f32.mrb[0].mxu0
          %v3286 = vadd.f32 %v3246, %v3285
          %v3287 = vpop.f32.mrb[0].mxu0
          %v3288 = vpop.f32.mrb[0].mxu0
          %v3289 = vpop.f32.mrb[0].mxu0
          %3290 = vdwg.mxu0
          %3291 = vmatprep.subr.bf16.mxu0 0
          %3292 = vmatpush1.bf16.msra.mxu0 %v2963
          %3293 = vmatprep.subr.bf16.mxu0 0
          %3294 = vmatpush1.bf16.msra.mxu0 %v2964
          %3295 = vmatprep.subr.bf16.mxu0 0
          %3296 = vmatpush1.bf16.msra.mxu0 %v2965
          %3297 = vmatprep.subr.bf16.mxu0 0
          %3298 = vmatpush1.bf16.msra.mxu0 %v2966
          %3299 = vmatprep.subr.bf16.mxu0 0
          %3300 = vmatpush1.bf16.msra.mxu0 %v2967
          %3301 = vmatprep.subr.bf16.mxu0 0
          %3302 = vmatpush1.bf16.msra.mxu0 %v2968
          %3303 = vmatprep.subr.bf16.mxu0 0
          %3304 = vmatpush1.bf16.msra.mxu0 %v2969
          %3305 = vmatprep.subr.bf16.mxu0 0
          %3306 = vmatpush1.bf16.msra.mxu0 %v2970
          %3307 = vmatprep.subr.bf16.mxu0 0
          %3308 = vmatpush1.bf16.msra.mxu0 %v2971
          %3309 = vmatprep.subr.bf16.mxu0 0
          %3310 = vmatpush1.bf16.msra.mxu0 %v2972
          %3311 = vmatprep.subr.bf16.mxu0 0
          %3312 = vmatpush1.bf16.msra.mxu0 %v2973
          %3313 = vmatprep.subr.bf16.mxu0 0
          %3314 = vmatpush1.bf16.msra.mxu0 %v2974
          %3315 = vmatprep.subr.bf16.mxu0 0
          %3316 = vmatpush1.bf16.msra.mxu0 %v2975
          %3317 = vmatprep.subr.bf16.mxu0 0
          %3318 = vmatpush1.bf16.msra.mxu0 %v2976
          %3319 = vmatprep.subr.bf16.mxu0 0
          %3320 = vmatpush1.bf16.msra.mxu0 %v2977
          %3321 = vmatprep.subr.bf16.mxu0 0
          %3322 = vmatpush1.bf16.msra.mxu0 %v2978
          %3323 = vmatprep.mubr.bf16.mxu0 %v2137
          %3324 = vmatmul.mubr.bf16.gmra.mrb[0].mxu0 %v2136
          %v3325 = vpop.f32.mrb[0].mxu0
          %v3326 = vadd.f32 %v3286, %v3325
          %v3327 = vpop.f32.mrb[0].mxu0
          %v3328 = vpop.f32.mrb[0].mxu0
          %v3329 = vpop.f32.mrb[0].mxu0
          %3330 = vdwg.mxu0
          %3331 = vmatprep.subr.bf16.mxu0 0
          %3332 = vmatpush1.bf16.msra.mxu0 %v2979
          %3333 = vmatprep.subr.bf16.mxu0 0
          %3334 = vmatpush1.bf16.msra.mxu0 %v2980
          %3335 = vmatprep.subr.bf16.mxu0 0
          %3336 = vmatpush1.bf16.msra.mxu0 %v2981
          %3337 = vmatprep.subr.bf16.mxu0 0
          %3338 = vmatpush1.bf16.msra.mxu0 %v2982
          %3339 = vmatprep.subr.bf16.mxu0 0
          %3340 = vmatpush1.bf16.msra.mxu0 %v2983
          %3341 = vmatprep.subr.bf16.mxu0 0
          %3342 = vmatpush1.bf16.msra.mxu0 %v2984
          %3343 = vmatprep.subr.bf16.mxu0 0
          %3344 = vmatpush1.bf16.msra.mxu0 %v2985
          %3345 = vmatprep.subr.bf16.mxu0 0
          %3346 = vmatpush1.bf16.msra.mxu0 %v2986
          %3347 = vmatprep.subr.bf16.mxu0 0
          %3348 = vmatpush1.bf16.msra.mxu0 %v2987
          %3349 = vmatprep.subr.bf16.mxu0 0
          %3350 = vmatpush1.bf16.msra.mxu0 %v2988
          %3351 = vmatprep.subr.bf16.mxu0 0
          %3352 = vmatpush1.bf16.msra.mxu0 %v2989
          %3353 = vmatprep.subr.bf16.mxu0 0
          %3354 = vmatpush1.bf16.msra.mxu0 %v2990
          %3355 = vmatprep.subr.bf16.mxu0 0
          %3356 = vmatpush1.bf16.msra.mxu0 %v2991
          %3357 = vmatprep.subr.bf16.mxu0 0
          %3358 = vmatpush1.bf16.msra.mxu0 %v2992
          %3359 = vmatprep.subr.bf16.mxu0 0
          %3360 = vmatpush1.bf16.msra.mxu0 %v2993
          %3361 = vmatprep.subr.bf16.mxu0 0
          %3362 = vmatpush1.bf16.msra.mxu0 %v2994
          %3363 = vmatprep.mubr.bf16.mxu0 %v2139
          %3364 = vmatmul.mubr.bf16.gmra.mrb[0].mxu0 %v2138
          %v3365 = vpop.f32.mrb[0].mxu0
          %v3366 = vadd.f32 %v3326, %v3365
          %v3367 = vpop.f32.mrb[0].mxu0
          %v3368 = vpop.f32.mrb[0].mxu0
          %v3369 = vpop.f32.mrb[0].mxu0
          %3370 = vdwg.mxu0
          %3371 = vmatprep.subr.bf16.mxu0 0
          %3372 = vmatpush1.bf16.msra.mxu0 %v2995
          %3373 = vmatprep.subr.bf16.mxu0 0
          %3374 = vmatpush1.bf16.msra.mxu0 %v2996
          %3375 = vmatprep.subr.bf16.mxu0 0
          %3376 = vmatpush1.bf16.msra.mxu0 %v2997
          %3377 = vmatprep.subr.bf16.mxu0 0
          %3378 = vmatpush1.bf16.msra.mxu0 %v2998
          %3379 = vmatprep.subr.bf16.mxu0 0
          %3380 = vmatpush1.bf16.msra.mxu0 %v2999
          %3381 = vmatprep.subr.bf16.mxu0 0
          %3382 = vmatpush1.bf16.msra.mxu0 %v3000
          %3383 = vmatprep.subr.bf16.mxu0 0
          %3384 = vmatpush1.bf16.msra.mxu0 %v3001
          %3385 = vmatprep.subr.bf16.mxu0 0
          %3386 = vmatpush1.bf16.msra.mxu0 %v3002
          %3387 = vmatprep.subr.bf16.mxu0 0
          %3388 = vmatpush1.bf16.msra.mxu0 %v3003
          %3389 = vmatprep.subr.bf16.mxu0 0
          %3390 = vmatpush1.bf16.msra.mxu0 %v3004
          %3391 = vmatprep.subr.bf16.mxu0 0
          %3392 = vmatpush1.bf16.msra.mxu0 %v3005
          %3393 = vmatprep.subr.bf16.mxu0 0
          %3394 = vmatpush1.bf16.msra.mxu0 %v3006
          %3395 = vmatprep.subr.bf16.mxu0 0
          %3396 = vmatpush1.bf16.msra.mxu0 %v3007
          %3397 = vmatprep.subr.bf16.mxu0 0
          %3398 = vmatpush1.bf16.msra.mxu0 %v3008
          %3399 = vmatprep.subr.bf16.mxu0 0
          %3400 = vmatpush1.bf16.msra.mxu0 %v3009
          %3401 = vmatprep.subr.bf16.mxu0 0
          %3402 = vmatpush1.bf16.msra.mxu0 %v3010
          %3403 = vmatprep.mubr.bf16.mxu0 %v2141
          %3404 = vmatmul.mubr.bf16.gmra.mrb[0].mxu0 %v2140
          %v3405 = vpop.f32.mrb[0].mxu0
          %v3406 = vadd.f32 %v3366, %v3405
          %v3407 = vpop.f32.mrb[0].mxu0
          %v3408 = vpop.f32.mrb[0].mxu0
          %v3409 = vpop.f32.mrb[0].mxu0
          %3410 = vdwg.mxu0
          %3411 = vmatprep.subr.bf16.mxu0 0
          %3412 = vmatpush1.bf16.msra.mxu0 %v3011
          %3413 = vmatprep.subr.bf16.mxu0 0
          %3414 = vmatpush1.bf16.msra.mxu0 %v3012
          %3415 = vmatprep.subr.bf16.mxu0 0
          %3416 = vmatpush1.bf16.msra.mxu0 %v3013
          %3417 = vmatprep.subr.bf16.mxu0 0
          %3418 = vmatpush1.bf16.msra.mxu0 %v3014
          %3419 = vmatprep.subr.bf16.mxu0 0
          %3420 = vmatpush1.bf16.msra.mxu0 %v3015
          %3421 = vmatprep.subr.bf16.mxu0 0
          %3422 = vmatpush1.bf16.msra.mxu0 %v3016
          %3423 = vmatprep.subr.bf16.mxu0 0
          %3424 = vmatpush1.bf16.msra.mxu0 %v3017
          %3425 = vmatprep.subr.bf16.mxu0 0
          %3426 = vmatpush1.bf16.msra.mxu0 %v3018
          %3427 = vmatprep.subr.bf16.mxu0 0
          %3428 = vmatpush1.bf16.msra.mxu0 %v3019
          %3429 = vmatprep.subr.bf16.mxu0 0
          %3430 = vmatpush1.bf16.msra.mxu0 %v3020
          %3431 = vmatprep.subr.bf16.mxu0 0
          %3432 = vmatpush1.bf16.msra.mxu0 %v3021
          %3433 = vmatprep.subr.bf16.mxu0 0
          %3434 = vmatpush1.bf16.msra.mxu0 %v3022
          %3435 = vmatprep.subr.bf16.mxu0 0
          %3436 = vmatpush1.bf16.msra.mxu0 %v3023
          %3437 = vmatprep.subr.bf16.mxu0 0
          %3438 = vmatpush1.bf16.msra.mxu0 %v3024
          %3439 = vmatprep.subr.bf16.mxu0 0
          %3440 = vmatpush1.bf16.msra.mxu0 %v3025
          %3441 = vmatprep.subr.bf16.mxu0 0
          %3442 = vmatpush1.bf16.msra.mxu0 %v3026
          %3443 = vmatprep.mubr.bf16.mxu0 %v2143
          %3444 = vmatmul.mubr.bf16.gmra.mrb[0].mxu0 %v2142
          %v3445 = vpop.f32.mrb[0].mxu0
          %v3446 = vadd.f32 %v3406, %v3445
          %v3447 = vpop.f32.mrb[0].mxu0
          %v3448 = vpop.f32.mrb[0].mxu0
          %v3449 = vpop.f32.mrb[0].mxu0
          %3450 = vdwg.mxu0
          %3451 = vmatprep.subr.bf16.mxu0 0
          %3452 = vmatpush1.bf16.msra.mxu0 %v3027
          %3453 = vmatprep.subr.bf16.mxu0 0
          %3454 = vmatpush1.bf16.msra.mxu0 %v3028
          %3455 = vmatprep.subr.bf16.mxu0 0
          %3456 = vmatpush1.bf16.msra.mxu0 %v3029
          %3457 = vmatprep.subr.bf16.mxu0 0
          %3458 = vmatpush1.bf16.msra.mxu0 %v3030
          %3459 = vmatprep.subr.bf16.mxu0 0
          %3460 = vmatpush1.bf16.msra.mxu0 %v3031
          %3461 = vmatprep.subr.bf16.mxu0 0
          %3462 = vmatpush1.bf16.msra.mxu0 %v3032
          %3463 = vmatprep.subr.bf16.mxu0 0
          %3464 = vmatpush1.bf16.msra.mxu0 %v3033
          %3465 = vmatprep.subr.bf16.mxu0 0
          %3466 = vmatpush1.bf16.msra.mxu0 %v3034
          %3467 = vmatprep.subr.bf16.mxu0 0
          %3468 = vmatpush1.bf16.msra.mxu0 %v3035
          %3469 = vmatprep.subr.bf16.mxu0 0
          %3470 = vmatpush1.bf16.msra.mxu0 %v3036
          %3471 = vmatprep.subr.bf16.mxu0 0
          %3472 = vmatpush1.bf16.msra.mxu0 %v3037
          %3473 = vmatprep.subr.bf16.mxu0 0
          %3474 = vmatpush1.bf16.msra.mxu0 %v3038
          %3475 = vmatprep.subr.bf16.mxu0 0
          %3476 = vmatpush1.bf16.msra.mxu0 %v3039
          %3477 = vmatprep.subr.bf16.mxu0 0
          %3478 = vmatpush1.bf16.msra.mxu0 %v3040
          %3479 = vmatprep.subr.bf16.mxu0 0
          %3480 = vmatpush1.bf16.msra.mxu0 %v3041
          %3481 = vmatprep.subr.bf16.mxu0 0
          %3482 = vmatpush1.bf16.msra.mxu0 %v3042
          %3483 = vmatprep.mubr.bf16.mxu0 %v2145
          %3484 = vmatmul.mubr.bf16.gmra.mrb[0].mxu0 %v2144
          %v3485 = vpop.f32.mrb[0].mxu0
          %v3486 = vadd.f32 %v3446, %v3485
          %v3487 = vpop.f32.mrb[0].mxu0
          %v3488 = vpop.f32.mrb[0].mxu0
          %v3489 = vpop.f32.mrb[0].mxu0
          %3490 = vdwg.mxu0
          %v3491 = vpack.c.bf16 %v3486, %v3486
          %v3492 = vld [vmem:[%s501] sm:$0x1]
          %v3493 = vld [vmem:[%s8] sm:$0xf]
          %v3494 = vld [vmem:[%s8 + $0x4] sm:$0xf]
          %v3495 = vld [vmem:[%s8 + $0x8] sm:$0xf]
          %v3496 = vld [vmem:[%s8 + $0xc] sm:$0xf]
          %v3497 = vld [vmem:[%s8 + $0x10] sm:$0xf]
          %v3498 = vld [vmem:[%s8 + $0x14] sm:$0xf]
          %v3499 = vld [vmem:[%s8 + $0x18] sm:$0xf]
          %v3500 = vld [vmem:[%s8 + $0x1c] sm:$0xf]
          %v3501 = vld [vmem:[%s8 + $0x20] sm:$0xf]
          %v3502 = vld [vmem:[%s8 + $0x24] sm:$0xf]
          %v3503 = vld [vmem:[%s8 + $0x28] sm:$0xf]
          %v3504 = vld [vmem:[%s8 + $0x2c] sm:$0xf]
          %v3505 = vld [vmem:[%s8 + $0x30] sm:$0xf]
          %v3506 = vld [vmem:[%s8 + $0x34] sm:$0xf]
          %v3507 = vld [vmem:[%s8 + $0x38] sm:$0xf]
          %v3508 = vld [vmem:[%s8 + $0x3c] sm:$0xf]
          %v3509 = vld [vmem:[%s9] sm:$0xf]
          %v3510 = vld [vmem:[%s9 + $0x4] sm:$0xf]
          %v3511 = vld [vmem:[%s9 + $0x8] sm:$0xf]
          %v3512 = vld [vmem:[%s9 + $0xc] sm:$0xf]
          %v3513 = vld [vmem:[%s9 + $0x10] sm:$0xf]
          %v3514 = vld [vmem:[%s9 + $0x14] sm:$0xf]
          %v3515 = vld [vmem:[%s9 + $0x18] sm:$0xf]
          %v3516 = vld [vmem:[%s9 + $0x1c] sm:$0xf]
          %v3517 = vld [vmem:[%s9 + $0x20] sm:$0xf]
          %v3518 = vld [vmem:[%s9 + $0x24] sm:$0xf]
          %v3519 = vld [vmem:[%s9 + $0x28] sm:$0xf]
          %v3520 = vld [vmem:[%s9 + $0x2c] sm:$0xf]
          %v3521 = vld [vmem:[%s9 + $0x30] sm:$0xf]
          %v3522 = vld [vmem:[%s9 + $0x34] sm:$0xf]
          %v3523 = vld [vmem:[%s9 + $0x38] sm:$0xf]
          %v3524 = vld [vmem:[%s9 + $0x3c] sm:$0xf]
          %v3541 = vunpack.c.l.b16 %v3509
          %v3542 = vunpack.c.l.b16 %v3510
          %v3543 = vunpack.c.l.b16 %v3511
          %v3544 = vunpack.c.l.b16 %v3512
          %v3545 = vunpack.c.l.b16 %v3513
          %v3546 = vunpack.c.l.b16 %v3514
          %v3547 = vunpack.c.l.b16 %v3515
          %v3548 = vunpack.c.l.b16 %v3516
          %v3549 = vunpack.c.l.b16 %v3517
          %v3550 = vunpack.c.l.b16 %v3518
          %v3551 = vunpack.c.l.b16 %v3519
          %v3552 = vunpack.c.l.b16 %v3520
          %v3553 = vunpack.c.l.b16 %v3521
          %v3554 = vunpack.c.l.b16 %v3522
          %v3555 = vunpack.c.l.b16 %v3523
          %v3556 = vunpack.c.l.b16 %v3524
          %v3557 = vpack.c.b16 %v3542, %v3541
          %v3558 = vpack.c.b16 %v3544, %v3543
          %v3559 = vpack.c.b16 %v3546, %v3545
          %v3560 = vpack.c.b16 %v3548, %v3547
          %v3561 = vpack.c.b16 %v3550, %v3549
          %v3562 = vpack.c.b16 %v3552, %v3551
          %v3563 = vpack.c.b16 %v3554, %v3553
          %v3564 = vpack.c.b16 %v3556, %v3555
          %3573 = vmatprep.subr.bf16.mxu0 0
          %3574 = vmatpush1.bf16.msra.mxu0 %v3557
          %3575 = vmatprep.subr.bf16.mxu0 0
          %3576 = vmatpush1.bf16.msra.mxu0 %v3558
          %3577 = vmatprep.subr.bf16.mxu0 0
          %3578 = vmatpush1.bf16.msra.mxu0 %v3559
          %3579 = vmatprep.subr.bf16.mxu0 0
          %3580 = vmatpush1.bf16.msra.mxu0 %v3560
          %3581 = vmatprep.subr.bf16.mxu0 0
          %3582 = vmatpush1.bf16.msra.mxu0 %v3561
          %3583 = vmatprep.subr.bf16.mxu0 0
          %3584 = vmatpush1.bf16.msra.mxu0 %v3562
          %3585 = vmatprep.subr.bf16.mxu0 0
          %3586 = vmatpush1.bf16.msra.mxu0 %v3563
          %3587 = vmatprep.subr.bf16.mxu0 0
          %3588 = vmatpush1.bf16.msra.mxu0 %v3564
          %3589 = vmatprep.subr.bf16.mxu0 0
          %3590 = vmatpush1.bf16.msra.mxu0 0
          %3591 = vmatprep.subr.bf16.mxu0 0
          %3592 = vmatpush1.bf16.msra.mxu0 0
          %3593 = vmatprep.subr.bf16.mxu0 0
          %3594 = vmatpush1.bf16.msra.mxu0 0
          %3595 = vmatprep.subr.bf16.mxu0 0
          %3596 = vmatpush1.bf16.msra.mxu0 0
          %3597 = vmatprep.subr.bf16.mxu0 0
          %3598 = vmatpush1.bf16.msra.mxu0 0
          %3599 = vmatprep.subr.bf16.mxu0 0
          %3600 = vmatpush1.bf16.msra.mxu0 0
          %3601 = vmatprep.subr.bf16.mxu0 0
          %3602 = vmatpush1.bf16.msra.mxu0 0
          %3603 = vmatprep.subr.bf16.mxu0 0
          %3604 = vmatpush1.bf16.msra.mxu0 0
          %3605 = vmatprep.mubr.bf16.mxu0 0
          %3606 = vmatmul.mubr.bf16.gmra.mrb[0].mxu0 %v3492
          %v3607 = vpop.f32.mrb[0].mxu0
          %v3608 = vadd.f32 0.0, %v3607
          %v3609 = vpop.f32.mrb[0].mxu0
          %v3610 = vpop.f32.mrb[0].mxu0
          %v3611 = vpop.f32.mrb[0].mxu0
          %3612 = vdwg.mxu0
          %v3629 = vunpack.c.l.b16 %v3493
          %v3630 = vunpack.c.l.b16 %v3494
          %v3631 = vunpack.c.l.b16 %v3495
          %v3632 = vunpack.c.l.b16 %v3496
          %v3633 = vunpack.c.l.b16 %v3497
          %v3634 = vunpack.c.l.b16 %v3498
          %v3635 = vunpack.c.l.b16 %v3499
          %v3636 = vunpack.c.l.b16 %v3500
          %v3637 = vunpack.c.l.b16 %v3501
          %v3638 = vunpack.c.l.b16 %v3502
          %v3639 = vunpack.c.l.b16 %v3503
          %v3640 = vunpack.c.l.b16 %v3504
          %v3641 = vunpack.c.l.b16 %v3505
          %v3642 = vunpack.c.l.b16 %v3506
          %v3643 = vunpack.c.l.b16 %v3507
          %v3644 = vunpack.c.l.b16 %v3508
          %v3645 = vpack.c.b16 %v3630, %v3629
          %v3646 = vpack.c.b16 %v3632, %v3631
          %v3647 = vpack.c.b16 %v3634, %v3633
          %v3648 = vpack.c.b16 %v3636, %v3635
          %v3649 = vpack.c.b16 %v3638, %v3637
          %v3650 = vpack.c.b16 %v3640, %v3639
          %v3651 = vpack.c.b16 %v3642, %v3641
          %v3652 = vpack.c.b16 %v3644, %v3643
          %3661 = vmatprep.subr.bf16.mxu0 0
          %3662 = vmatpush1.bf16.msra.mxu0 %v3645
          %3663 = vmatprep.subr.bf16.mxu0 0
          %3664 = vmatpush1.bf16.msra.mxu0 %v3646
          %3665 = vmatprep.subr.bf16.mxu0 0
          %3666 = vmatpush1.bf16.msra.mxu0 %v3647
          %3667 = vmatprep.subr.bf16.mxu0 0
          %3668 = vmatpush1.bf16.msra.mxu0 %v3648
          %3669 = vmatprep.subr.bf16.mxu0 0
          %3670 = vmatpush1.bf16.msra.mxu0 %v3649
          %3671 = vmatprep.subr.bf16.mxu0 0
          %3672 = vmatpush1.bf16.msra.mxu0 %v3650
          %3673 = vmatprep.subr.bf16.mxu0 0
          %3674 = vmatpush1.bf16.msra.mxu0 %v3651
          %3675 = vmatprep.subr.bf16.mxu0 0
          %3676 = vmatpush1.bf16.msra.mxu0 %v3652
          %3677 = vmatprep.subr.bf16.mxu0 0
          %3678 = vmatpush1.bf16.msra.mxu0 0
          %3679 = vmatprep.subr.bf16.mxu0 0
          %3680 = vmatpush1.bf16.msra.mxu0 0
          %3681 = vmatprep.subr.bf16.mxu0 0
          %3682 = vmatpush1.bf16.msra.mxu0 0
          %3683 = vmatprep.subr.bf16.mxu0 0
          %3684 = vmatpush1.bf16.msra.mxu0 0
          %3685 = vmatprep.subr.bf16.mxu0 0
          %3686 = vmatpush1.bf16.msra.mxu0 0
          %3687 = vmatprep.subr.bf16.mxu0 0
          %3688 = vmatpush1.bf16.msra.mxu0 0
          %3689 = vmatprep.subr.bf16.mxu0 0
          %3690 = vmatpush1.bf16.msra.mxu0 0
          %3691 = vmatprep.subr.bf16.mxu0 0
          %3692 = vmatpush1.bf16.msra.mxu0 0
          %3693 = vmatprep.mubr.bf16.mxu0 0
          %3694 = vmatmul.mubr.bf16.gmra.mrb[0].mxu0 %v3491
          %v3695 = vpop.f32.mrb[0].mxu0
          %v3696 = vadd.f32 %v3608, %v3695
          %v3697 = vpop.f32.mrb[0].mxu0
          %v3698 = vpop.f32.mrb[0].mxu0
          %v3699 = vpop.f32.mrb[0].mxu0
          %3700 = vdwg.mxu0
          %v3701 = vld [vmem:[%s10] sm:$0x1]
          %v3702 = vadd.f32 %v3696, %v3701
          %v3703 = vmax.f32 %v3702, 0.0
          %v3704 = vpack.c.bf16 %v3703, %v3703
          %v3705 = vld [vmem:[%s11] sm:$0xf]
          %v3706 = vld [vmem:[%s11 + $0x4] sm:$0xf]
          %v3707 = vld [vmem:[%s11 + $0x8] sm:$0xf]
          %v3708 = vld [vmem:[%s11 + $0xc] sm:$0xf]
          %v3709 = vld [vmem:[%s11 + $0x10] sm:$0xf]
          %v3710 = vld [vmem:[%s11 + $0x14] sm:$0xf]
          %v3711 = vld [vmem:[%s11 + $0x18] sm:$0xf]
          %v3712 = vld [vmem:[%s11 + $0x1c] sm:$0xf]
          %v3713 = vld [vmem:[%s11 + $0x20] sm:$0xf]
          %v3714 = vld [vmem:[%s11 + $0x24] sm:$0xf]
          %v3715 = vld [vmem:[%s11 + $0x28] sm:$0xf]
          %v3716 = vld [vmem:[%s11 + $0x2c] sm:$0xf]
          %v3717 = vld [vmem:[%s11 + $0x30] sm:$0xf]
          %v3718 = vld [vmem:[%s11 + $0x34] sm:$0xf]
          %v3719 = vld [vmem:[%s11 + $0x38] sm:$0xf]
          %v3720 = vld [vmem:[%s11 + $0x3c] sm:$0xf]
          %v3721 = vld [vmem:[#allocation5] sm:$0x1]
          %v3738 = vunpack.c.l.b16 %v3705
          %v3739 = vunpack.c.l.b16 %v3706
          %v3740 = vunpack.c.l.b16 %v3707
          %v3741 = vunpack.c.l.b16 %v3708
          %v3742 = vunpack.c.l.b16 %v3709
          %v3743 = vunpack.c.l.b16 %v3710
          %v3744 = vunpack.c.l.b16 %v3711
          %v3745 = vunpack.c.l.b16 %v3712
          %v3746 = vunpack.c.l.b16 %v3713
          %v3747 = vunpack.c.l.b16 %v3714
          %v3748 = vunpack.c.l.b16 %v3715
          %v3749 = vunpack.c.l.b16 %v3716
          %v3750 = vunpack.c.l.b16 %v3717
          %v3751 = vunpack.c.l.b16 %v3718
          %v3752 = vunpack.c.l.b16 %v3719
          %v3753 = vunpack.c.l.b16 %v3720
          %v3754 = vpack.c.b16 %v3739, %v3738
          %v3755 = vpack.c.b16 %v3741, %v3740
          %v3756 = vpack.c.b16 %v3743, %v3742
          %v3757 = vpack.c.b16 %v3745, %v3744
          %v3758 = vpack.c.b16 %v3747, %v3746
          %v3759 = vpack.c.b16 %v3749, %v3748
          %v3760 = vpack.c.b16 %v3751, %v3750
          %v3761 = vpack.c.b16 %v3753, %v3752
          %3770 = vmatprep.subr.bf16.mxu0 0
          %3771 = vmatpush1.bf16.msra.mxu0 %v3754
          %3772 = vmatprep.subr.bf16.mxu0 0
          %3773 = vmatpush1.bf16.msra.mxu0 %v3755
          %3774 = vmatprep.subr.bf16.mxu0 0
          %3775 = vmatpush1.bf16.msra.mxu0 %v3756
          %3776 = vmatprep.subr.bf16.mxu0 0
          %3777 = vmatpush1.bf16.msra.mxu0 %v3757
          %3778 = vmatprep.subr.bf16.mxu0 0
          %3779 = vmatpush1.bf16.msra.mxu0 %v3758
          %3780 = vmatprep.subr.bf16.mxu0 0
          %3781 = vmatpush1.bf16.msra.mxu0 %v3759
          %3782 = vmatprep.subr.bf16.mxu0 0
          %3783 = vmatpush1.bf16.msra.mxu0 %v3760
          %3784 = vmatprep.subr.bf16.mxu0 0
          %3785 = vmatpush1.bf16.msra.mxu0 %v3761
          %3786 = vmatprep.subr.bf16.mxu0 0
          %3787 = vmatpush1.bf16.msra.mxu0 0
          %3788 = vmatprep.subr.bf16.mxu0 0
          %3789 = vmatpush1.bf16.msra.mxu0 0
          %3790 = vmatprep.subr.bf16.mxu0 0
          %3791 = vmatpush1.bf16.msra.mxu0 0
          %3792 = vmatprep.subr.bf16.mxu0 0
          %3793 = vmatpush1.bf16.msra.mxu0 0
          %3794 = vmatprep.subr.bf16.mxu0 0
          %3795 = vmatpush1.bf16.msra.mxu0 0
          %3796 = vmatprep.subr.bf16.mxu0 0
          %3797 = vmatpush1.bf16.msra.mxu0 0
          %3798 = vmatprep.subr.bf16.mxu0 0
          %3799 = vmatpush1.bf16.msra.mxu0 0
          %3800 = vmatprep.subr.bf16.mxu0 0
          %3801 = vmatpush1.bf16.msra.mxu0 0
          %3802 = vmatprep.mubr.bf16.mxu0 0
          %3803 = vmatmul.mubr.bf16.gmra.mrb[0].mxu0 %v3704
          %v3804 = vpop.f32.mrb[0].mxu0
          %v3805 = vadd.f32 %v3721, %v3804
          %v3806 = vpop.f32.mrb[0].mxu0
          %v3807 = vpop.f32.mrb[0].mxu0
          %v3808 = vpop.f32.mrb[0].mxu0
          %3809 = vdwg.mxu0
          %3810 = vst [vmem:[%s504] sm:$0x1] %v3805
        $region88: #{my_model_forward.1} parent=71 // pred_fallthru
          _
        %p3811 = scmp.lt.s32.totalorder %s30, 1
        %s3812 = scalar_select %p3811, %s30, 1
        %s3813 = scalar_lea.vmem %s13, %s3812
        // Predicated region
        $region89: #{my_model_forward.1} parent=71 // pred_check
          %p3814 = pneg %p341
        $region90: #{my_model_forward.1} parent=71 // pred_check_branch
          %3816 = sbr.rel (%p3814) target = $region92
        $region91: #{my_model_forward.1} parent=71 // pred_region
          _
        $region92: #{my_model_forward.1} parent=71 // pred_fallthru
          _
      $region72: #{my_model_forward.1} parent=5 // pred_fallthru
        _
      %p3817 = scmp.le.s32.totalorder 2, %s21
      // Predicated region
      $region93: #{my_model_forward.1} parent=5 // pred_check
        %p3818 = pneg %p3817
      $region94: #{my_model_forward.1} parent=5 // pred_check_branch
        %3820 = sbr.rel (%p3818) target = $region96
      $region95: #{my_model_forward.1} parent=5 // pred_region
        %s3821 = ssub.s32 %s21, 2
        // Predicated region
        $region97: #{my_model_forward.1} parent=95 // pred_check
          %p3822 = pneg %p347
        $region98: #{my_model_forward.1} parent=95 // pred_check_branch
          %3824 = sbr.rel (%p3822) target = $region100
        $region99: #{my_model_forward.1} parent=95 // pred_region
          %p3825 = scmp.lt.s32.totalorder %s32, 1
          %s3826 = scalar_select %p3825, %s32, 1
          %s3827 = scalar_lea.vmem %s13, %s3826
        $region100: #{my_model_forward.1} parent=95 // pred_fallthru
          _
      $region96: #{my_model_forward.1} parent=5 // pred_fallthru
        _
    $region6: #{my_model_forward.1} parent=1 // loop_footer
      %s25 = sadd.s32 1, %s21
    $region7: #{my_model_forward.1} parent=1 // loop_footer_branch
      %20 = sbr.rel target = $region3
    $region8: #{my_model_forward.1} parent=1 // loop_exit
      _
    %3828 = vsyncpa [#allocation4], 1
    %s3829 = scalar_lea.sflag [#allocation4], 1
    %3830 = vsyncpa %s3829, 1
    %3831 = vsyncpa [#allocation6], 1

</llo_original>
